<compile_context>
chip_gen: v5e
topology: v5e:2x2
jax: 0.10.0
libtpu: 0.0.40
codegen_flags: <defaults>
</compile_context>

<pallas_src>
import functools

import jax
import jax.numpy as jnp
from jax import lax
from jax.experimental import pallas as pl
from jax.experimental.pallas import tpu as pltpu


def _round_up(x, m):
    return (x + m - 1) // m * m


# --------------------------------------------------------------------------- #
# Init-time table preparation: fuse biases into padded embedding rows.        #
# --------------------------------------------------------------------------- #
def prepare_mf_bpr_tables(params, *, table_dtype=None):
    """dot(user_row, item_row) == sum(u_emb*i_emb) + u_bias + i_bias."""
    u_emb = params["user_embedding"]
    i_emb = params["item_embedding"]
    u_b = params["user_bias"].reshape(-1)
    i_b = params["item_bias"].reshape(-1)
    U, D = u_emb.shape
    I, _ = i_emb.shape
    dtype = jnp.dtype(table_dtype or u_emb.dtype)
    Dp = _round_up(D + 2, 128)            # lane-multiple rows (>= 512 B per f32 row)

    u_tab = jnp.zeros((U, Dp), dtype)
    u_tab = u_tab.at[:, :D].set(u_emb.astype(dtype))
    u_tab = u_tab.at[:, D].set(u_b.astype(dtype))
    u_tab = u_tab.at[:, D + 1].set(jnp.ones((U,), dtype))

    i_tab = jnp.zeros((I, Dp), dtype)
    i_tab = i_tab.at[:, :D].set(i_emb.astype(dtype))
    i_tab = i_tab.at[:, D].set(jnp.ones((I,), dtype))
    i_tab = i_tab.at[:, D + 1].set(i_b.astype(dtype))

    return {"user_table": u_tab, "item_table": i_tab}


# --------------------------------------------------------------------------- #
# Kernel 1: general path — tables stay in HBM, per-row DMA gather.            #
# --------------------------------------------------------------------------- #
def _mf_bpr_hbm_gather_kernel(uid_ref, iid_ref,      # SMEM: (B_pad,) int32 0-indexed rows
                              u_tbl, i_tbl,          # HBM (pl.ANY): (U, Dp), (I, Dp)
                              o_ref,                 # VMEM: (1, tb) lane-dense output
                              u_buf, i_buf, sems,    # scratch: (tb, Dp) x2, DMA sems (2, 2)
                              *, n_chunks):
    t = pl.program_id(0)
    tb, _ = u_buf.shape
    chunk = tb // n_chunks
    base = t * tb

    def issue(c):
        slot, off = c % 2, c * chunk

        def body(r, carry):
            row = off + r
            pltpu.make_async_copy(u_tbl.at[pl.ds(uid_ref[base + row], 1)],
                                  u_buf.at[pl.ds(row, 1)], sems.at[slot, 0]).start()
            pltpu.make_async_copy(i_tbl.at[pl.ds(iid_ref[base + row], 1)],
                                  i_buf.at[pl.ds(row, 1)], sems.at[slot, 1]).start()
            return carry

        # Unrolled so SMEM id loads, address math and descriptor builds co-issue.
        lax.fori_loop(0, chunk, body, 0, unroll=8)

    def wait(c):
        slot, off = c % 2, c * chunk
        # ONE bulk wait per table per chunk: the DMA semaphore is incremented by
        # the bytes each row copy delivers, so a single chunk-sized wait
        # descriptor (dst = the whole chunk of the scratch buffer) covers all
        # `chunk` row copies issued on that semaphore.  Source is irrelevant
        # for a wait; we reuse the destination view.
        pltpu.make_async_copy(u_buf.at[pl.ds(off, chunk)],
                              u_buf.at[pl.ds(off, chunk)], sems.at[slot, 0]).wait()
        pltpu.make_async_copy(i_buf.at[pl.ds(off, chunk)],
                              i_buf.at[pl.ds(off, chunk)], sems.at[slot, 1]).wait()

    def compute(c):
        off = c * chunk
        ue = u_buf[pl.ds(off, chunk), :].astype(jnp.float32)
        ie = i_buf[pl.ds(off, chunk), :].astype(jnp.float32)
        # Lane-dense (1, chunk) store; bias already fused into the rows.
        o_ref[:, pl.ds(off, chunk)] = jnp.sum(ue * ie, axis=1)[None, :]

    # Lookahead-1 chunk pipeline: DMAs of chunk c+1 overlap compute of chunk c.
    issue(0)
    for c in range(n_chunks):
        if c + 1 < n_chunks:
            issue(c + 1)
        wait(c)
        compute(c)


# --------------------------------------------------------------------------- #
# Kernel 2: small-catalog fast path — VMEM-resident tables, one-hot MXU gather.#
# --------------------------------------------------------------------------- #
def _mf_bpr_small_catalog_kernel(uid_ref, iid_ref,       # VMEM: (tb, 1) int32 0-indexed
                                 u_tbl_ref, i_tbl_ref,   # VMEM: full fused tables
                                 o_ref):                 # VMEM: (1, tb)
    tb = uid_ref.shape[0]
    n_users = u_tbl_ref.shape[0]
    n_items = i_tbl_ref.shape[0]
    dt = u_tbl_ref.dtype
    u_oh = (uid_ref[...] == lax.broadcasted_iota(jnp.int32, (tb, n_users), 1)).astype(dt)
    i_oh = (iid_ref[...] == lax.broadcasted_iota(jnp.int32, (tb, n_items), 1)).astype(dt)
    ue = jnp.dot(u_oh, u_tbl_ref[...], preferred_element_type=jnp.float32)   # (tb, Dp)
    ie = jnp.dot(i_oh, i_tbl_ref[...], preferred_element_type=jnp.float32)   # (tb, Dp)
    o_ref[...] = jnp.sum(ue * ie, axis=1)[None, :]


# --------------------------------------------------------------------------- #
# Wrapper / dispatch                                                          #
# --------------------------------------------------------------------------- #
def _vmem_budget_bytes():
    try:
        phys = pltpu.get_tpu_info().vmem_capacity_bytes
    except Exception:
        phys = 64 << 20            # assume the smallest (v7x) if query unavailable
    return (phys // 4) * 3         # leave ~25% headroom for the compiler


def mf_bpr_forward(tables, user_id, item_id, *, batch_tile=None,
                   force_hbm_gather=False):
    """Pallas implementation of MF_BPR.forward(user_id, item_id)."""
    u_tab = tables["user_table"]
    i_tab = tables["item_table"]
    U, Dp = u_tab.shape
    I, _ = i_tab.shape
    B = int(user_id.shape[0])
    itemsize = jnp.dtype(u_tab.dtype).itemsize
    vmem_cap = _vmem_budget_bytes()

    # 0-indexed rows (the PyTorch module subtracts 1; ids assumed valid).
    uid0 = user_id.astype(jnp.int32) - 1
    iid0 = item_id.astype(jnp.int32) - 1

    # Batch tile: multiple of 128 (lane-dense output).  Default 512 keeps
    # several grid steps so "parallel" shards across v7x's 2 TensorCores;
    # v5e/v6e users can pass a larger batch_tile (e.g. 4096) to amortize
    # per-step overhead.  Batch is padded to a multiple of the tile (padded
    # rows gather row 0 and are sliced off afterwards).
    tb = 512 if batch_tile is None else int(batch_tile)
    tb = min(tb, _round_up(B, 128))
    tb = max(128, _round_up(tb, 128))
    B_pad = _round_up(B, tb)
    if B_pad != B:
        pad = B_pad - B
        uid0 = jnp.concatenate([uid0, jnp.zeros((pad,), jnp.int32)])
        iid0 = jnp.concatenate([iid0, jnp.zeros((pad,), jnp.int32)])
    grid = (B_pad // tb,)

    table_bytes = (U + I) * Dp * itemsize
    onehot_bytes = 2 * tb * max(U, I) * 4
    small_catalog = (not force_hbm_gather and (U + I) <= 2048
                     and table_bytes + onehot_bytes <= vmem_cap // 2)

    if small_catalog:
        # ---- fast path: tables resident in VMEM, no per-row DMA descriptors ----
        vmem_limit = int(min(max(table_bytes + onehot_bytes + (8 << 20), 32 << 20),
                             vmem_cap))
        out = pl.pallas_call(
            _mf_bpr_small_catalog_kernel,
            out_shape=jax.ShapeDtypeStruct((1, B_pad), jnp.float32),
            grid=grid,
            in_specs=[
                pl.BlockSpec((tb, 1), lambda t: (t, 0)),
                pl.BlockSpec((tb, 1), lambda t: (t, 0)),
                pl.BlockSpec(memory_space=pltpu.MemorySpace.VMEM),   # user table
                pl.BlockSpec(memory_space=pltpu.MemorySpace.VMEM),   # item table
            ],
            out_specs=pl.BlockSpec((1, tb), lambda t: (0, t)),
            compiler_params=pltpu.CompilerParams(
                dimension_semantics=("parallel",),
                vmem_limit_bytes=vmem_limit),
        )(uid0.reshape(B_pad, 1), iid0.reshape(B_pad, 1), u_tab, i_tab)
        return out[0, :B]

    # ---- general path: tables stay in HBM, per-row DMA gather ----
    n_chunks = max(1, tb // 256)          # 256-row lookahead window per chunk
    scratch_bytes = 2 * tb * Dp * itemsize
    vmem_limit = int(min(max(scratch_bytes + (8 << 20), 32 << 20), vmem_cap))
    out = pl.pallas_call(
        functools.partial(_mf_bpr_hbm_gather_kernel, n_chunks=n_chunks),
        out_shape=jax.ShapeDtypeStruct((1, B_pad), jnp.float32),
        grid_spec=pltpu.PrefetchScalarGridSpec(
            num_scalar_prefetch=2,                   # uid, iid -> SMEM
            grid=grid,
            in_specs=[pl.BlockSpec(memory_space=pl.ANY),    # user table (HBM)
                      pl.BlockSpec(memory_space=pl.ANY)],   # item table (HBM)
            out_specs=pl.BlockSpec((1, tb), lambda t, uid, iid: (0, t)),
            scratch_shapes=[
                pltpu.VMEM((tb, Dp), u_tab.dtype),   # gathered user rows
                pltpu.VMEM((tb, Dp), i_tab.dtype),   # gathered item rows
                pltpu.SemaphoreType.DMA((2, 2)),     # [chunk slot, table]
            ],
        ),
        compiler_params=pltpu.CompilerParams(
            dimension_semantics=("parallel",),       # batch tiles are independent
            vmem_limit_bytes=vmem_limit),
    )(uid0, iid0, u_tab, i_tab)
    return out[0, :B]


def init_params(key, user_num, item_num, dim, dtype=jnp.float32):
    """Matches MF_BPR.__init__: N(0,1) embeddings, zero bias embeddings.
    (Pass dtype=jnp.bfloat16 to halve the dominant HBM read stream.)"""
    k_u, k_i = jax.random.split(key)
    return {
        "user_embedding": jax.random.normal(k_u, (user_num, dim)).astype(dtype),
        "item_embedding": jax.random.normal(k_i, (item_num, dim)).astype(dtype),
        "user_bias": jnp.zeros((user_num, 1), jnp.float32),
        "item_bias": jnp.zeros((item_num, 1), jnp.float32),
    }


if __name__ == "__main__":
    user_num, item_num, dim = 64, 100, 32
    batch = 1000      # not a multiple of the tile -> exercises batch padding

    key = jax.random.PRNGKey(0)
    k_params, k_uid, k_iid, k_ub, k_ib = jax.random.split(key, 5)
    params = init_params(k_params, user_num, item_num, dim)
    # Perturb biases (test harness only) so the bias path is actually exercised;
    # the module itself zero-inits them.
    params["user_bias"] = 0.1 * jax.random.normal(k_ub, (user_num, 1), jnp.float32)
    params["item_bias"] = 0.1 * jax.random.normal(k_ib, (item_num, 1), jnp.float32)

    # ids are 1-indexed, as the PyTorch module expects (it subtracts 1).
    user_id = jax.random.randint(k_uid, (batch,), 1, user_num + 1, dtype=jnp.int32)
    item_id = jax.random.randint(k_iid, (batch,), 1, item_num + 1, dtype=jnp.int32)

    tables = prepare_mf_bpr_tables(params)

    fwd_fast = jax.jit(mf_bpr_forward)                           # small-catalog VMEM path
    fwd_dma = jax.jit(functools.partial(mf_bpr_forward,          # HBM DMA-gather path
                                        force_hbm_gather=True))

    pred_fast = jax.block_until_ready(fwd_fast(tables, user_id, item_id))
    pred_dma = jax.block_until_ready(fwd_dma(tables, user_id, item_id))

    # pure-JAX reference for a correctness sanity check
    ue = jnp.take(params["user_embedding"].astype(jnp.float32), user_id - 1, axis=0)
    ie = jnp.take(params["item_embedding"].astype(jnp.float32), item_id - 1, axis=0)
    ub = jnp.take(params["user_bias"][:, 0], user_id - 1, axis=0)
    ib = jnp.take(params["item_bias"][:, 0], item_id - 1, axis=0)
    ref = jnp.sum(ue * ie, axis=1) + ub + ib

    assert pred_fast.shape == (batch,) and pred_dma.shape == (batch,)
    assert jnp.allclose(pred_fast, ref, atol=1e-4, rtol=1e-5), \
        float(jnp.max(jnp.abs(pred_fast - ref)))
    assert jnp.allclose(pred_dma, ref, atol=1e-4, rtol=1e-5), \
        float(jnp.max(jnp.abs(pred_dma - ref)))
    print("KERNEL_OK")
</pallas_src>

<mosaic_0001>
module attributes {stable_mosaic.version = 11 : i64} {
  func.func @_mf_bpr_small_catalog_kernel(%arg0: i32, %arg1: memref<512x1xi32, #tpu.memory_space<vmem>>, %arg2: memref<512x1xi32, #tpu.memory_space<vmem>>, %arg3: memref<64x128xf32, #tpu.memory_space<vmem>>, %arg4: memref<100x128xf32, #tpu.memory_space<vmem>>, %arg5: memref<1x512xf32, #tpu.memory_space<vmem>>) attributes {dimension_semantics = [#tpu.dimension_semantics<parallel>], iteration_bounds = array<i64: 2>, scalar_prefetch = 0 : i64, scratch_operands = 0 : i64, tpu.core_type = #tpu.core_type<tc>, window_params = [{transform_indices = @transform_0, window_bounds = array<i64: 512, 1>}, {transform_indices = @transform_1, window_bounds = array<i64: 512, 1>}, {pipeline_mode = #tpu.pipeline_mode<synchronous>, transform_indices = @transform_2, window_bounds = array<i64: 64, 128>}, {pipeline_mode = #tpu.pipeline_mode<synchronous>, transform_indices = @transform_3, window_bounds = array<i64: 100, 128>}, {transform_indices = @transform_4, window_bounds = array<i64: 1, 512>}]} {
    %c0 = arith.constant 0 : index
    %c0_0 = arith.constant 0 : index
    %0 = vector.load %arg1[%c0, %c0_0] : memref<512x1xi32, #tpu.memory_space<vmem>>, vector<512x1xi32>
    %1 = tpu.iota {dimensions = array<i32: 1>} : vector<512x64xi32>
    %2 = vector.broadcast %0 : vector<512x1xi32> to vector<512x64xi32>
    %3 = arith.cmpi eq, %2, %1 : vector<512x64xi32>
    %4 = arith.extui %3 : vector<512x64xi1> to vector<512x64xi32>
    %5 = arith.sitofp %4 : vector<512x64xi32> to vector<512x64xf32>
    %c0_1 = arith.constant 0 : index
    %c0_2 = arith.constant 0 : index
    %6 = vector.load %arg2[%c0_1, %c0_2] : memref<512x1xi32, #tpu.memory_space<vmem>>, vector<512x1xi32>
    %7 = tpu.iota {dimensions = array<i32: 1>} : vector<512x100xi32>
    %8 = vector.broadcast %6 : vector<512x1xi32> to vector<512x100xi32>
    %9 = arith.cmpi eq, %8, %7 : vector<512x100xi32>
    %10 = arith.extui %9 : vector<512x100xi1> to vector<512x100xi32>
    %11 = arith.sitofp %10 : vector<512x100xi32> to vector<512x100xf32>
    %c0_3 = arith.constant 0 : index
    %c0_4 = arith.constant 0 : index
    %12 = vector.load %arg3[%c0_3, %c0_4] : memref<64x128xf32, #tpu.memory_space<vmem>>, vector<64x128xf32>
    %cst = arith.constant dense<0.000000e+00> : vector<512x128xf32>
    %13 = tpu.matmul %5, %12, %cst {dimension_numbers = #tpu.dot_dimension_numbers<[1], [0], [0], [1], [0, 0, 1, 1], [], []>} : vector<512x64xf32>, vector<64x128xf32>, vector<512x128xf32> -> vector<512x128xf32>
    %c0_5 = arith.constant 0 : index
    %c0_6 = arith.constant 0 : index
    %14 = vector.load %arg4[%c0_5, %c0_6] : memref<100x128xf32, #tpu.memory_space<vmem>>, vector<100x128xf32>
    %cst_7 = arith.constant dense<0.000000e+00> : vector<512x128xf32>
    %15 = tpu.matmul %11, %14, %cst_7 {dimension_numbers = #tpu.dot_dimension_numbers<[1], [0], [0], [1], [0, 0, 1, 1], [], []>} : vector<512x100xf32>, vector<100x128xf32>, vector<512x128xf32> -> vector<512x128xf32>
    %16 = arith.mulf %13, %15 : vector<512x128xf32>
    %cst_8 = arith.constant dense<0.000000e+00> : vector<512xf32>
    %17 = vector.multi_reduction <add>, %16, %cst_8 [1] : vector<512x128xf32> to vector<512xf32>
    %18 = vector.shape_cast %17 : vector<512xf32> to vector<1x512xf32>
    %c0_9 = arith.constant 0 : index
    %c0_10 = arith.constant 0 : index
    %19 = vector.load %arg5[%c0_9, %c0_10] : memref<1x512xf32, #tpu.memory_space<vmem>>, vector<1x512xf32>
    tpu.vector_store %arg5[%c0_9, %c0_10], %18 {strides = array<i32>} : memref<1x512xf32, #tpu.memory_space<vmem>>, vector<1x512xf32>,
    return
  }
  func.func @transform_0(%arg0: i32) -> (i32, i32) {
    %c0_i32 = arith.constant 0 : i32
    %c0_i32_0 = arith.constant 0 : i32
    return %arg0, %c0_i32 : i32, i32
  }
  func.func @transform_1(%arg0: i32) -> (i32, i32) {
    %c0_i32 = arith.constant 0 : i32
    %c0_i32_0 = arith.constant 0 : i32
    return %arg0, %c0_i32 : i32, i32
  }
  func.func @transform_2(%arg0: i32) -> (i32, i32) {
    %c0_i32 = arith.constant 0 : i32
    %c0_i32_0 = arith.constant 0 : i32
    %c0_i32_1 = arith.constant 0 : i32
    return %c0_i32, %c0_i32_0 : i32, i32
  }
  func.func @transform_3(%arg0: i32) -> (i32, i32) {
    %c0_i32 = arith.constant 0 : i32
    %c0_i32_0 = arith.constant 0 : i32
    %c0_i32_1 = arith.constant 0 : i32
    return %c0_i32, %c0_i32_0 : i32, i32
  }
  func.func @transform_4(%arg0: i32) -> (i32, i32) {
    %c0_i32 = arith.constant 0 : i32
    %c0_i32_0 = arith.constant 0 : i32
    return %c0_i32, %arg0 : i32, i32
  }
}

</mosaic_0001>

<llo_original>
// kernel: mf_bpr_forward.1
$region0: #{mf_bpr_forward.1}
  #allocation0 [shape = 'u32[]', space=smem, size = 0x4, offset = 0x4, fixed_abs, tag = 'smem constant byte address 0x4 - core index']
  #allocation1 [shape = 'u32[72,128]{1,0:T(1,128)}', space=vmem, size = 0x9000, scoped, tag = 'internal scratch']
  %s0 = inlined_call_operand.vmem [shape: s32[1024,1], index: 0, kind: input, shape index: {}]
  %s1 = inlined_call_operand.vmem [shape: s32[1024,1], index: 1, kind: input, shape index: {}]
  %s2 = inlined_call_operand.vmem [shape: f32[64,128], index: 2, kind: input, shape index: {}]
  %s3 = inlined_call_operand.vmem [shape: f32[100,128], index: 3, kind: input, shape index: {}]
  %s4 = inlined_call_operand.hbm [shape: f32[1,1024], index: 4, kind: output, shape index: {}]
  %s5 = sld [smem:[#allocation0]]
  $region49: #{mf_bpr_forward.1} parent=0
    _
  %s7 = ssub.s32 1, %s5
  %s8 = scalar_select 0, %s7, %s5
  $region1: #{mf_bpr_forward.1} parent=0
    #allocation2 [shape = 'u8[4096]{0}', space=vmem, size = 0x1000, scoped, tag = 'output window, operand 0']
    #allocation3 [shape = 's32[2]{0}', space=sflag, size = 0x8, scoped, tag = 'scoped memory for mf_bpr_forward.1']
    %9 = vsyncpa [#allocation3], 0
    %s10 = scalar_lea.sflag [#allocation3], 1
    %11 = vsyncpa %s10, 0
    loop: start=0, step=1, limit=4
    $region2: #{mf_bpr_forward.1} parent=1 // loop_pre_header
      _
    $region3: #{mf_bpr_forward.1} parent=1 // loop_header
      %s13 = sphi 0, %s17
      %p14 = scmp.ge.s32.totalorder %s13, 4
      %s23 = sphi 0, %s25
      %s26 = sphi 0, %s23
      %s27 = sphi 0, %s26
      %s43 = sphi 0, %s27
      %s49 = sphi 0, %s51
      %s52 = sphi 0, %s49
      %s53 = sphi 0, %s52
      %s69 = sphi 0, %s53
      %s73 = sphi 0, %s73
      %s75 = sphi 0, %s73
      %s76 = sphi 0, %s75
      %s90 = sphi 0, %s76
      %s94 = sphi 0, %s94
      %s96 = sphi 0, %s94
      %s97 = sphi 0, %s96
      %s111 = sphi 0, %s97
      %s117 = sphi 0, %s119
      %s120 = sphi 0, %s117
      %s121 = sphi 0, %s120
      %s137 = sphi 0, %s121
    $region4: #{mf_bpr_forward.1} parent=1 // loop_header_branch
      %16 = sbr.rel (%p14) target = $region8
    $region5: #{mf_bpr_forward.1} parent=1 // loop_body
      %s18 = ssub.s32 %s13, 1
      %s19 = ssub.s32 %s13, 2
      %s20 = sadd.s32 %s13, 1
      %s21 = ssub.s32 %s13, %s20
      %p22 = scmp.eq.s32.totalorder %s21, 0
      %s24 = sadd.s32 %s23, 1
      %s25 = scalar_select %p22, %s23, %s24
      %p28 = pneg %p22
      %p29 = scmp.eq.s32.totalorder %s13, 1
      %p30 = por %p28, %p29
      %p31 = scmp.ne.s32.totalorder %s23, %s26
      %p32 = scmp.eq.s32.totalorder %s13, 0
      %p33 = por %p31, %p32
      %p34 = scmp.ne.s32.totalorder %s23, %s26
      %p35 = scmp.eq.s32.totalorder %s18, 1
      %p36 = por %p34, %p35
      %p37 = scmp.ne.s32.totalorder %s26, %s27
      %p38 = scmp.eq.s32.totalorder %s18, 0
      %p39 = por %p37, %p38
      %p40 = scmp.ne.s32.totalorder %s26, %s27
      %p41 = scmp.eq.s32.totalorder %s19, 1
      %p42 = por %p40, %p41
      %p44 = scmp.ne.s32.totalorder %s27, %s43
      %p45 = scmp.eq.s32.totalorder %s19, 0
      %p46 = por %p44, %p45
      %s47 = ssub.s32 %s13, %s20
      %p48 = scmp.eq.s32.totalorder %s47, 0
      %s50 = sadd.s32 %s49, 1
      %s51 = scalar_select %p48, %s49, %s50
      %p54 = pneg %p48
      %p55 = scmp.eq.s32.totalorder %s13, 1
      %p56 = por %p54, %p55
      %p57 = scmp.ne.s32.totalorder %s49, %s52
      %p58 = scmp.eq.s32.totalorder %s13, 0
      %p59 = por %p57, %p58
      %p60 = scmp.ne.s32.totalorder %s49, %s52
      %p61 = scmp.eq.s32.totalorder %s18, 1
      %p62 = por %p60, %p61
      %p63 = scmp.ne.s32.totalorder %s52, %s53
      %p64 = scmp.eq.s32.totalorder %s18, 0
      %p65 = por %p63, %p64
      %p66 = scmp.ne.s32.totalorder %s52, %s53
      %p67 = scmp.eq.s32.totalorder %s19, 1
      %p68 = por %p66, %p67
      %p70 = scmp.ne.s32.totalorder %s53, %s69
      %p71 = scmp.eq.s32.totalorder %s19, 0
      %p72 = por %p70, %p71
      %s74 = sadd.s32 %s73, 1
      %p77 = scmp.eq.s32.totalorder %s13, 1
      %p78 = scmp.ne.s32.totalorder %s73, %s75
      %p79 = scmp.eq.s32.totalorder %s13, 0
      %p80 = por %p78, %p79
      %p81 = scmp.ne.s32.totalorder %s73, %s75
      %p82 = scmp.eq.s32.totalorder %s18, 1
      %p83 = por %p81, %p82
      %p84 = scmp.ne.s32.totalorder %s75, %s76
      %p85 = scmp.eq.s32.totalorder %s18, 0
      %p86 = por %p84, %p85
      %p87 = scmp.ne.s32.totalorder %s75, %s76
      %p88 = scmp.eq.s32.totalorder %s19, 1
      %p89 = por %p87, %p88
      %p91 = scmp.ne.s32.totalorder %s76, %s90
      %p92 = scmp.eq.s32.totalorder %s19, 0
      %p93 = por %p91, %p92
      %s95 = sadd.s32 %s94, 1
      %p98 = scmp.eq.s32.totalorder %s13, 1
      %p99 = scmp.ne.s32.totalorder %s94, %s96
      %p100 = scmp.eq.s32.totalorder %s13, 0
      %p101 = por %p99, %p100
      %p102 = scmp.ne.s32.totalorder %s94, %s96
      %p103 = scmp.eq.s32.totalorder %s18, 1
      %p104 = por %p102, %p103
      %p105 = scmp.ne.s32.totalorder %s96, %s97
      %p106 = scmp.eq.s32.totalorder %s18, 0
      %p107 = por %p105, %p106
      %p108 = scmp.ne.s32.totalorder %s96, %s97
      %p109 = scmp.eq.s32.totalorder %s19, 1
      %p110 = por %p108, %p109
      %p112 = scmp.ne.s32.totalorder %s97, %s111
      %p113 = scmp.eq.s32.totalorder %s19, 0
      %p114 = por %p112, %p113
      %s115 = ssub.s32 %s13, %s20
      %p116 = scmp.eq.s32.totalorder %s115, 0
      %s118 = sadd.s32 %s117, 1
      %s119 = scalar_select %p116, %s117, %s118
      %p122 = pneg %p116
      %p123 = scmp.eq.s32.totalorder %s13, 1
      %p124 = por %p122, %p123
      %p125 = scmp.ne.s32.totalorder %s117, %s120
      %p126 = scmp.eq.s32.totalorder %s13, 0
      %p127 = por %p125, %p126
      %p128 = scmp.ne.s32.totalorder %s117, %s120
      %p129 = scmp.eq.s32.totalorder %s18, 1
      %p130 = por %p128, %p129
      %p131 = scmp.ne.s32.totalorder %s120, %s121
      %p132 = scmp.eq.s32.totalorder %s18, 0
      %p133 = por %p131, %p132
      %p134 = scmp.ne.s32.totalorder %s120, %s121
      %p135 = scmp.eq.s32.totalorder %s19, 1
      %p136 = por %p134, %p135
      %p138 = scmp.ne.s32.totalorder %s121, %s137
      %p139 = scmp.eq.s32.totalorder %s19, 0
      %p140 = por %p138, %p139
      %p141 = scmp.le.s32.totalorder 1, %s13
      %p142 = scmp.lt.s32.totalorder %s13, 3
      %p143 = pnand %p141, %p142
      %p144 = pneg %p143
      // Predicated region
      $region9: #{mf_bpr_forward.1} parent=5 // pred_check
        _
      $region10: #{mf_bpr_forward.1} parent=5 // pred_check_branch
        %146 = sbr.rel (%p143) target = $region12
      $region11: #{mf_bpr_forward.1} parent=5 // pred_region
        %s147 = ssub.s32 %s13, 1
        // Predicated region
        $region13: #{mf_bpr_forward.1} parent=11 // pred_check
          %p148 = pneg %p86
        $region14: #{mf_bpr_forward.1} parent=11 // pred_check_branch
          %150 = sbr.rel (%p148) target = $region16
        $region15: #{mf_bpr_forward.1} parent=11 // pred_region
          _
        $region16: #{mf_bpr_forward.1} parent=11 // pred_fallthru
          _
        // Predicated region
        $region17: #{mf_bpr_forward.1} parent=11 // pred_check
          %p151 = pneg %p107
        $region18: #{mf_bpr_forward.1} parent=11 // pred_check_branch
          %153 = sbr.rel (%p151) target = $region20
        $region19: #{mf_bpr_forward.1} parent=11 // pred_region
          _
        $region20: #{mf_bpr_forward.1} parent=11 // pred_fallthru
          _
      $region12: #{mf_bpr_forward.1} parent=5 // pred_fallthru
        _
      %p154 = scmp.lt.s32.totalorder %s13, 2
      // Predicated region
      $region21: #{mf_bpr_forward.1} parent=5 // pred_check
        %p155 = pneg %p154
      $region22: #{mf_bpr_forward.1} parent=5 // pred_check_branch
        %157 = sbr.rel (%p155) target = $region24
      $region23: #{mf_bpr_forward.1} parent=5 // pred_region
        // Predicated region
        $region25: #{mf_bpr_forward.1} parent=23 // pred_check
          %p158 = pneg %p33
        $region26: #{mf_bpr_forward.1} parent=23 // pred_check_branch
          %160 = sbr.rel (%p158) target = $region28
        $region27: #{mf_bpr_forward.1} parent=23 // pred_region
          %s161 = smul.u32 64, %s13
          %p162 = scmp.lt.s32.totalorder %s161, 127
          %s163 = scalar_select %p162, %s161, 127
          %s164 = smul.addr %s163, 8
          %s165 = scalar_lea.vmem %s0, %s164
          %s166 = smul.u32 64, %s13
        $region28: #{mf_bpr_forward.1} parent=23 // pred_fallthru
          _
        // Predicated region
        $region29: #{mf_bpr_forward.1} parent=23 // pred_check
          %p167 = pneg %p59
        $region30: #{mf_bpr_forward.1} parent=23 // pred_check_branch
          %169 = sbr.rel (%p167) target = $region32
        $region31: #{mf_bpr_forward.1} parent=23 // pred_region
          %s170 = smul.u32 64, %s13
          %p171 = scmp.lt.s32.totalorder %s170, 127
          %s172 = scalar_select %p171, %s170, 127
          %s173 = smul.addr %s172, 8
          %s174 = scalar_lea.vmem %s1, %s173
          %s175 = smul.u32 64, %s13
        $region32: #{mf_bpr_forward.1} parent=23 // pred_fallthru
          _
      $region24: #{mf_bpr_forward.1} parent=5 // pred_fallthru
        _
      %p176 = scmp.le.s32.totalorder 1, %s13
      %p177 = scmp.lt.s32.totalorder %s13, 3
      %p178 = pnand %p176, %p177
      %p179 = pneg %p178
      // Predicated region
      $region33: #{mf_bpr_forward.1} parent=5 // pred_check
        _
      $region34: #{mf_bpr_forward.1} parent=5 // pred_check_branch
        %181 = sbr.rel (%p178) target = $region36
      $region35: #{mf_bpr_forward.1} parent=5 // pred_region
        %s182 = ssub.s32 %s13, 1
        %s183 = smul.u32 64, %s18
        %p184 = scmp.lt.s32.totalorder %s183, 127
        %s185 = scalar_select %p184, %s183, 127
        %s186 = smul.addr %s185, 8
        %s187 = scalar_lea.vmem %s0, %s186
        %p188 = pneg %p39
        %p189 = pneg %p36
        %s190 = smul.u32 64, %s18
        %p191 = scmp.lt.s32.totalorder %s190, 127
        %s192 = scalar_select %p191, %s190, 127
        %s193 = smul.addr %s192, 8
        %s194 = scalar_lea.vmem %s1, %s193
        %p195 = pneg %p65
        %p196 = pneg %p62
        %p197 = pneg %p86
        %p198 = pneg %p83
        %p199 = pneg %p107
        %p200 = pneg %p104
        %p201 = pneg %p133
        %p202 = pneg %p130
        %s203 = sand.u32 %s120, 1
        %s204 = scalar_lea.sflag [#allocation3], %s203
        %s205 = sand.u32 %s120, 1
        %s206 = smul.addr %s205, 4
        %s207 = scalar_lea.vmem [#allocation2], %s206
        %s208 = smul.u32 64, %s18
        %p209 = scmp.lt.s32.totalorder %s208, 127
        %s210 = scalar_select %p209, %s208, 127
        %s211 = smul.addr %s210, 8
        %s212 = scalar_lea.vmem %s0, %s211
        %s213 = smul.u32 64, %s18
        %s214 = smul.u32 64, %s18
        %p215 = scmp.lt.s32.totalorder %s214, 127
        %s216 = scalar_select %p215, %s214, 127
        %s217 = smul.addr %s216, 8
        %s218 = scalar_lea.vmem %s1, %s217
        %s219 = smul.u32 64, %s18
        %s220 = smul.u32 4, %s18
        %v221 = vld [vmem:[%s212] sm:$0xff]
        %v222 = vld [vmem:[%s212 + $0x8] sm:$0xff]
        %v223 = vld [vmem:[%s212 + $0x10] sm:$0xff]
        %v224 = vld [vmem:[%s212 + $0x18] sm:$0xff]
        %v225 = vld [vmem:[%s212 + $0x20] sm:$0xff]
        %v226 = vld [vmem:[%s212 + $0x28] sm:$0xff]
        %v227 = vld [vmem:[%s212 + $0x30] sm:$0xff]
        %v228 = vld [vmem:[%s212 + $0x38] sm:$0xff]
        %v229 = vld [vmem:[%s212 + $0x40] sm:$0xff]
        %v230 = vld [vmem:[%s212 + $0x48] sm:$0xff]
        %v231 = vld [vmem:[%s212 + $0x50] sm:$0xff]
        %v232 = vld [vmem:[%s212 + $0x58] sm:$0xff]
        %v233 = vld [vmem:[%s212 + $0x60] sm:$0xff]
        %v234 = vld [vmem:[%s212 + $0x68] sm:$0xff]
        %v235 = vld [vmem:[%s212 + $0x70] sm:$0xff]
        %v236 = vld [vmem:[%s212 + $0x78] sm:$0xff]
        %v237 = vld [vmem:[%s212 + $0x80] sm:$0xff]
        %v238 = vld [vmem:[%s212 + $0x88] sm:$0xff]
        %v239 = vld [vmem:[%s212 + $0x90] sm:$0xff]
        %v240 = vld [vmem:[%s212 + $0x98] sm:$0xff]
        %v241 = vld [vmem:[%s212 + $0xa0] sm:$0xff]
        %v242 = vld [vmem:[%s212 + $0xa8] sm:$0xff]
        %v243 = vld [vmem:[%s212 + $0xb0] sm:$0xff]
        %v244 = vld [vmem:[%s212 + $0xb8] sm:$0xff]
        %v245 = vld [vmem:[%s212 + $0xc0] sm:$0xff]
        %v246 = vld [vmem:[%s212 + $0xc8] sm:$0xff]
        %v247 = vld [vmem:[%s212 + $0xd0] sm:$0xff]
        %v248 = vld [vmem:[%s212 + $0xd8] sm:$0xff]
        %v249 = vld [vmem:[%s212 + $0xe0] sm:$0xff]
        %v250 = vld [vmem:[%s212 + $0xe8] sm:$0xff]
        %v251 = vld [vmem:[%s212 + $0xf0] sm:$0xff]
        %v252 = vld [vmem:[%s212 + $0xf8] sm:$0xff]
        %v253 = vld [vmem:[%s212 + $0x100] sm:$0xff]
        %v254 = vld [vmem:[%s212 + $0x108] sm:$0xff]
        %v255 = vld [vmem:[%s212 + $0x110] sm:$0xff]
        %v256 = vld [vmem:[%s212 + $0x118] sm:$0xff]
        %v257 = vld [vmem:[%s212 + $0x120] sm:$0xff]
        %v258 = vld [vmem:[%s212 + $0x128] sm:$0xff]
        %v259 = vld [vmem:[%s212 + $0x130] sm:$0xff]
        %v260 = vld [vmem:[%s212 + $0x138] sm:$0xff]
        %v261 = vld [vmem:[%s212 + $0x140] sm:$0xff]
        %v262 = vld [vmem:[%s212 + $0x148] sm:$0xff]
        %v263 = vld [vmem:[%s212 + $0x150] sm:$0xff]
        %v264 = vld [vmem:[%s212 + $0x158] sm:$0xff]
        %v265 = vld [vmem:[%s212 + $0x160] sm:$0xff]
        %v266 = vld [vmem:[%s212 + $0x168] sm:$0xff]
        %v267 = vld [vmem:[%s212 + $0x170] sm:$0xff]
        %v268 = vld [vmem:[%s212 + $0x178] sm:$0xff]
        %v269 = vld [vmem:[%s212 + $0x180] sm:$0xff]
        %v270 = vld [vmem:[%s212 + $0x188] sm:$0xff]
        %v271 = vld [vmem:[%s212 + $0x190] sm:$0xff]
        %v272 = vld [vmem:[%s212 + $0x198] sm:$0xff]
        %v273 = vld [vmem:[%s212 + $0x1a0] sm:$0xff]
        %v274 = vld [vmem:[%s212 + $0x1a8] sm:$0xff]
        %v275 = vld [vmem:[%s212 + $0x1b0] sm:$0xff]
        %v276 = vld [vmem:[%s212 + $0x1b8] sm:$0xff]
        %v277 = vld [vmem:[%s212 + $0x1c0] sm:$0xff]
        %v278 = vld [vmem:[%s212 + $0x1c8] sm:$0xff]
        %v279 = vld [vmem:[%s212 + $0x1d0] sm:$0xff]
        %v280 = vld [vmem:[%s212 + $0x1d8] sm:$0xff]
        %v281 = vld [vmem:[%s212 + $0x1e0] sm:$0xff]
        %v282 = vld [vmem:[%s212 + $0x1e8] sm:$0xff]
        %v283 = vld [vmem:[%s212 + $0x1f0] sm:$0xff]
        %v284 = vld [vmem:[%s212 + $0x1f8] sm:$0xff]
        %v285 = vlaneseq
        %v286 = vand.u32 %v285, 127
        %287 = vset.pattern.permute.xlu0 0
        %288 = vperm.xlu0 %287, %v221
        %v289 = vpop.permute.xlu0 %288
        %290 = vset.pattern.permute.xlu0 0
        %291 = vperm.xlu0 %290, %v222
        %v292 = vpop.permute.xlu0 %291
        %293 = vset.pattern.permute.xlu0 0
        %294 = vperm.xlu0 %293, %v223
        %v295 = vpop.permute.xlu0 %294
        %296 = vset.pattern.permute.xlu0 0
        %297 = vperm.xlu0 %296, %v224
        %v298 = vpop.permute.xlu0 %297
        %299 = vset.pattern.permute.xlu0 0
        %300 = vperm.xlu0 %299, %v225
        %v301 = vpop.permute.xlu0 %300
        %302 = vset.pattern.permute.xlu0 0
        %303 = vperm.xlu0 %302, %v226
        %v304 = vpop.permute.xlu0 %303
        %305 = vset.pattern.permute.xlu0 0
        %306 = vperm.xlu0 %305, %v227
        %v307 = vpop.permute.xlu0 %306
        %308 = vset.pattern.permute.xlu0 0
        %309 = vperm.xlu0 %308, %v228
        %v310 = vpop.permute.xlu0 %309
        %311 = vset.pattern.permute.xlu0 0
        %312 = vperm.xlu0 %311, %v229
        %v313 = vpop.permute.xlu0 %312
        %314 = vset.pattern.permute.xlu0 0
        %315 = vperm.xlu0 %314, %v230
        %v316 = vpop.permute.xlu0 %315
        %317 = vset.pattern.permute.xlu0 0
        %318 = vperm.xlu0 %317, %v231
        %v319 = vpop.permute.xlu0 %318
        %320 = vset.pattern.permute.xlu0 0
        %321 = vperm.xlu0 %320, %v232
        %v322 = vpop.permute.xlu0 %321
        %323 = vset.pattern.permute.xlu0 0
        %324 = vperm.xlu0 %323, %v233
        %v325 = vpop.permute.xlu0 %324
        %326 = vset.pattern.permute.xlu0 0
        %327 = vperm.xlu0 %326, %v234
        %v328 = vpop.permute.xlu0 %327
        %329 = vset.pattern.permute.xlu0 0
        %330 = vperm.xlu0 %329, %v235
        %v331 = vpop.permute.xlu0 %330
        %332 = vset.pattern.permute.xlu0 0
        %333 = vperm.xlu0 %332, %v236
        %v334 = vpop.permute.xlu0 %333
        %335 = vset.pattern.permute.xlu0 0
        %336 = vperm.xlu0 %335, %v237
        %v337 = vpop.permute.xlu0 %336
        %338 = vset.pattern.permute.xlu0 0
        %339 = vperm.xlu0 %338, %v238
        %v340 = vpop.permute.xlu0 %339
        %341 = vset.pattern.permute.xlu0 0
        %342 = vperm.xlu0 %341, %v239
        %v343 = vpop.permute.xlu0 %342
        %344 = vset.pattern.permute.xlu0 0
        %345 = vperm.xlu0 %344, %v240
        %v346 = vpop.permute.xlu0 %345
        %347 = vset.pattern.permute.xlu0 0
        %348 = vperm.xlu0 %347, %v241
        %v349 = vpop.permute.xlu0 %348
        %350 = vset.pattern.permute.xlu0 0
        %351 = vperm.xlu0 %350, %v242
        %v352 = vpop.permute.xlu0 %351
        %353 = vset.pattern.permute.xlu0 0
        %354 = vperm.xlu0 %353, %v243
        %v355 = vpop.permute.xlu0 %354
        %356 = vset.pattern.permute.xlu0 0
        %357 = vperm.xlu0 %356, %v244
        %v358 = vpop.permute.xlu0 %357
        %359 = vset.pattern.permute.xlu0 0
        %360 = vperm.xlu0 %359, %v245
        %v361 = vpop.permute.xlu0 %360
        %362 = vset.pattern.permute.xlu0 0
        %363 = vperm.xlu0 %362, %v246
        %v364 = vpop.permute.xlu0 %363
        %365 = vset.pattern.permute.xlu0 0
        %366 = vperm.xlu0 %365, %v247
        %v367 = vpop.permute.xlu0 %366
        %368 = vset.pattern.permute.xlu0 0
        %369 = vperm.xlu0 %368, %v248
        %v370 = vpop.permute.xlu0 %369
        %371 = vset.pattern.permute.xlu0 0
        %372 = vperm.xlu0 %371, %v249
        %v373 = vpop.permute.xlu0 %372
        %374 = vset.pattern.permute.xlu0 0
        %375 = vperm.xlu0 %374, %v250
        %v376 = vpop.permute.xlu0 %375
        %377 = vset.pattern.permute.xlu0 0
        %378 = vperm.xlu0 %377, %v251
        %v379 = vpop.permute.xlu0 %378
        %380 = vset.pattern.permute.xlu0 0
        %381 = vperm.xlu0 %380, %v252
        %v382 = vpop.permute.xlu0 %381
        %383 = vset.pattern.permute.xlu0 0
        %384 = vperm.xlu0 %383, %v253
        %v385 = vpop.permute.xlu0 %384
        %386 = vset.pattern.permute.xlu0 0
        %387 = vperm.xlu0 %386, %v254
        %v388 = vpop.permute.xlu0 %387
        %389 = vset.pattern.permute.xlu0 0
        %390 = vperm.xlu0 %389, %v255
        %v391 = vpop.permute.xlu0 %390
        %392 = vset.pattern.permute.xlu0 0
        %393 = vperm.xlu0 %392, %v256
        %v394 = vpop.permute.xlu0 %393
        %395 = vset.pattern.permute.xlu0 0
        %396 = vperm.xlu0 %395, %v257
        %v397 = vpop.permute.xlu0 %396
        %398 = vset.pattern.permute.xlu0 0
        %399 = vperm.xlu0 %398, %v258
        %v400 = vpop.permute.xlu0 %399
        %401 = vset.pattern.permute.xlu0 0
        %402 = vperm.xlu0 %401, %v259
        %v403 = vpop.permute.xlu0 %402
        %404 = vset.pattern.permute.xlu0 0
        %405 = vperm.xlu0 %404, %v260
        %v406 = vpop.permute.xlu0 %405
        %407 = vset.pattern.permute.xlu0 0
        %408 = vperm.xlu0 %407, %v261
        %v409 = vpop.permute.xlu0 %408
        %410 = vset.pattern.permute.xlu0 0
        %411 = vperm.xlu0 %410, %v262
        %v412 = vpop.permute.xlu0 %411
        %413 = vset.pattern.permute.xlu0 0
        %414 = vperm.xlu0 %413, %v263
        %v415 = vpop.permute.xlu0 %414
        %416 = vset.pattern.permute.xlu0 0
        %417 = vperm.xlu0 %416, %v264
        %v418 = vpop.permute.xlu0 %417
        %419 = vset.pattern.permute.xlu0 0
        %420 = vperm.xlu0 %419, %v265
        %v421 = vpop.permute.xlu0 %420
        %422 = vset.pattern.permute.xlu0 0
        %423 = vperm.xlu0 %422, %v266
        %v424 = vpop.permute.xlu0 %423
        %425 = vset.pattern.permute.xlu0 0
        %426 = vperm.xlu0 %425, %v267
        %v427 = vpop.permute.xlu0 %426
        %428 = vset.pattern.permute.xlu0 0
        %429 = vperm.xlu0 %428, %v268
        %v430 = vpop.permute.xlu0 %429
        %431 = vset.pattern.permute.xlu0 0
        %432 = vperm.xlu0 %431, %v269
        %v433 = vpop.permute.xlu0 %432
        %434 = vset.pattern.permute.xlu0 0
        %435 = vperm.xlu0 %434, %v270
        %v436 = vpop.permute.xlu0 %435
        %437 = vset.pattern.permute.xlu0 0
        %438 = vperm.xlu0 %437, %v271
        %v439 = vpop.permute.xlu0 %438
        %440 = vset.pattern.permute.xlu0 0
        %441 = vperm.xlu0 %440, %v272
        %v442 = vpop.permute.xlu0 %441
        %443 = vset.pattern.permute.xlu0 0
        %444 = vperm.xlu0 %443, %v273
        %v445 = vpop.permute.xlu0 %444
        %446 = vset.pattern.permute.xlu0 0
        %447 = vperm.xlu0 %446, %v274
        %v448 = vpop.permute.xlu0 %447
        %449 = vset.pattern.permute.xlu0 0
        %450 = vperm.xlu0 %449, %v275
        %v451 = vpop.permute.xlu0 %450
        %452 = vset.pattern.permute.xlu0 0
        %453 = vperm.xlu0 %452, %v276
        %v454 = vpop.permute.xlu0 %453
        %455 = vset.pattern.permute.xlu0 0
        %456 = vperm.xlu0 %455, %v277
        %v457 = vpop.permute.xlu0 %456
        %458 = vset.pattern.permute.xlu0 0
        %459 = vperm.xlu0 %458, %v278
        %v460 = vpop.permute.xlu0 %459
        %461 = vset.pattern.permute.xlu0 0
        %462 = vperm.xlu0 %461, %v279
        %v463 = vpop.permute.xlu0 %462
        %464 = vset.pattern.permute.xlu0 0
        %465 = vperm.xlu0 %464, %v280
        %v466 = vpop.permute.xlu0 %465
        %467 = vset.pattern.permute.xlu0 0
        %468 = vperm.xlu0 %467, %v281
        %v469 = vpop.permute.xlu0 %468
        %470 = vset.pattern.permute.xlu0 0
        %471 = vperm.xlu0 %470, %v282
        %v472 = vpop.permute.xlu0 %471
        %473 = vset.pattern.permute.xlu0 0
        %474 = vperm.xlu0 %473, %v283
        %v475 = vpop.permute.xlu0 %474
        %476 = vset.pattern.permute.xlu0 0
        %477 = vperm.xlu0 %476, %v284
        %v478 = vpop.permute.xlu0 %477
        %vm479 = vcmp.eq.s32.totalorder %v289, %v286
        %vm480 = vcmp.eq.s32.totalorder %v292, %v286
        %vm481 = vcmp.eq.s32.totalorder %v295, %v286
        %vm482 = vcmp.eq.s32.totalorder %v298, %v286
        %vm483 = vcmp.eq.s32.totalorder %v301, %v286
        %vm484 = vcmp.eq.s32.totalorder %v304, %v286
        %vm485 = vcmp.eq.s32.totalorder %v307, %v286
        %vm486 = vcmp.eq.s32.totalorder %v310, %v286
        %vm487 = vcmp.eq.s32.totalorder %v313, %v286
        %vm488 = vcmp.eq.s32.totalorder %v316, %v286
        %vm489 = vcmp.eq.s32.totalorder %v319, %v286
        %vm490 = vcmp.eq.s32.totalorder %v322, %v286
        %vm491 = vcmp.eq.s32.totalorder %v325, %v286
        %vm492 = vcmp.eq.s32.totalorder %v328, %v286
        %vm493 = vcmp.eq.s32.totalorder %v331, %v286
        %vm494 = vcmp.eq.s32.totalorder %v334, %v286
        %vm495 = vcmp.eq.s32.totalorder %v337, %v286
        %vm496 = vcmp.eq.s32.totalorder %v340, %v286
        %vm497 = vcmp.eq.s32.totalorder %v343, %v286
        %vm498 = vcmp.eq.s32.totalorder %v346, %v286
        %vm499 = vcmp.eq.s32.totalorder %v349, %v286
        %vm500 = vcmp.eq.s32.totalorder %v352, %v286
        %vm501 = vcmp.eq.s32.totalorder %v355, %v286
        %vm502 = vcmp.eq.s32.totalorder %v358, %v286
        %vm503 = vcmp.eq.s32.totalorder %v361, %v286
        %vm504 = vcmp.eq.s32.totalorder %v364, %v286
        %vm505 = vcmp.eq.s32.totalorder %v367, %v286
        %vm506 = vcmp.eq.s32.totalorder %v370, %v286
        %vm507 = vcmp.eq.s32.totalorder %v373, %v286
        %vm508 = vcmp.eq.s32.totalorder %v376, %v286
        %vm509 = vcmp.eq.s32.totalorder %v379, %v286
        %vm510 = vcmp.eq.s32.totalorder %v382, %v286
        %vm511 = vcmp.eq.s32.totalorder %v385, %v286
        %vm512 = vcmp.eq.s32.totalorder %v388, %v286
        %vm513 = vcmp.eq.s32.totalorder %v391, %v286
        %vm514 = vcmp.eq.s32.totalorder %v394, %v286
        %vm515 = vcmp.eq.s32.totalorder %v397, %v286
        %vm516 = vcmp.eq.s32.totalorder %v400, %v286
        %vm517 = vcmp.eq.s32.totalorder %v403, %v286
        %vm518 = vcmp.eq.s32.totalorder %v406, %v286
        %vm519 = vcmp.eq.s32.totalorder %v409, %v286
        %vm520 = vcmp.eq.s32.totalorder %v412, %v286
        %vm521 = vcmp.eq.s32.totalorder %v415, %v286
        %vm522 = vcmp.eq.s32.totalorder %v418, %v286
        %vm523 = vcmp.eq.s32.totalorder %v421, %v286
        %vm524 = vcmp.eq.s32.totalorder %v424, %v286
        %vm525 = vcmp.eq.s32.totalorder %v427, %v286
        %vm526 = vcmp.eq.s32.totalorder %v430, %v286
        %vm527 = vcmp.eq.s32.totalorder %v433, %v286
        %vm528 = vcmp.eq.s32.totalorder %v436, %v286
        %vm529 = vcmp.eq.s32.totalorder %v439, %v286
        %vm530 = vcmp.eq.s32.totalorder %v442, %v286
        %vm531 = vcmp.eq.s32.totalorder %v445, %v286
        %vm532 = vcmp.eq.s32.totalorder %v448, %v286
        %vm533 = vcmp.eq.s32.totalorder %v451, %v286
        %vm534 = vcmp.eq.s32.totalorder %v454, %v286
        %vm535 = vcmp.eq.s32.totalorder %v457, %v286
        %vm536 = vcmp.eq.s32.totalorder %v460, %v286
        %vm537 = vcmp.eq.s32.totalorder %v463, %v286
        %vm538 = vcmp.eq.s32.totalorder %v466, %v286
        %vm539 = vcmp.eq.s32.totalorder %v469, %v286
        %vm540 = vcmp.eq.s32.totalorder %v472, %v286
        %vm541 = vcmp.eq.s32.totalorder %v475, %v286
        %vm542 = vcmp.eq.s32.totalorder %v478, %v286
        %v543 = vsel %vm479, 1, 0
        %v544 = vsel %vm480, 1, 0
        %v545 = vsel %vm481, 1, 0
        %v546 = vsel %vm482, 1, 0
        %v547 = vsel %vm483, 1, 0
        %v548 = vsel %vm484, 1, 0
        %v549 = vsel %vm485, 1, 0
        %v550 = vsel %vm486, 1, 0
        %v551 = vsel %vm487, 1, 0
        %v552 = vsel %vm488, 1, 0
        %v553 = vsel %vm489, 1, 0
        %v554 = vsel %vm490, 1, 0
        %v555 = vsel %vm491, 1, 0
        %v556 = vsel %vm492, 1, 0
        %v557 = vsel %vm493, 1, 0
        %v558 = vsel %vm494, 1, 0
        %v559 = vsel %vm495, 1, 0
        %v560 = vsel %vm496, 1, 0
        %v561 = vsel %vm497, 1, 0
        %v562 = vsel %vm498, 1, 0
        %v563 = vsel %vm499, 1, 0
        %v564 = vsel %vm500, 1, 0
        %v565 = vsel %vm501, 1, 0
        %v566 = vsel %vm502, 1, 0
        %v567 = vsel %vm503, 1, 0
        %v568 = vsel %vm504, 1, 0
        %v569 = vsel %vm505, 1, 0
        %v570 = vsel %vm506, 1, 0
        %v571 = vsel %vm507, 1, 0
        %v572 = vsel %vm508, 1, 0
        %v573 = vsel %vm509, 1, 0
        %v574 = vsel %vm510, 1, 0
        %v575 = vsel %vm511, 1, 0
        %v576 = vsel %vm512, 1, 0
        %v577 = vsel %vm513, 1, 0
        %v578 = vsel %vm514, 1, 0
        %v579 = vsel %vm515, 1, 0
        %v580 = vsel %vm516, 1, 0
        %v581 = vsel %vm517, 1, 0
        %v582 = vsel %vm518, 1, 0
        %v583 = vsel %vm519, 1, 0
        %v584 = vsel %vm520, 1, 0
        %v585 = vsel %vm521, 1, 0
        %v586 = vsel %vm522, 1, 0
        %v587 = vsel %vm523, 1, 0
        %v588 = vsel %vm524, 1, 0
        %v589 = vsel %vm525, 1, 0
        %v590 = vsel %vm526, 1, 0
        %v591 = vsel %vm527, 1, 0
        %v592 = vsel %vm528, 1, 0
        %v593 = vsel %vm529, 1, 0
        %v594 = vsel %vm530, 1, 0
        %v595 = vsel %vm531, 1, 0
        %v596 = vsel %vm532, 1, 0
        %v597 = vsel %vm533, 1, 0
        %v598 = vsel %vm534, 1, 0
        %v599 = vsel %vm535, 1, 0
        %v600 = vsel %vm536, 1, 0
        %v601 = vsel %vm537, 1, 0
        %v602 = vsel %vm538, 1, 0
        %v603 = vsel %vm539, 1, 0
        %v604 = vsel %vm540, 1, 0
        %v605 = vsel %vm541, 1, 0
        %v606 = vsel %vm542, 1, 0
        %v607 = vcvt.s32.f32 %v543
        %v608 = vcvt.s32.f32 %v544
        %v609 = vcvt.s32.f32 %v545
        %v610 = vcvt.s32.f32 %v546
        %v611 = vcvt.s32.f32 %v547
        %v612 = vcvt.s32.f32 %v548
        %v613 = vcvt.s32.f32 %v549
        %v614 = vcvt.s32.f32 %v550
        %v615 = vcvt.s32.f32 %v551
        %v616 = vcvt.s32.f32 %v552
        %v617 = vcvt.s32.f32 %v553
        %v618 = vcvt.s32.f32 %v554
        %v619 = vcvt.s32.f32 %v555
        %v620 = vcvt.s32.f32 %v556
        %v621 = vcvt.s32.f32 %v557
        %v622 = vcvt.s32.f32 %v558
        %v623 = vcvt.s32.f32 %v559
        %v624 = vcvt.s32.f32 %v560
        %v625 = vcvt.s32.f32 %v561
        %v626 = vcvt.s32.f32 %v562
        %v627 = vcvt.s32.f32 %v563
        %v628 = vcvt.s32.f32 %v564
        %v629 = vcvt.s32.f32 %v565
        %v630 = vcvt.s32.f32 %v566
        %v631 = vcvt.s32.f32 %v567
        %v632 = vcvt.s32.f32 %v568
        %v633 = vcvt.s32.f32 %v569
        %v634 = vcvt.s32.f32 %v570
        %v635 = vcvt.s32.f32 %v571
        %v636 = vcvt.s32.f32 %v572
        %v637 = vcvt.s32.f32 %v573
        %v638 = vcvt.s32.f32 %v574
        %v639 = vcvt.s32.f32 %v575
        %v640 = vcvt.s32.f32 %v576
        %v641 = vcvt.s32.f32 %v577
        %v642 = vcvt.s32.f32 %v578
        %v643 = vcvt.s32.f32 %v579
        %v644 = vcvt.s32.f32 %v580
        %v645 = vcvt.s32.f32 %v581
        %v646 = vcvt.s32.f32 %v582
        %v647 = vcvt.s32.f32 %v583
        %v648 = vcvt.s32.f32 %v584
        %v649 = vcvt.s32.f32 %v585
        %v650 = vcvt.s32.f32 %v586
        %v651 = vcvt.s32.f32 %v587
        %v652 = vcvt.s32.f32 %v588
        %v653 = vcvt.s32.f32 %v589
        %v654 = vcvt.s32.f32 %v590
        %v655 = vcvt.s32.f32 %v591
        %v656 = vcvt.s32.f32 %v592
        %v657 = vcvt.s32.f32 %v593
        %v658 = vcvt.s32.f32 %v594
        %v659 = vcvt.s32.f32 %v595
        %v660 = vcvt.s32.f32 %v596
        %v661 = vcvt.s32.f32 %v597
        %v662 = vcvt.s32.f32 %v598
        %v663 = vcvt.s32.f32 %v599
        %v664 = vcvt.s32.f32 %v600
        %v665 = vcvt.s32.f32 %v601
        %v666 = vcvt.s32.f32 %v602
        %v667 = vcvt.s32.f32 %v603
        %v668 = vcvt.s32.f32 %v604
        %v669 = vcvt.s32.f32 %v605
        %v670 = vcvt.s32.f32 %v606
        %v671 = vld [vmem:[%s218] sm:$0xff]
        %v672 = vld [vmem:[%s218 + $0x8] sm:$0xff]
        %v673 = vld [vmem:[%s218 + $0x10] sm:$0xff]
        %v674 = vld [vmem:[%s218 + $0x18] sm:$0xff]
        %v675 = vld [vmem:[%s218 + $0x20] sm:$0xff]
        %v676 = vld [vmem:[%s218 + $0x28] sm:$0xff]
        %v677 = vld [vmem:[%s218 + $0x30] sm:$0xff]
        %v678 = vld [vmem:[%s218 + $0x38] sm:$0xff]
        %v679 = vld [vmem:[%s218 + $0x40] sm:$0xff]
        %v680 = vld [vmem:[%s218 + $0x48] sm:$0xff]
        %v681 = vld [vmem:[%s218 + $0x50] sm:$0xff]
        %v682 = vld [vmem:[%s218 + $0x58] sm:$0xff]
        %v683 = vld [vmem:[%s218 + $0x60] sm:$0xff]
        %v684 = vld [vmem:[%s218 + $0x68] sm:$0xff]
        %v685 = vld [vmem:[%s218 + $0x70] sm:$0xff]
        %v686 = vld [vmem:[%s218 + $0x78] sm:$0xff]
        %v687 = vld [vmem:[%s218 + $0x80] sm:$0xff]
        %v688 = vld [vmem:[%s218 + $0x88] sm:$0xff]
        %v689 = vld [vmem:[%s218 + $0x90] sm:$0xff]
        %v690 = vld [vmem:[%s218 + $0x98] sm:$0xff]
        %v691 = vld [vmem:[%s218 + $0xa0] sm:$0xff]
        %v692 = vld [vmem:[%s218 + $0xa8] sm:$0xff]
        %v693 = vld [vmem:[%s218 + $0xb0] sm:$0xff]
        %v694 = vld [vmem:[%s218 + $0xb8] sm:$0xff]
        %v695 = vld [vmem:[%s218 + $0xc0] sm:$0xff]
        %v696 = vld [vmem:[%s218 + $0xc8] sm:$0xff]
        %v697 = vld [vmem:[%s218 + $0xd0] sm:$0xff]
        %v698 = vld [vmem:[%s218 + $0xd8] sm:$0xff]
        %v699 = vld [vmem:[%s218 + $0xe0] sm:$0xff]
        %v700 = vld [vmem:[%s218 + $0xe8] sm:$0xff]
        %v701 = vld [vmem:[%s218 + $0xf0] sm:$0xff]
        %v702 = vld [vmem:[%s218 + $0xf8] sm:$0xff]
        %v703 = vld [vmem:[%s218 + $0x100] sm:$0xff]
        %v704 = vld [vmem:[%s218 + $0x108] sm:$0xff]
        %v705 = vld [vmem:[%s218 + $0x110] sm:$0xff]
        %v706 = vld [vmem:[%s218 + $0x118] sm:$0xff]
        %v707 = vld [vmem:[%s218 + $0x120] sm:$0xff]
        %v708 = vld [vmem:[%s218 + $0x128] sm:$0xff]
        %v709 = vld [vmem:[%s218 + $0x130] sm:$0xff]
        %v710 = vld [vmem:[%s218 + $0x138] sm:$0xff]
        %v711 = vld [vmem:[%s218 + $0x140] sm:$0xff]
        %v712 = vld [vmem:[%s218 + $0x148] sm:$0xff]
        %v713 = vld [vmem:[%s218 + $0x150] sm:$0xff]
        %v714 = vld [vmem:[%s218 + $0x158] sm:$0xff]
        %v715 = vld [vmem:[%s218 + $0x160] sm:$0xff]
        %v716 = vld [vmem:[%s218 + $0x168] sm:$0xff]
        %v717 = vld [vmem:[%s218 + $0x170] sm:$0xff]
        %v718 = vld [vmem:[%s218 + $0x178] sm:$0xff]
        %v719 = vld [vmem:[%s218 + $0x180] sm:$0xff]
        %v720 = vld [vmem:[%s218 + $0x188] sm:$0xff]
        %v721 = vld [vmem:[%s218 + $0x190] sm:$0xff]
        %v722 = vld [vmem:[%s218 + $0x198] sm:$0xff]
        %v723 = vld [vmem:[%s218 + $0x1a0] sm:$0xff]
        %v724 = vld [vmem:[%s218 + $0x1a8] sm:$0xff]
        %v725 = vld [vmem:[%s218 + $0x1b0] sm:$0xff]
        %v726 = vld [vmem:[%s218 + $0x1b8] sm:$0xff]
        %v727 = vld [vmem:[%s218 + $0x1c0] sm:$0xff]
        %v728 = vld [vmem:[%s218 + $0x1c8] sm:$0xff]
        %v729 = vld [vmem:[%s218 + $0x1d0] sm:$0xff]
        %v730 = vld [vmem:[%s218 + $0x1d8] sm:$0xff]
        %v731 = vld [vmem:[%s218 + $0x1e0] sm:$0xff]
        %v732 = vld [vmem:[%s218 + $0x1e8] sm:$0xff]
        %v733 = vld [vmem:[%s218 + $0x1f0] sm:$0xff]
        %v734 = vld [vmem:[%s218 + $0x1f8] sm:$0xff]
        %735 = vset.pattern.permute.xlu0 0
        %736 = vperm.xlu0 %735, %v671
        %v737 = vpop.permute.xlu0 %736
        %738 = vset.pattern.permute.xlu0 0
        %739 = vperm.xlu0 %738, %v672
        %v740 = vpop.permute.xlu0 %739
        %741 = vset.pattern.permute.xlu0 0
        %742 = vperm.xlu0 %741, %v673
        %v743 = vpop.permute.xlu0 %742
        %744 = vset.pattern.permute.xlu0 0
        %745 = vperm.xlu0 %744, %v674
        %v746 = vpop.permute.xlu0 %745
        %747 = vset.pattern.permute.xlu0 0
        %748 = vperm.xlu0 %747, %v675
        %v749 = vpop.permute.xlu0 %748
        %750 = vset.pattern.permute.xlu0 0
        %751 = vperm.xlu0 %750, %v676
        %v752 = vpop.permute.xlu0 %751
        %753 = vset.pattern.permute.xlu0 0
        %754 = vperm.xlu0 %753, %v677
        %v755 = vpop.permute.xlu0 %754
        %756 = vset.pattern.permute.xlu0 0
        %757 = vperm.xlu0 %756, %v678
        %v758 = vpop.permute.xlu0 %757
        %759 = vset.pattern.permute.xlu0 0
        %760 = vperm.xlu0 %759, %v679
        %v761 = vpop.permute.xlu0 %760
        %762 = vset.pattern.permute.xlu0 0
        %763 = vperm.xlu0 %762, %v680
        %v764 = vpop.permute.xlu0 %763
        %765 = vset.pattern.permute.xlu0 0
        %766 = vperm.xlu0 %765, %v681
        %v767 = vpop.permute.xlu0 %766
        %768 = vset.pattern.permute.xlu0 0
        %769 = vperm.xlu0 %768, %v682
        %v770 = vpop.permute.xlu0 %769
        %771 = vset.pattern.permute.xlu0 0
        %772 = vperm.xlu0 %771, %v683
        %v773 = vpop.permute.xlu0 %772
        %774 = vset.pattern.permute.xlu0 0
        %775 = vperm.xlu0 %774, %v684
        %v776 = vpop.permute.xlu0 %775
        %777 = vset.pattern.permute.xlu0 0
        %778 = vperm.xlu0 %777, %v685
        %v779 = vpop.permute.xlu0 %778
        %780 = vset.pattern.permute.xlu0 0
        %781 = vperm.xlu0 %780, %v686
        %v782 = vpop.permute.xlu0 %781
        %783 = vset.pattern.permute.xlu0 0
        %784 = vperm.xlu0 %783, %v687
        %v785 = vpop.permute.xlu0 %784
        %786 = vset.pattern.permute.xlu0 0
        %787 = vperm.xlu0 %786, %v688
        %v788 = vpop.permute.xlu0 %787
        %789 = vset.pattern.permute.xlu0 0
        %790 = vperm.xlu0 %789, %v689
        %v791 = vpop.permute.xlu0 %790
        %792 = vset.pattern.permute.xlu0 0
        %793 = vperm.xlu0 %792, %v690
        %v794 = vpop.permute.xlu0 %793
        %795 = vset.pattern.permute.xlu0 0
        %796 = vperm.xlu0 %795, %v691
        %v797 = vpop.permute.xlu0 %796
        %798 = vset.pattern.permute.xlu0 0
        %799 = vperm.xlu0 %798, %v692
        %v800 = vpop.permute.xlu0 %799
        %801 = vset.pattern.permute.xlu0 0
        %802 = vperm.xlu0 %801, %v693
        %v803 = vpop.permute.xlu0 %802
        %804 = vset.pattern.permute.xlu0 0
        %805 = vperm.xlu0 %804, %v694
        %v806 = vpop.permute.xlu0 %805
        %807 = vset.pattern.permute.xlu0 0
        %808 = vperm.xlu0 %807, %v695
        %v809 = vpop.permute.xlu0 %808
        %810 = vset.pattern.permute.xlu0 0
        %811 = vperm.xlu0 %810, %v696
        %v812 = vpop.permute.xlu0 %811
        %813 = vset.pattern.permute.xlu0 0
        %814 = vperm.xlu0 %813, %v697
        %v815 = vpop.permute.xlu0 %814
        %816 = vset.pattern.permute.xlu0 0
        %817 = vperm.xlu0 %816, %v698
        %v818 = vpop.permute.xlu0 %817
        %819 = vset.pattern.permute.xlu0 0
        %820 = vperm.xlu0 %819, %v699
        %v821 = vpop.permute.xlu0 %820
        %822 = vset.pattern.permute.xlu0 0
        %823 = vperm.xlu0 %822, %v700
        %v824 = vpop.permute.xlu0 %823
        %825 = vset.pattern.permute.xlu0 0
        %826 = vperm.xlu0 %825, %v701
        %v827 = vpop.permute.xlu0 %826
        %828 = vset.pattern.permute.xlu0 0
        %829 = vperm.xlu0 %828, %v702
        %v830 = vpop.permute.xlu0 %829
        %831 = vset.pattern.permute.xlu0 0
        %832 = vperm.xlu0 %831, %v703
        %v833 = vpop.permute.xlu0 %832
        %834 = vset.pattern.permute.xlu0 0
        %835 = vperm.xlu0 %834, %v704
        %v836 = vpop.permute.xlu0 %835
        %837 = vset.pattern.permute.xlu0 0
        %838 = vperm.xlu0 %837, %v705
        %v839 = vpop.permute.xlu0 %838
        %840 = vset.pattern.permute.xlu0 0
        %841 = vperm.xlu0 %840, %v706
        %v842 = vpop.permute.xlu0 %841
        %843 = vset.pattern.permute.xlu0 0
        %844 = vperm.xlu0 %843, %v707
        %v845 = vpop.permute.xlu0 %844
        %846 = vset.pattern.permute.xlu0 0
        %847 = vperm.xlu0 %846, %v708
        %v848 = vpop.permute.xlu0 %847
        %849 = vset.pattern.permute.xlu0 0
        %850 = vperm.xlu0 %849, %v709
        %v851 = vpop.permute.xlu0 %850
        %852 = vset.pattern.permute.xlu0 0
        %853 = vperm.xlu0 %852, %v710
        %v854 = vpop.permute.xlu0 %853
        %855 = vset.pattern.permute.xlu0 0
        %856 = vperm.xlu0 %855, %v711
        %v857 = vpop.permute.xlu0 %856
        %858 = vset.pattern.permute.xlu0 0
        %859 = vperm.xlu0 %858, %v712
        %v860 = vpop.permute.xlu0 %859
        %861 = vset.pattern.permute.xlu0 0
        %862 = vperm.xlu0 %861, %v713
        %v863 = vpop.permute.xlu0 %862
        %864 = vset.pattern.permute.xlu0 0
        %865 = vperm.xlu0 %864, %v714
        %v866 = vpop.permute.xlu0 %865
        %867 = vset.pattern.permute.xlu0 0
        %868 = vperm.xlu0 %867, %v715
        %v869 = vpop.permute.xlu0 %868
        %870 = vset.pattern.permute.xlu0 0
        %871 = vperm.xlu0 %870, %v716
        %v872 = vpop.permute.xlu0 %871
        %873 = vset.pattern.permute.xlu0 0
        %874 = vperm.xlu0 %873, %v717
        %v875 = vpop.permute.xlu0 %874
        %876 = vset.pattern.permute.xlu0 0
        %877 = vperm.xlu0 %876, %v718
        %v878 = vpop.permute.xlu0 %877
        %879 = vset.pattern.permute.xlu0 0
        %880 = vperm.xlu0 %879, %v719
        %v881 = vpop.permute.xlu0 %880
        %882 = vset.pattern.permute.xlu0 0
        %883 = vperm.xlu0 %882, %v720
        %v884 = vpop.permute.xlu0 %883
        %885 = vset.pattern.permute.xlu0 0
        %886 = vperm.xlu0 %885, %v721
        %v887 = vpop.permute.xlu0 %886
        %888 = vset.pattern.permute.xlu0 0
        %889 = vperm.xlu0 %888, %v722
        %v890 = vpop.permute.xlu0 %889
        %891 = vset.pattern.permute.xlu0 0
        %892 = vperm.xlu0 %891, %v723
        %v893 = vpop.permute.xlu0 %892
        %894 = vset.pattern.permute.xlu0 0
        %895 = vperm.xlu0 %894, %v724
        %v896 = vpop.permute.xlu0 %895
        %897 = vset.pattern.permute.xlu0 0
        %898 = vperm.xlu0 %897, %v725
        %v899 = vpop.permute.xlu0 %898
        %900 = vset.pattern.permute.xlu0 0
        %901 = vperm.xlu0 %900, %v726
        %v902 = vpop.permute.xlu0 %901
        %903 = vset.pattern.permute.xlu0 0
        %904 = vperm.xlu0 %903, %v727
        %v905 = vpop.permute.xlu0 %904
        %906 = vset.pattern.permute.xlu0 0
        %907 = vperm.xlu0 %906, %v728
        %v908 = vpop.permute.xlu0 %907
        %909 = vset.pattern.permute.xlu0 0
        %910 = vperm.xlu0 %909, %v729
        %v911 = vpop.permute.xlu0 %910
        %912 = vset.pattern.permute.xlu0 0
        %913 = vperm.xlu0 %912, %v730
        %v914 = vpop.permute.xlu0 %913
        %915 = vset.pattern.permute.xlu0 0
        %916 = vperm.xlu0 %915, %v731
        %v917 = vpop.permute.xlu0 %916
        %918 = vset.pattern.permute.xlu0 0
        %919 = vperm.xlu0 %918, %v732
        %v920 = vpop.permute.xlu0 %919
        %921 = vset.pattern.permute.xlu0 0
        %922 = vperm.xlu0 %921, %v733
        %v923 = vpop.permute.xlu0 %922
        %924 = vset.pattern.permute.xlu0 0
        %925 = vperm.xlu0 %924, %v734
        %v926 = vpop.permute.xlu0 %925
        %vm927 = vcmp.eq.s32.totalorder %v737, %v286
        %vm928 = vcmp.eq.s32.totalorder %v740, %v286
        %vm929 = vcmp.eq.s32.totalorder %v743, %v286
        %vm930 = vcmp.eq.s32.totalorder %v746, %v286
        %vm931 = vcmp.eq.s32.totalorder %v749, %v286
        %vm932 = vcmp.eq.s32.totalorder %v752, %v286
        %vm933 = vcmp.eq.s32.totalorder %v755, %v286
        %vm934 = vcmp.eq.s32.totalorder %v758, %v286
        %vm935 = vcmp.eq.s32.totalorder %v761, %v286
        %vm936 = vcmp.eq.s32.totalorder %v764, %v286
        %vm937 = vcmp.eq.s32.totalorder %v767, %v286
        %vm938 = vcmp.eq.s32.totalorder %v770, %v286
        %vm939 = vcmp.eq.s32.totalorder %v773, %v286
        %vm940 = vcmp.eq.s32.totalorder %v776, %v286
        %vm941 = vcmp.eq.s32.totalorder %v779, %v286
        %vm942 = vcmp.eq.s32.totalorder %v782, %v286
        %vm943 = vcmp.eq.s32.totalorder %v785, %v286
        %vm944 = vcmp.eq.s32.totalorder %v788, %v286
        %vm945 = vcmp.eq.s32.totalorder %v791, %v286
        %vm946 = vcmp.eq.s32.totalorder %v794, %v286
        %vm947 = vcmp.eq.s32.totalorder %v797, %v286
        %vm948 = vcmp.eq.s32.totalorder %v800, %v286
        %vm949 = vcmp.eq.s32.totalorder %v803, %v286
        %vm950 = vcmp.eq.s32.totalorder %v806, %v286
        %vm951 = vcmp.eq.s32.totalorder %v809, %v286
        %vm952 = vcmp.eq.s32.totalorder %v812, %v286
        %vm953 = vcmp.eq.s32.totalorder %v815, %v286
        %vm954 = vcmp.eq.s32.totalorder %v818, %v286
        %vm955 = vcmp.eq.s32.totalorder %v821, %v286
        %vm956 = vcmp.eq.s32.totalorder %v824, %v286
        %vm957 = vcmp.eq.s32.totalorder %v827, %v286
        %vm958 = vcmp.eq.s32.totalorder %v830, %v286
        %vm959 = vcmp.eq.s32.totalorder %v833, %v286
        %vm960 = vcmp.eq.s32.totalorder %v836, %v286
        %vm961 = vcmp.eq.s32.totalorder %v839, %v286
        %vm962 = vcmp.eq.s32.totalorder %v842, %v286
        %vm963 = vcmp.eq.s32.totalorder %v845, %v286
        %vm964 = vcmp.eq.s32.totalorder %v848, %v286
        %vm965 = vcmp.eq.s32.totalorder %v851, %v286
        %vm966 = vcmp.eq.s32.totalorder %v854, %v286
        %vm967 = vcmp.eq.s32.totalorder %v857, %v286
        %vm968 = vcmp.eq.s32.totalorder %v860, %v286
        %vm969 = vcmp.eq.s32.totalorder %v863, %v286
        %vm970 = vcmp.eq.s32.totalorder %v866, %v286
        %vm971 = vcmp.eq.s32.totalorder %v869, %v286
        %vm972 = vcmp.eq.s32.totalorder %v872, %v286
        %vm973 = vcmp.eq.s32.totalorder %v875, %v286
        %vm974 = vcmp.eq.s32.totalorder %v878, %v286
        %vm975 = vcmp.eq.s32.totalorder %v881, %v286
        %vm976 = vcmp.eq.s32.totalorder %v884, %v286
        %vm977 = vcmp.eq.s32.totalorder %v887, %v286
        %vm978 = vcmp.eq.s32.totalorder %v890, %v286
        %vm979 = vcmp.eq.s32.totalorder %v893, %v286
        %vm980 = vcmp.eq.s32.totalorder %v896, %v286
        %vm981 = vcmp.eq.s32.totalorder %v899, %v286
        %vm982 = vcmp.eq.s32.totalorder %v902, %v286
        %vm983 = vcmp.eq.s32.totalorder %v905, %v286
        %vm984 = vcmp.eq.s32.totalorder %v908, %v286
        %vm985 = vcmp.eq.s32.totalorder %v911, %v286
        %vm986 = vcmp.eq.s32.totalorder %v914, %v286
        %vm987 = vcmp.eq.s32.totalorder %v917, %v286
        %vm988 = vcmp.eq.s32.totalorder %v920, %v286
        %vm989 = vcmp.eq.s32.totalorder %v923, %v286
        %vm990 = vcmp.eq.s32.totalorder %v926, %v286
        %v991 = vsel %vm927, 1, 0
        %v992 = vsel %vm928, 1, 0
        %v993 = vsel %vm929, 1, 0
        %v994 = vsel %vm930, 1, 0
        %v995 = vsel %vm931, 1, 0
        %v996 = vsel %vm932, 1, 0
        %v997 = vsel %vm933, 1, 0
        %v998 = vsel %vm934, 1, 0
        %v999 = vsel %vm935, 1, 0
        %v1000 = vsel %vm936, 1, 0
        %v1001 = vsel %vm937, 1, 0
        %v1002 = vsel %vm938, 1, 0
        %v1003 = vsel %vm939, 1, 0
        %v1004 = vsel %vm940, 1, 0
        %v1005 = vsel %vm941, 1, 0
        %v1006 = vsel %vm942, 1, 0
        %v1007 = vsel %vm943, 1, 0
        %v1008 = vsel %vm944, 1, 0
        %v1009 = vsel %vm945, 1, 0
        %v1010 = vsel %vm946, 1, 0
        %v1011 = vsel %vm947, 1, 0
        %v1012 = vsel %vm948, 1, 0
        %v1013 = vsel %vm949, 1, 0
        %v1014 = vsel %vm950, 1, 0
        %v1015 = vsel %vm951, 1, 0
        %v1016 = vsel %vm952, 1, 0
        %v1017 = vsel %vm953, 1, 0
        %v1018 = vsel %vm954, 1, 0
        %v1019 = vsel %vm955, 1, 0
        %v1020 = vsel %vm956, 1, 0
        %v1021 = vsel %vm957, 1, 0
        %v1022 = vsel %vm958, 1, 0
        %v1023 = vsel %vm959, 1, 0
        %v1024 = vsel %vm960, 1, 0
        %v1025 = vsel %vm961, 1, 0
        %v1026 = vsel %vm962, 1, 0
        %v1027 = vsel %vm963, 1, 0
        %v1028 = vsel %vm964, 1, 0
        %v1029 = vsel %vm965, 1, 0
        %v1030 = vsel %vm966, 1, 0
        %v1031 = vsel %vm967, 1, 0
        %v1032 = vsel %vm968, 1, 0
        %v1033 = vsel %vm969, 1, 0
        %v1034 = vsel %vm970, 1, 0
        %v1035 = vsel %vm971, 1, 0
        %v1036 = vsel %vm972, 1, 0
        %v1037 = vsel %vm973, 1, 0
        %v1038 = vsel %vm974, 1, 0
        %v1039 = vsel %vm975, 1, 0
        %v1040 = vsel %vm976, 1, 0
        %v1041 = vsel %vm977, 1, 0
        %v1042 = vsel %vm978, 1, 0
        %v1043 = vsel %vm979, 1, 0
        %v1044 = vsel %vm980, 1, 0
        %v1045 = vsel %vm981, 1, 0
        %v1046 = vsel %vm982, 1, 0
        %v1047 = vsel %vm983, 1, 0
        %v1048 = vsel %vm984, 1, 0
        %v1049 = vsel %vm985, 1, 0
        %v1050 = vsel %vm986, 1, 0
        %v1051 = vsel %vm987, 1, 0
        %v1052 = vsel %vm988, 1, 0
        %v1053 = vsel %vm989, 1, 0
        %v1054 = vsel %vm990, 1, 0
        %v1055 = vcvt.s32.f32 %v991
        %v1056 = vcvt.s32.f32 %v992
        %v1057 = vcvt.s32.f32 %v993
        %v1058 = vcvt.s32.f32 %v994
        %v1059 = vcvt.s32.f32 %v995
        %v1060 = vcvt.s32.f32 %v996
        %v1061 = vcvt.s32.f32 %v997
        %v1062 = vcvt.s32.f32 %v998
        %v1063 = vcvt.s32.f32 %v999
        %v1064 = vcvt.s32.f32 %v1000
        %v1065 = vcvt.s32.f32 %v1001
        %v1066 = vcvt.s32.f32 %v1002
        %v1067 = vcvt.s32.f32 %v1003
        %v1068 = vcvt.s32.f32 %v1004
        %v1069 = vcvt.s32.f32 %v1005
        %v1070 = vcvt.s32.f32 %v1006
        %v1071 = vcvt.s32.f32 %v1007
        %v1072 = vcvt.s32.f32 %v1008
        %v1073 = vcvt.s32.f32 %v1009
        %v1074 = vcvt.s32.f32 %v1010
        %v1075 = vcvt.s32.f32 %v1011
        %v1076 = vcvt.s32.f32 %v1012
        %v1077 = vcvt.s32.f32 %v1013
        %v1078 = vcvt.s32.f32 %v1014
        %v1079 = vcvt.s32.f32 %v1015
        %v1080 = vcvt.s32.f32 %v1016
        %v1081 = vcvt.s32.f32 %v1017
        %v1082 = vcvt.s32.f32 %v1018
        %v1083 = vcvt.s32.f32 %v1019
        %v1084 = vcvt.s32.f32 %v1020
        %v1085 = vcvt.s32.f32 %v1021
        %v1086 = vcvt.s32.f32 %v1022
        %v1087 = vcvt.s32.f32 %v1023
        %v1088 = vcvt.s32.f32 %v1024
        %v1089 = vcvt.s32.f32 %v1025
        %v1090 = vcvt.s32.f32 %v1026
        %v1091 = vcvt.s32.f32 %v1027
        %v1092 = vcvt.s32.f32 %v1028
        %v1093 = vcvt.s32.f32 %v1029
        %v1094 = vcvt.s32.f32 %v1030
        %v1095 = vcvt.s32.f32 %v1031
        %v1096 = vcvt.s32.f32 %v1032
        %v1097 = vcvt.s32.f32 %v1033
        %v1098 = vcvt.s32.f32 %v1034
        %v1099 = vcvt.s32.f32 %v1035
        %v1100 = vcvt.s32.f32 %v1036
        %v1101 = vcvt.s32.f32 %v1037
        %v1102 = vcvt.s32.f32 %v1038
        %v1103 = vcvt.s32.f32 %v1039
        %v1104 = vcvt.s32.f32 %v1040
        %v1105 = vcvt.s32.f32 %v1041
        %v1106 = vcvt.s32.f32 %v1042
        %v1107 = vcvt.s32.f32 %v1043
        %v1108 = vcvt.s32.f32 %v1044
        %v1109 = vcvt.s32.f32 %v1045
        %v1110 = vcvt.s32.f32 %v1046
        %v1111 = vcvt.s32.f32 %v1047
        %v1112 = vcvt.s32.f32 %v1048
        %v1113 = vcvt.s32.f32 %v1049
        %v1114 = vcvt.s32.f32 %v1050
        %v1115 = vcvt.s32.f32 %v1051
        %v1116 = vcvt.s32.f32 %v1052
        %v1117 = vcvt.s32.f32 %v1053
        %v1118 = vcvt.s32.f32 %v1054
        %v1119 = vld [vmem:[%s2] sm:$0xff]
        %v1120 = vld [vmem:[%s2 + $0x8] sm:$0xff]
        %v1121 = vld [vmem:[%s2 + $0x10] sm:$0xff]
        %v1122 = vld [vmem:[%s2 + $0x18] sm:$0xff]
        %v1123 = vld [vmem:[%s2 + $0x20] sm:$0xff]
        %v1124 = vld [vmem:[%s2 + $0x28] sm:$0xff]
        %v1125 = vld [vmem:[%s2 + $0x30] sm:$0xff]
        %v1126 = vld [vmem:[%s2 + $0x38] sm:$0xff]
        %vm1127 = vcmask 523264
        %v1129 = vsel %vm1127, %v607, 0
        %v1132 = vsel %vm1127, %v608, 0
        %v1135 = vsel %vm1127, %v609, 0
        %v1138 = vsel %vm1127, %v610, 0
        %v1141 = vsel %vm1127, %v611, 0
        %v1144 = vsel %vm1127, %v612, 0
        %v1147 = vsel %vm1127, %v613, 0
        %v1150 = vsel %vm1127, %v614, 0
        %v1153 = vsel %vm1127, %v615, 0
        %v1156 = vsel %vm1127, %v616, 0
        %v1159 = vsel %vm1127, %v617, 0
        %v1162 = vsel %vm1127, %v618, 0
        %v1165 = vsel %vm1127, %v619, 0
        %v1168 = vsel %vm1127, %v620, 0
        %v1171 = vsel %vm1127, %v621, 0
        %v1174 = vsel %vm1127, %v622, 0
        %v1177 = vsel %vm1127, %v623, 0
        %v1180 = vsel %vm1127, %v624, 0
        %v1183 = vsel %vm1127, %v625, 0
        %v1186 = vsel %vm1127, %v626, 0
        %v1189 = vsel %vm1127, %v627, 0
        %v1192 = vsel %vm1127, %v628, 0
        %v1195 = vsel %vm1127, %v629, 0
        %v1198 = vsel %vm1127, %v630, 0
        %v1201 = vsel %vm1127, %v631, 0
        %v1204 = vsel %vm1127, %v632, 0
        %v1207 = vsel %vm1127, %v633, 0
        %v1210 = vsel %vm1127, %v634, 0
        %v1213 = vsel %vm1127, %v635, 0
        %v1216 = vsel %vm1127, %v636, 0
        %v1219 = vsel %vm1127, %v637, 0
        %v1222 = vsel %vm1127, %v638, 0
        %v1225 = vsel %vm1127, %v639, 0
        %v1228 = vsel %vm1127, %v640, 0
        %v1231 = vsel %vm1127, %v641, 0
        %v1234 = vsel %vm1127, %v642, 0
        %v1237 = vsel %vm1127, %v643, 0
        %v1240 = vsel %vm1127, %v644, 0
        %v1243 = vsel %vm1127, %v645, 0
        %v1246 = vsel %vm1127, %v646, 0
        %v1249 = vsel %vm1127, %v647, 0
        %v1252 = vsel %vm1127, %v648, 0
        %v1255 = vsel %vm1127, %v649, 0
        %v1258 = vsel %vm1127, %v650, 0
        %v1261 = vsel %vm1127, %v651, 0
        %v1264 = vsel %vm1127, %v652, 0
        %v1267 = vsel %vm1127, %v653, 0
        %v1270 = vsel %vm1127, %v654, 0
        %v1273 = vsel %vm1127, %v655, 0
        %v1276 = vsel %vm1127, %v656, 0
        %v1279 = vsel %vm1127, %v657, 0
        %v1282 = vsel %vm1127, %v658, 0
        %v1285 = vsel %vm1127, %v659, 0
        %v1288 = vsel %vm1127, %v660, 0
        %v1291 = vsel %vm1127, %v661, 0
        %v1294 = vsel %vm1127, %v662, 0
        %v1297 = vsel %vm1127, %v663, 0
        %v1300 = vsel %vm1127, %v664, 0
        %v1303 = vsel %vm1127, %v665, 0
        %v1306 = vsel %vm1127, %v666, 0
        %v1309 = vsel %vm1127, %v667, 0
        %v1312 = vsel %vm1127, %v668, 0
        %v1315 = vsel %vm1127, %v669, 0
        %v1318 = vsel %vm1127, %v670, 0
        %1320 = vmatpush.msra.mxu0 0.0
        %1321 = vmatpush.msra.mxu0 0.0
        %1322 = vmatpush.msra.mxu0 0.0
        %1323 = vmatpush.msra.mxu0 0.0
        %1324 = vmatpush.msra.mxu0 0.0
        %1325 = vmatpush.msra.mxu0 0.0
        %1326 = vmatpush.msra.mxu0 0.0
        %1327 = vmatpush.msra.mxu0 0.0
        %1328 = vmatpush.msra.mxu0 %v1126
        %1329 = vmatpush.msra.mxu0 %v1125
        %1330 = vmatpush.msra.mxu0 %v1124
        %1331 = vmatpush.msra.mxu0 %v1123
        %1332 = vmatpush.msra.mxu0 %v1122
        %1333 = vmatpush.msra.mxu0 %v1121
        %1334 = vmatpush.msra.mxu0 %v1120
        %1335 = vmatpush.msra.mxu0 %v1119
        %1336 = vmatmul.f32.gmra.mxu0 %v1129
        %v1337 = vpop.f32.mrf.mxu0
        %v1338 = vadd.f32 0.0, %v1337
        %1339 = vmatmul.f32.gmra.mxu0 %v1132
        %v1340 = vpop.f32.mrf.mxu0
        %v1341 = vadd.f32 0.0, %v1340
        %1342 = vmatmul.f32.gmra.mxu0 %v1135
        %v1343 = vpop.f32.mrf.mxu0
        %v1344 = vadd.f32 0.0, %v1343
        %1345 = vmatmul.f32.gmra.mxu0 %v1138
        %v1346 = vpop.f32.mrf.mxu0
        %v1347 = vadd.f32 0.0, %v1346
        %1348 = vmatmul.f32.gmra.mxu0 %v1141
        %v1349 = vpop.f32.mrf.mxu0
        %v1350 = vadd.f32 0.0, %v1349
        %1351 = vmatmul.f32.gmra.mxu0 %v1144
        %v1352 = vpop.f32.mrf.mxu0
        %v1353 = vadd.f32 0.0, %v1352
        %1354 = vmatmul.f32.gmra.mxu0 %v1147
        %v1355 = vpop.f32.mrf.mxu0
        %v1356 = vadd.f32 0.0, %v1355
        %1357 = vmatmul.f32.gmra.mxu0 %v1150
        %v1358 = vpop.f32.mrf.mxu0
        %v1359 = vadd.f32 0.0, %v1358
        %1360 = vmatmul.f32.gmra.mxu0 %v1153
        %v1361 = vpop.f32.mrf.mxu0
        %v1362 = vadd.f32 0.0, %v1361
        %1363 = vmatmul.f32.gmra.mxu0 %v1156
        %v1364 = vpop.f32.mrf.mxu0
        %v1365 = vadd.f32 0.0, %v1364
        %1366 = vmatmul.f32.gmra.mxu0 %v1159
        %v1367 = vpop.f32.mrf.mxu0
        %v1368 = vadd.f32 0.0, %v1367
        %1369 = vmatmul.f32.gmra.mxu0 %v1162
        %v1370 = vpop.f32.mrf.mxu0
        %v1371 = vadd.f32 0.0, %v1370
        %1372 = vmatmul.f32.gmra.mxu0 %v1165
        %v1373 = vpop.f32.mrf.mxu0
        %v1374 = vadd.f32 0.0, %v1373
        %1375 = vmatmul.f32.gmra.mxu0 %v1168
        %v1376 = vpop.f32.mrf.mxu0
        %v1377 = vadd.f32 0.0, %v1376
        %1378 = vmatmul.f32.gmra.mxu0 %v1171
        %v1379 = vpop.f32.mrf.mxu0
        %v1380 = vadd.f32 0.0, %v1379
        %1381 = vmatmul.f32.gmra.mxu0 %v1174
        %v1382 = vpop.f32.mrf.mxu0
        %v1383 = vadd.f32 0.0, %v1382
        %1384 = vmatmul.f32.gmra.mxu0 %v1177
        %v1385 = vpop.f32.mrf.mxu0
        %v1386 = vadd.f32 0.0, %v1385
        %1387 = vmatmul.f32.gmra.mxu0 %v1180
        %v1388 = vpop.f32.mrf.mxu0
        %v1389 = vadd.f32 0.0, %v1388
        %1390 = vmatmul.f32.gmra.mxu0 %v1183
        %v1391 = vpop.f32.mrf.mxu0
        %v1392 = vadd.f32 0.0, %v1391
        %1393 = vmatmul.f32.gmra.mxu0 %v1186
        %v1394 = vpop.f32.mrf.mxu0
        %v1395 = vadd.f32 0.0, %v1394
        %1396 = vmatmul.f32.gmra.mxu0 %v1189
        %v1397 = vpop.f32.mrf.mxu0
        %v1398 = vadd.f32 0.0, %v1397
        %1399 = vmatmul.f32.gmra.mxu0 %v1192
        %v1400 = vpop.f32.mrf.mxu0
        %v1401 = vadd.f32 0.0, %v1400
        %1402 = vmatmul.f32.gmra.mxu0 %v1195
        %v1403 = vpop.f32.mrf.mxu0
        %v1404 = vadd.f32 0.0, %v1403
        %1405 = vmatmul.f32.gmra.mxu0 %v1198
        %v1406 = vpop.f32.mrf.mxu0
        %v1407 = vadd.f32 0.0, %v1406
        %1408 = vmatmul.f32.gmra.mxu0 %v1201
        %v1409 = vpop.f32.mrf.mxu0
        %v1410 = vadd.f32 0.0, %v1409
        %1411 = vmatmul.f32.gmra.mxu0 %v1204
        %v1412 = vpop.f32.mrf.mxu0
        %v1413 = vadd.f32 0.0, %v1412
        %1414 = vmatmul.f32.gmra.mxu0 %v1207
        %v1415 = vpop.f32.mrf.mxu0
        %v1416 = vadd.f32 0.0, %v1415
        %1417 = vmatmul.f32.gmra.mxu0 %v1210
        %v1418 = vpop.f32.mrf.mxu0
        %v1419 = vadd.f32 0.0, %v1418
        %1420 = vmatmul.f32.gmra.mxu0 %v1213
        %v1421 = vpop.f32.mrf.mxu0
        %v1422 = vadd.f32 0.0, %v1421
        %1423 = vmatmul.f32.gmra.mxu0 %v1216
        %v1424 = vpop.f32.mrf.mxu0
        %v1425 = vadd.f32 0.0, %v1424
        %1426 = vmatmul.f32.gmra.mxu0 %v1219
        %v1427 = vpop.f32.mrf.mxu0
        %v1428 = vadd.f32 0.0, %v1427
        %1429 = vmatmul.f32.gmra.mxu0 %v1222
        %v1430 = vpop.f32.mrf.mxu0
        %v1431 = vadd.f32 0.0, %v1430
        %1432 = vmatmul.f32.gmra.mxu0 %v1225
        %v1433 = vpop.f32.mrf.mxu0
        %v1434 = vadd.f32 0.0, %v1433
        %1435 = vmatmul.f32.gmra.mxu0 %v1228
        %v1436 = vpop.f32.mrf.mxu0
        %v1437 = vadd.f32 0.0, %v1436
        %1438 = vmatmul.f32.gmra.mxu0 %v1231
        %v1439 = vpop.f32.mrf.mxu0
        %v1440 = vadd.f32 0.0, %v1439
        %1441 = vmatmul.f32.gmra.mxu0 %v1234
        %v1442 = vpop.f32.mrf.mxu0
        %v1443 = vadd.f32 0.0, %v1442
        %1444 = vmatmul.f32.gmra.mxu0 %v1237
        %v1445 = vpop.f32.mrf.mxu0
        %v1446 = vadd.f32 0.0, %v1445
        %1447 = vmatmul.f32.gmra.mxu0 %v1240
        %v1448 = vpop.f32.mrf.mxu0
        %v1449 = vadd.f32 0.0, %v1448
        %1450 = vmatmul.f32.gmra.mxu0 %v1243
        %v1451 = vpop.f32.mrf.mxu0
        %v1452 = vadd.f32 0.0, %v1451
        %1453 = vmatmul.f32.gmra.mxu0 %v1246
        %v1454 = vpop.f32.mrf.mxu0
        %v1455 = vadd.f32 0.0, %v1454
        %1456 = vmatmul.f32.gmra.mxu0 %v1249
        %v1457 = vpop.f32.mrf.mxu0
        %v1458 = vadd.f32 0.0, %v1457
        %1459 = vmatmul.f32.gmra.mxu0 %v1252
        %v1460 = vpop.f32.mrf.mxu0
        %v1461 = vadd.f32 0.0, %v1460
        %1462 = vmatmul.f32.gmra.mxu0 %v1255
        %v1463 = vpop.f32.mrf.mxu0
        %v1464 = vadd.f32 0.0, %v1463
        %1465 = vmatmul.f32.gmra.mxu0 %v1258
        %v1466 = vpop.f32.mrf.mxu0
        %v1467 = vadd.f32 0.0, %v1466
        %1468 = vmatmul.f32.gmra.mxu0 %v1261
        %v1469 = vpop.f32.mrf.mxu0
        %v1470 = vadd.f32 0.0, %v1469
        %1471 = vmatmul.f32.gmra.mxu0 %v1264
        %v1472 = vpop.f32.mrf.mxu0
        %v1473 = vadd.f32 0.0, %v1472
        %1474 = vmatmul.f32.gmra.mxu0 %v1267
        %v1475 = vpop.f32.mrf.mxu0
        %v1476 = vadd.f32 0.0, %v1475
        %1477 = vmatmul.f32.gmra.mxu0 %v1270
        %v1478 = vpop.f32.mrf.mxu0
        %v1479 = vadd.f32 0.0, %v1478
        %1480 = vmatmul.f32.gmra.mxu0 %v1273
        %v1481 = vpop.f32.mrf.mxu0
        %v1482 = vadd.f32 0.0, %v1481
        %1483 = vmatmul.f32.gmra.mxu0 %v1276
        %v1484 = vpop.f32.mrf.mxu0
        %v1485 = vadd.f32 0.0, %v1484
        %1486 = vmatmul.f32.gmra.mxu0 %v1279
        %v1487 = vpop.f32.mrf.mxu0
        %v1488 = vadd.f32 0.0, %v1487
        %1489 = vmatmul.f32.gmra.mxu0 %v1282
        %v1490 = vpop.f32.mrf.mxu0
        %v1491 = vadd.f32 0.0, %v1490
        %1492 = vmatmul.f32.gmra.mxu0 %v1285
        %v1493 = vpop.f32.mrf.mxu0
        %v1494 = vadd.f32 0.0, %v1493
        %1495 = vmatmul.f32.gmra.mxu0 %v1288
        %v1496 = vpop.f32.mrf.mxu0
        %v1497 = vadd.f32 0.0, %v1496
        %1498 = vmatmul.f32.gmra.mxu0 %v1291
        %v1499 = vpop.f32.mrf.mxu0
        %v1500 = vadd.f32 0.0, %v1499
        %1501 = vmatmul.f32.gmra.mxu0 %v1294
        %v1502 = vpop.f32.mrf.mxu0
        %v1503 = vadd.f32 0.0, %v1502
        %1504 = vmatmul.f32.gmra.mxu0 %v1297
        %v1505 = vpop.f32.mrf.mxu0
        %v1506 = vadd.f32 0.0, %v1505
        %1507 = vmatmul.f32.gmra.mxu0 %v1300
        %v1508 = vpop.f32.mrf.mxu0
        %v1509 = vadd.f32 0.0, %v1508
        %1510 = vmatmul.f32.gmra.mxu0 %v1303
        %v1511 = vpop.f32.mrf.mxu0
        %v1512 = vadd.f32 0.0, %v1511
        %1513 = vmatmul.f32.gmra.mxu0 %v1306
        %v1514 = vpop.f32.mrf.mxu0
        %v1515 = vadd.f32 0.0, %v1514
        %1516 = vmatmul.f32.gmra.mxu0 %v1309
        %v1517 = vpop.f32.mrf.mxu0
        %v1518 = vadd.f32 0.0, %v1517
        %1519 = vmatmul.f32.gmra.mxu0 %v1312
        %v1520 = vpop.f32.mrf.mxu0
        %v1521 = vadd.f32 0.0, %v1520
        %1522 = vmatmul.f32.gmra.mxu0 %v1315
        %v1523 = vpop.f32.mrf.mxu0
        %v1524 = vadd.f32 0.0, %v1523
        %1525 = vmatmul.f32.gmra.mxu0 %v1318
        %v1526 = vpop.f32.mrf.mxu0
        %v1527 = vadd.f32 0.0, %v1526
        %1528 = vdwg.mxu0
        %v1529 = vld [vmem:[%s3] sm:$0xff]
        %v1530 = vld [vmem:[%s3 + $0x8] sm:$0xff]
        %v1531 = vld [vmem:[%s3 + $0x10] sm:$0xff]
        %v1532 = vld [vmem:[%s3 + $0x18] sm:$0xff]
        %v1533 = vld [vmem:[%s3 + $0x20] sm:$0xff]
        %v1534 = vld [vmem:[%s3 + $0x28] sm:$0xff]
        %v1535 = vld [vmem:[%s3 + $0x30] sm:$0xff]
        %v1536 = vld [vmem:[%s3 + $0x38] sm:$0xff]
        %v1537 = vld [vmem:[%s3 + $0x40] sm:$0xff]
        %v1538 = vld [vmem:[%s3 + $0x48] sm:$0xff]
        %v1539 = vld [vmem:[%s3 + $0x50] sm:$0xff]
        %v1540 = vld [vmem:[%s3 + $0x58] sm:$0xff]
        %v1541 = vld [vmem:[%s3 + $0x60] sm:$0xf]
        %vm1542 = vcmask 818176
        %v1544 = vsel %vm1542, %v1055, 0
        %v1547 = vsel %vm1542, %v1056, 0
        %v1550 = vsel %vm1542, %v1057, 0
        %v1553 = vsel %vm1542, %v1058, 0
        %v1556 = vsel %vm1542, %v1059, 0
        %v1559 = vsel %vm1542, %v1060, 0
        %v1562 = vsel %vm1542, %v1061, 0
        %v1565 = vsel %vm1542, %v1062, 0
        %v1568 = vsel %vm1542, %v1063, 0
        %v1571 = vsel %vm1542, %v1064, 0
        %v1574 = vsel %vm1542, %v1065, 0
        %v1577 = vsel %vm1542, %v1066, 0
        %v1580 = vsel %vm1542, %v1067, 0
        %v1583 = vsel %vm1542, %v1068, 0
        %v1586 = vsel %vm1542, %v1069, 0
        %v1589 = vsel %vm1542, %v1070, 0
        %v1592 = vsel %vm1542, %v1071, 0
        %v1595 = vsel %vm1542, %v1072, 0
        %v1598 = vsel %vm1542, %v1073, 0
        %v1601 = vsel %vm1542, %v1074, 0
        %v1604 = vsel %vm1542, %v1075, 0
        %v1607 = vsel %vm1542, %v1076, 0
        %v1610 = vsel %vm1542, %v1077, 0
        %v1613 = vsel %vm1542, %v1078, 0
        %v1616 = vsel %vm1542, %v1079, 0
        %v1619 = vsel %vm1542, %v1080, 0
        %v1622 = vsel %vm1542, %v1081, 0
        %v1625 = vsel %vm1542, %v1082, 0
        %v1628 = vsel %vm1542, %v1083, 0
        %v1631 = vsel %vm1542, %v1084, 0
        %v1634 = vsel %vm1542, %v1085, 0
        %v1637 = vsel %vm1542, %v1086, 0
        %v1640 = vsel %vm1542, %v1087, 0
        %v1643 = vsel %vm1542, %v1088, 0
        %v1646 = vsel %vm1542, %v1089, 0
        %v1649 = vsel %vm1542, %v1090, 0
        %v1652 = vsel %vm1542, %v1091, 0
        %v1655 = vsel %vm1542, %v1092, 0
        %v1658 = vsel %vm1542, %v1093, 0
        %v1661 = vsel %vm1542, %v1094, 0
        %v1664 = vsel %vm1542, %v1095, 0
        %v1667 = vsel %vm1542, %v1096, 0
        %v1670 = vsel %vm1542, %v1097, 0
        %v1673 = vsel %vm1542, %v1098, 0
        %v1676 = vsel %vm1542, %v1099, 0
        %v1679 = vsel %vm1542, %v1100, 0
        %v1682 = vsel %vm1542, %v1101, 0
        %v1685 = vsel %vm1542, %v1102, 0
        %v1688 = vsel %vm1542, %v1103, 0
        %v1691 = vsel %vm1542, %v1104, 0
        %v1694 = vsel %vm1542, %v1105, 0
        %v1697 = vsel %vm1542, %v1106, 0
        %v1700 = vsel %vm1542, %v1107, 0
        %v1703 = vsel %vm1542, %v1108, 0
        %v1706 = vsel %vm1542, %v1109, 0
        %v1709 = vsel %vm1542, %v1110, 0
        %v1712 = vsel %vm1542, %v1111, 0
        %v1715 = vsel %vm1542, %v1112, 0
        %v1718 = vsel %vm1542, %v1113, 0
        %v1721 = vsel %vm1542, %v1114, 0
        %v1724 = vsel %vm1542, %v1115, 0
        %v1727 = vsel %vm1542, %v1116, 0
        %v1730 = vsel %vm1542, %v1117, 0
        %v1733 = vsel %vm1542, %v1118, 0
        %vm1735 = vcmask 1043456
        %v1737 = vsel %vm1735, %v1541, 0
        %1739 = vmatpush.msra.mxu0 0.0
        %1740 = vmatpush.msra.mxu0 0.0
        %1741 = vmatpush.msra.mxu0 0.0
        %1742 = vmatpush.msra.mxu0 %v1737
        %1743 = vmatpush.msra.mxu0 %v1540
        %1744 = vmatpush.msra.mxu0 %v1539
        %1745 = vmatpush.msra.mxu0 %v1538
        %1746 = vmatpush.msra.mxu0 %v1537
        %1747 = vmatpush.msra.mxu0 %v1536
        %1748 = vmatpush.msra.mxu0 %v1535
        %1749 = vmatpush.msra.mxu0 %v1534
        %1750 = vmatpush.msra.mxu0 %v1533
        %1751 = vmatpush.msra.mxu0 %v1532
        %1752 = vmatpush.msra.mxu0 %v1531
        %1753 = vmatpush.msra.mxu0 %v1530
        %1754 = vmatpush.msra.mxu0 %v1529
        %1755 = vmatmul.f32.gmra.mxu0 %v1544
        %v1756 = vpop.f32.mrf.mxu0
        %v1757 = vadd.f32 0.0, %v1756
        %1758 = vmatmul.f32.gmra.mxu0 %v1547
        %v1759 = vpop.f32.mrf.mxu0
        %v1760 = vadd.f32 0.0, %v1759
        %1761 = vmatmul.f32.gmra.mxu0 %v1550
        %v1762 = vpop.f32.mrf.mxu0
        %v1763 = vadd.f32 0.0, %v1762
        %1764 = vmatmul.f32.gmra.mxu0 %v1553
        %v1765 = vpop.f32.mrf.mxu0
        %v1766 = vadd.f32 0.0, %v1765
        %1767 = vmatmul.f32.gmra.mxu0 %v1556
        %v1768 = vpop.f32.mrf.mxu0
        %v1769 = vadd.f32 0.0, %v1768
        %1770 = vmatmul.f32.gmra.mxu0 %v1559
        %v1771 = vpop.f32.mrf.mxu0
        %v1772 = vadd.f32 0.0, %v1771
        %1773 = vmatmul.f32.gmra.mxu0 %v1562
        %v1774 = vpop.f32.mrf.mxu0
        %v1775 = vadd.f32 0.0, %v1774
        %1776 = vmatmul.f32.gmra.mxu0 %v1565
        %v1777 = vpop.f32.mrf.mxu0
        %v1778 = vadd.f32 0.0, %v1777
        %1779 = vmatmul.f32.gmra.mxu0 %v1568
        %v1780 = vpop.f32.mrf.mxu0
        %v1781 = vadd.f32 0.0, %v1780
        %1782 = vmatmul.f32.gmra.mxu0 %v1571
        %v1783 = vpop.f32.mrf.mxu0
        %v1784 = vadd.f32 0.0, %v1783
        %1785 = vmatmul.f32.gmra.mxu0 %v1574
        %v1786 = vpop.f32.mrf.mxu0
        %v1787 = vadd.f32 0.0, %v1786
        %1788 = vmatmul.f32.gmra.mxu0 %v1577
        %v1789 = vpop.f32.mrf.mxu0
        %v1790 = vadd.f32 0.0, %v1789
        %1791 = vmatmul.f32.gmra.mxu0 %v1580
        %v1792 = vpop.f32.mrf.mxu0
        %v1793 = vadd.f32 0.0, %v1792
        %1794 = vmatmul.f32.gmra.mxu0 %v1583
        %v1795 = vpop.f32.mrf.mxu0
        %v1796 = vadd.f32 0.0, %v1795
        %1797 = vmatmul.f32.gmra.mxu0 %v1586
        %v1798 = vpop.f32.mrf.mxu0
        %v1799 = vadd.f32 0.0, %v1798
        %1800 = vmatmul.f32.gmra.mxu0 %v1589
        %v1801 = vpop.f32.mrf.mxu0
        %v1802 = vadd.f32 0.0, %v1801
        %1803 = vmatmul.f32.gmra.mxu0 %v1592
        %v1804 = vpop.f32.mrf.mxu0
        %v1805 = vadd.f32 0.0, %v1804
        %1806 = vmatmul.f32.gmra.mxu0 %v1595
        %v1807 = vpop.f32.mrf.mxu0
        %v1808 = vadd.f32 0.0, %v1807
        %1809 = vmatmul.f32.gmra.mxu0 %v1598
        %v1810 = vpop.f32.mrf.mxu0
        %v1811 = vadd.f32 0.0, %v1810
        %1812 = vmatmul.f32.gmra.mxu0 %v1601
        %v1813 = vpop.f32.mrf.mxu0
        %v1814 = vadd.f32 0.0, %v1813
        %1815 = vmatmul.f32.gmra.mxu0 %v1604
        %v1816 = vpop.f32.mrf.mxu0
        %v1817 = vadd.f32 0.0, %v1816
        %1818 = vmatmul.f32.gmra.mxu0 %v1607
        %v1819 = vpop.f32.mrf.mxu0
        %v1820 = vadd.f32 0.0, %v1819
        %1821 = vmatmul.f32.gmra.mxu0 %v1610
        %v1822 = vpop.f32.mrf.mxu0
        %v1823 = vadd.f32 0.0, %v1822
        %1824 = vmatmul.f32.gmra.mxu0 %v1613
        %v1825 = vpop.f32.mrf.mxu0
        %v1826 = vadd.f32 0.0, %v1825
        %1827 = vmatmul.f32.gmra.mxu0 %v1616
        %v1828 = vpop.f32.mrf.mxu0
        %v1829 = vadd.f32 0.0, %v1828
        %1830 = vmatmul.f32.gmra.mxu0 %v1619
        %v1831 = vpop.f32.mrf.mxu0
        %v1832 = vadd.f32 0.0, %v1831
        %1833 = vmatmul.f32.gmra.mxu0 %v1622
        %v1834 = vpop.f32.mrf.mxu0
        %v1835 = vadd.f32 0.0, %v1834
        %1836 = vmatmul.f32.gmra.mxu0 %v1625
        %v1837 = vpop.f32.mrf.mxu0
        %v1838 = vadd.f32 0.0, %v1837
        %1839 = vmatmul.f32.gmra.mxu0 %v1628
        %v1840 = vpop.f32.mrf.mxu0
        %v1841 = vadd.f32 0.0, %v1840
        %1842 = vmatmul.f32.gmra.mxu0 %v1631
        %v1843 = vpop.f32.mrf.mxu0
        %v1844 = vadd.f32 0.0, %v1843
        %1845 = vmatmul.f32.gmra.mxu0 %v1634
        %v1846 = vpop.f32.mrf.mxu0
        %v1847 = vadd.f32 0.0, %v1846
        %1848 = vmatmul.f32.gmra.mxu0 %v1637
        %v1849 = vpop.f32.mrf.mxu0
        %v1850 = vadd.f32 0.0, %v1849
        %1851 = vmatmul.f32.gmra.mxu0 %v1640
        %v1852 = vpop.f32.mrf.mxu0
        %v1853 = vadd.f32 0.0, %v1852
        %1854 = vmatmul.f32.gmra.mxu0 %v1643
        %v1855 = vpop.f32.mrf.mxu0
        %v1856 = vadd.f32 0.0, %v1855
        %1857 = vmatmul.f32.gmra.mxu0 %v1646
        %v1858 = vpop.f32.mrf.mxu0
        %v1859 = vadd.f32 0.0, %v1858
        %1860 = vmatmul.f32.gmra.mxu0 %v1649
        %v1861 = vpop.f32.mrf.mxu0
        %v1862 = vadd.f32 0.0, %v1861
        %1863 = vmatmul.f32.gmra.mxu0 %v1652
        %v1864 = vpop.f32.mrf.mxu0
        %v1865 = vadd.f32 0.0, %v1864
        %1866 = vmatmul.f32.gmra.mxu0 %v1655
        %v1867 = vpop.f32.mrf.mxu0
        %v1868 = vadd.f32 0.0, %v1867
        %1869 = vmatmul.f32.gmra.mxu0 %v1658
        %v1870 = vpop.f32.mrf.mxu0
        %v1871 = vadd.f32 0.0, %v1870
        %1872 = vmatmul.f32.gmra.mxu0 %v1661
        %v1873 = vpop.f32.mrf.mxu0
        %v1874 = vadd.f32 0.0, %v1873
        %1875 = vmatmul.f32.gmra.mxu0 %v1664
        %v1876 = vpop.f32.mrf.mxu0
        %v1877 = vadd.f32 0.0, %v1876
        %1878 = vmatmul.f32.gmra.mxu0 %v1667
        %v1879 = vpop.f32.mrf.mxu0
        %v1880 = vadd.f32 0.0, %v1879
        %1881 = vmatmul.f32.gmra.mxu0 %v1670
        %v1882 = vpop.f32.mrf.mxu0
        %v1883 = vadd.f32 0.0, %v1882
        %1884 = vmatmul.f32.gmra.mxu0 %v1673
        %v1885 = vpop.f32.mrf.mxu0
        %v1886 = vadd.f32 0.0, %v1885
        %1887 = vmatmul.f32.gmra.mxu0 %v1676
        %v1888 = vpop.f32.mrf.mxu0
        %v1889 = vadd.f32 0.0, %v1888
        %1890 = vmatmul.f32.gmra.mxu0 %v1679
        %v1891 = vpop.f32.mrf.mxu0
        %v1892 = vadd.f32 0.0, %v1891
        %1893 = vmatmul.f32.gmra.mxu0 %v1682
        %v1894 = vpop.f32.mrf.mxu0
        %v1895 = vadd.f32 0.0, %v1894
        %1896 = vmatmul.f32.gmra.mxu0 %v1685
        %v1897 = vpop.f32.mrf.mxu0
        %v1898 = vadd.f32 0.0, %v1897
        %1899 = vmatmul.f32.gmra.mxu0 %v1688
        %v1900 = vpop.f32.mrf.mxu0
        %v1901 = vadd.f32 0.0, %v1900
        %1902 = vmatmul.f32.gmra.mxu0 %v1691
        %v1903 = vpop.f32.mrf.mxu0
        %v1904 = vadd.f32 0.0, %v1903
        %1905 = vmatmul.f32.gmra.mxu0 %v1694
        %v1906 = vpop.f32.mrf.mxu0
        %v1907 = vadd.f32 0.0, %v1906
        %1908 = vmatmul.f32.gmra.mxu0 %v1697
        %v1909 = vpop.f32.mrf.mxu0
        %v1910 = vadd.f32 0.0, %v1909
        %1911 = vmatmul.f32.gmra.mxu0 %v1700
        %v1912 = vpop.f32.mrf.mxu0
        %v1913 = vadd.f32 0.0, %v1912
        %1914 = vmatmul.f32.gmra.mxu0 %v1703
        %v1915 = vpop.f32.mrf.mxu0
        %v1916 = vadd.f32 0.0, %v1915
        %1917 = vmatmul.f32.gmra.mxu0 %v1706
        %v1918 = vpop.f32.mrf.mxu0
        %v1919 = vadd.f32 0.0, %v1918
        %1920 = vmatmul.f32.gmra.mxu0 %v1709
        %v1921 = vpop.f32.mrf.mxu0
        %v1922 = vadd.f32 0.0, %v1921
        %1923 = vmatmul.f32.gmra.mxu0 %v1712
        %v1924 = vpop.f32.mrf.mxu0
        %v1925 = vadd.f32 0.0, %v1924
        %1926 = vmatmul.f32.gmra.mxu0 %v1715
        %v1927 = vpop.f32.mrf.mxu0
        %v1928 = vadd.f32 0.0, %v1927
        %1929 = vmatmul.f32.gmra.mxu0 %v1718
        %v1930 = vpop.f32.mrf.mxu0
        %v1931 = vadd.f32 0.0, %v1930
        %1932 = vmatmul.f32.gmra.mxu0 %v1721
        %v1933 = vpop.f32.mrf.mxu0
        %v1934 = vadd.f32 0.0, %v1933
        %1935 = vmatmul.f32.gmra.mxu0 %v1724
        %v1936 = vpop.f32.mrf.mxu0
        %v1937 = vadd.f32 0.0, %v1936
        %1938 = vmatmul.f32.gmra.mxu0 %v1727
        %v1939 = vpop.f32.mrf.mxu0
        %v1940 = vadd.f32 0.0, %v1939
        %1941 = vmatmul.f32.gmra.mxu0 %v1730
        %v1942 = vpop.f32.mrf.mxu0
        %v1943 = vadd.f32 0.0, %v1942
        %1944 = vmatmul.f32.gmra.mxu0 %v1733
        %v1945 = vpop.f32.mrf.mxu0
        %v1946 = vadd.f32 0.0, %v1945
        %1947 = vdwg.mxu0
        %v1948 = vmul.f32 %v1338, %v1757
        %v1949 = vmul.f32 %v1341, %v1760
        %v1950 = vmul.f32 %v1344, %v1763
        %v1951 = vmul.f32 %v1347, %v1766
        %v1952 = vmul.f32 %v1350, %v1769
        %v1953 = vmul.f32 %v1353, %v1772
        %v1954 = vmul.f32 %v1356, %v1775
        %v1955 = vmul.f32 %v1359, %v1778
        %v1956 = vmul.f32 %v1362, %v1781
        %v1957 = vmul.f32 %v1365, %v1784
        %v1958 = vmul.f32 %v1368, %v1787
        %v1959 = vmul.f32 %v1371, %v1790
        %v1960 = vmul.f32 %v1374, %v1793
        %v1961 = vmul.f32 %v1377, %v1796
        %v1962 = vmul.f32 %v1380, %v1799
        %v1963 = vmul.f32 %v1383, %v1802
        %v1964 = vmul.f32 %v1386, %v1805
        %v1965 = vmul.f32 %v1389, %v1808
        %v1966 = vmul.f32 %v1392, %v1811
        %v1967 = vmul.f32 %v1395, %v1814
        %v1968 = vmul.f32 %v1398, %v1817
        %v1969 = vmul.f32 %v1401, %v1820
        %v1970 = vmul.f32 %v1404, %v1823
        %v1971 = vmul.f32 %v1407, %v1826
        %v1972 = vmul.f32 %v1410, %v1829
        %v1973 = vmul.f32 %v1413, %v1832
        %v1974 = vmul.f32 %v1416, %v1835
        %v1975 = vmul.f32 %v1419, %v1838
        %v1976 = vmul.f32 %v1422, %v1841
        %v1977 = vmul.f32 %v1425, %v1844
        %v1978 = vmul.f32 %v1428, %v1847
        %v1979 = vmul.f32 %v1431, %v1850
        %v1980 = vmul.f32 %v1434, %v1853
        %v1981 = vmul.f32 %v1437, %v1856
        %v1982 = vmul.f32 %v1440, %v1859
        %v1983 = vmul.f32 %v1443, %v1862
        %v1984 = vmul.f32 %v1446, %v1865
        %v1985 = vmul.f32 %v1449, %v1868
        %v1986 = vmul.f32 %v1452, %v1871
        %v1987 = vmul.f32 %v1455, %v1874
        %v1988 = vmul.f32 %v1458, %v1877
        %v1989 = vmul.f32 %v1461, %v1880
        %v1990 = vmul.f32 %v1464, %v1883
        %v1991 = vmul.f32 %v1467, %v1886
        %v1992 = vmul.f32 %v1470, %v1889
        %v1993 = vmul.f32 %v1473, %v1892
        %v1994 = vmul.f32 %v1476, %v1895
        %v1995 = vmul.f32 %v1479, %v1898
        %v1996 = vmul.f32 %v1482, %v1901
        %v1997 = vmul.f32 %v1485, %v1904
        %v1998 = vmul.f32 %v1488, %v1907
        %v1999 = vmul.f32 %v1491, %v1910
        %v2000 = vmul.f32 %v1494, %v1913
        %v2001 = vmul.f32 %v1497, %v1916
        %v2002 = vmul.f32 %v1500, %v1919
        %v2003 = vmul.f32 %v1503, %v1922
        %v2004 = vmul.f32 %v1506, %v1925
        %v2005 = vmul.f32 %v1509, %v1928
        %v2006 = vmul.f32 %v1512, %v1931
        %v2007 = vmul.f32 %v1515, %v1934
        %v2008 = vmul.f32 %v1518, %v1937
        %v2009 = vmul.f32 %v1521, %v1940
        %v2010 = vmul.f32 %v1524, %v1943
        %v2011 = vmul.f32 %v1527, %v1946
        %2012 = vadd.xlane.f32.xlu0 %v1948
        %v2013 = vpop.xlane.xlu0 %2012
        %2014 = vadd.xlane.f32.xlu0 %v1949
        %v2015 = vpop.xlane.xlu0 %2014
        %2016 = vadd.xlane.f32.xlu0 %v1950
        %v2017 = vpop.xlane.xlu0 %2016
        %2018 = vadd.xlane.f32.xlu0 %v1951
        %v2019 = vpop.xlane.xlu0 %2018
        %2020 = vadd.xlane.f32.xlu0 %v1952
        %v2021 = vpop.xlane.xlu0 %2020
        %2022 = vadd.xlane.f32.xlu0 %v1953
        %v2023 = vpop.xlane.xlu0 %2022
        %2024 = vadd.xlane.f32.xlu0 %v1954
        %v2025 = vpop.xlane.xlu0 %2024
        %2026 = vadd.xlane.f32.xlu0 %v1955
        %v2027 = vpop.xlane.xlu0 %2026
        %2028 = vadd.xlane.f32.xlu0 %v1956
        %v2029 = vpop.xlane.xlu0 %2028
        %2030 = vadd.xlane.f32.xlu0 %v1957
        %v2031 = vpop.xlane.xlu0 %2030
        %2032 = vadd.xlane.f32.xlu0 %v1958
        %v2033 = vpop.xlane.xlu0 %2032
        %2034 = vadd.xlane.f32.xlu0 %v1959
        %v2035 = vpop.xlane.xlu0 %2034
        %2036 = vadd.xlane.f32.xlu0 %v1960
        %v2037 = vpop.xlane.xlu0 %2036
        %2038 = vadd.xlane.f32.xlu0 %v1961
        %v2039 = vpop.xlane.xlu0 %2038
        %2040 = vadd.xlane.f32.xlu0 %v1962
        %v2041 = vpop.xlane.xlu0 %2040
        %2042 = vadd.xlane.f32.xlu0 %v1963
        %v2043 = vpop.xlane.xlu0 %2042
        %2044 = vadd.xlane.f32.xlu0 %v1964
        %v2045 = vpop.xlane.xlu0 %2044
        %2046 = vadd.xlane.f32.xlu0 %v1965
        %v2047 = vpop.xlane.xlu0 %2046
        %2048 = vadd.xlane.f32.xlu0 %v1966
        %v2049 = vpop.xlane.xlu0 %2048
        %2050 = vadd.xlane.f32.xlu0 %v1967
        %v2051 = vpop.xlane.xlu0 %2050
        %2052 = vadd.xlane.f32.xlu0 %v1968
        %v2053 = vpop.xlane.xlu0 %2052
        %2054 = vadd.xlane.f32.xlu0 %v1969
        %v2055 = vpop.xlane.xlu0 %2054
        %2056 = vadd.xlane.f32.xlu0 %v1970
        %v2057 = vpop.xlane.xlu0 %2056
        %2058 = vadd.xlane.f32.xlu0 %v1971
        %v2059 = vpop.xlane.xlu0 %2058
        %2060 = vadd.xlane.f32.xlu0 %v1972
        %v2061 = vpop.xlane.xlu0 %2060
        %2062 = vadd.xlane.f32.xlu0 %v1973
        %v2063 = vpop.xlane.xlu0 %2062
        %2064 = vadd.xlane.f32.xlu0 %v1974
        %v2065 = vpop.xlane.xlu0 %2064
        %2066 = vadd.xlane.f32.xlu0 %v1975
        %v2067 = vpop.xlane.xlu0 %2066
        %2068 = vadd.xlane.f32.xlu0 %v1976
        %v2069 = vpop.xlane.xlu0 %2068
        %2070 = vadd.xlane.f32.xlu0 %v1977
        %v2071 = vpop.xlane.xlu0 %2070
        %2072 = vadd.xlane.f32.xlu0 %v1978
        %v2073 = vpop.xlane.xlu0 %2072
        %2074 = vadd.xlane.f32.xlu0 %v1979
        %v2075 = vpop.xlane.xlu0 %2074
        %2076 = vadd.xlane.f32.xlu0 %v1980
        %v2077 = vpop.xlane.xlu0 %2076
        %2078 = vadd.xlane.f32.xlu0 %v1981
        %v2079 = vpop.xlane.xlu0 %2078
        %2080 = vadd.xlane.f32.xlu0 %v1982
        %v2081 = vpop.xlane.xlu0 %2080
        %2082 = vadd.xlane.f32.xlu0 %v1983
        %v2083 = vpop.xlane.xlu0 %2082
        %2084 = vadd.xlane.f32.xlu0 %v1984
        %v2085 = vpop.xlane.xlu0 %2084
        %2086 = vadd.xlane.f32.xlu0 %v1985
        %v2087 = vpop.xlane.xlu0 %2086
        %2088 = vadd.xlane.f32.xlu0 %v1986
        %v2089 = vpop.xlane.xlu0 %2088
        %2090 = vadd.xlane.f32.xlu0 %v1987
        %v2091 = vpop.xlane.xlu0 %2090
        %2092 = vadd.xlane.f32.xlu0 %v1988
        %v2093 = vpop.xlane.xlu0 %2092
        %2094 = vadd.xlane.f32.xlu0 %v1989
        %v2095 = vpop.xlane.xlu0 %2094
        %2096 = vadd.xlane.f32.xlu0 %v1990
        %v2097 = vpop.xlane.xlu0 %2096
        %2098 = vadd.xlane.f32.xlu0 %v1991
        %v2099 = vpop.xlane.xlu0 %2098
        %2100 = vadd.xlane.f32.xlu0 %v1992
        %v2101 = vpop.xlane.xlu0 %2100
        %2102 = vadd.xlane.f32.xlu0 %v1993
        %v2103 = vpop.xlane.xlu0 %2102
        %2104 = vadd.xlane.f32.xlu0 %v1994
        %v2105 = vpop.xlane.xlu0 %2104
        %2106 = vadd.xlane.f32.xlu0 %v1995
        %v2107 = vpop.xlane.xlu0 %2106
        %2108 = vadd.xlane.f32.xlu0 %v1996
        %v2109 = vpop.xlane.xlu0 %2108
        %2110 = vadd.xlane.f32.xlu0 %v1997
        %v2111 = vpop.xlane.xlu0 %2110
        %2112 = vadd.xlane.f32.xlu0 %v1998
        %v2113 = vpop.xlane.xlu0 %2112
        %2114 = vadd.xlane.f32.xlu0 %v1999
        %v2115 = vpop.xlane.xlu0 %2114
        %2116 = vadd.xlane.f32.xlu0 %v2000
        %v2117 = vpop.xlane.xlu0 %2116
        %2118 = vadd.xlane.f32.xlu0 %v2001
        %v2119 = vpop.xlane.xlu0 %2118
        %2120 = vadd.xlane.f32.xlu0 %v2002
        %v2121 = vpop.xlane.xlu0 %2120
        %2122 = vadd.xlane.f32.xlu0 %v2003
        %v2123 = vpop.xlane.xlu0 %2122
        %2124 = vadd.xlane.f32.xlu0 %v2004
        %v2125 = vpop.xlane.xlu0 %2124
        %2126 = vadd.xlane.f32.xlu0 %v2005
        %v2127 = vpop.xlane.xlu0 %2126
        %2128 = vadd.xlane.f32.xlu0 %v2006
        %v2129 = vpop.xlane.xlu0 %2128
        %2130 = vadd.xlane.f32.xlu0 %v2007
        %v2131 = vpop.xlane.xlu0 %2130
        %2132 = vadd.xlane.f32.xlu0 %v2008
        %v2133 = vpop.xlane.xlu0 %2132
        %2134 = vadd.xlane.f32.xlu0 %v2009
        %v2135 = vpop.xlane.xlu0 %2134
        %2136 = vadd.xlane.f32.xlu0 %v2010
        %v2137 = vpop.xlane.xlu0 %2136
        %2138 = vadd.xlane.f32.xlu0 %v2011
        %v2139 = vpop.xlane.xlu0 %2138
        %v2204 = vperm.slane %v2013, 0
        %v2205 = vperm.slane %v2013, 1
        %v2206 = vperm.slane %v2013, 2
        %v2207 = vperm.slane %v2013, 3
        %v2208 = vperm.slane %v2013, 4
        %v2209 = vperm.slane %v2013, 5
        %v2210 = vperm.slane %v2013, 6
        %v2211 = vperm.slane %v2013, 7
        %v2212 = vperm.slane %v2015, 0
        %v2213 = vperm.slane %v2015, 1
        %v2214 = vperm.slane %v2015, 2
        %v2215 = vperm.slane %v2015, 3
        %v2216 = vperm.slane %v2015, 4
        %v2217 = vperm.slane %v2015, 5
        %v2218 = vperm.slane %v2015, 6
        %v2219 = vperm.slane %v2015, 7
        %v2220 = vperm.slane %v2017, 0
        %v2221 = vperm.slane %v2017, 1
        %v2222 = vperm.slane %v2017, 2
        %v2223 = vperm.slane %v2017, 3
        %v2224 = vperm.slane %v2017, 4
        %v2225 = vperm.slane %v2017, 5
        %v2226 = vperm.slane %v2017, 6
        %v2227 = vperm.slane %v2017, 7
        %v2228 = vperm.slane %v2019, 0
        %v2229 = vperm.slane %v2019, 1
        %v2230 = vperm.slane %v2019, 2
        %v2231 = vperm.slane %v2019, 3
        %v2232 = vperm.slane %v2019, 4
        %v2233 = vperm.slane %v2019, 5
        %v2234 = vperm.slane %v2019, 6
        %v2235 = vperm.slane %v2019, 7
        %v2236 = vperm.slane %v2021, 0
        %v2237 = vperm.slane %v2021, 1
        %v2238 = vperm.slane %v2021, 2
        %v2239 = vperm.slane %v2021, 3
        %v2240 = vperm.slane %v2021, 4
        %v2241 = vperm.slane %v2021, 5
        %v2242 = vperm.slane %v2021, 6
        %v2243 = vperm.slane %v2021, 7
        %v2244 = vperm.slane %v2023, 0
        %v2245 = vperm.slane %v2023, 1
        %v2246 = vperm.slane %v2023, 2
        %v2247 = vperm.slane %v2023, 3
        %v2248 = vperm.slane %v2023, 4
        %v2249 = vperm.slane %v2023, 5
        %v2250 = vperm.slane %v2023, 6
        %v2251 = vperm.slane %v2023, 7
        %v2252 = vperm.slane %v2025, 0
        %v2253 = vperm.slane %v2025, 1
        %v2254 = vperm.slane %v2025, 2
        %v2255 = vperm.slane %v2025, 3
        %v2256 = vperm.slane %v2025, 4
        %v2257 = vperm.slane %v2025, 5
        %v2258 = vperm.slane %v2025, 6
        %v2259 = vperm.slane %v2025, 7
        %v2260 = vperm.slane %v2027, 0
        %v2261 = vperm.slane %v2027, 1
        %v2262 = vperm.slane %v2027, 2
        %v2263 = vperm.slane %v2027, 3
        %v2264 = vperm.slane %v2027, 4
        %v2265 = vperm.slane %v2027, 5
        %v2266 = vperm.slane %v2027, 6
        %v2267 = vperm.slane %v2027, 7
        %v2268 = vperm.slane %v2029, 0
        %v2269 = vperm.slane %v2029, 1
        %v2270 = vperm.slane %v2029, 2
        %v2271 = vperm.slane %v2029, 3
        %v2272 = vperm.slane %v2029, 4
        %v2273 = vperm.slane %v2029, 5
        %v2274 = vperm.slane %v2029, 6
        %v2275 = vperm.slane %v2029, 7
        %v2276 = vperm.slane %v2031, 0
        %v2277 = vperm.slane %v2031, 1
        %v2278 = vperm.slane %v2031, 2
        %v2279 = vperm.slane %v2031, 3
        %v2280 = vperm.slane %v2031, 4
        %v2281 = vperm.slane %v2031, 5
        %v2282 = vperm.slane %v2031, 6
        %v2283 = vperm.slane %v2031, 7
        %v2284 = vperm.slane %v2033, 0
        %v2285 = vperm.slane %v2033, 1
        %v2286 = vperm.slane %v2033, 2
        %v2287 = vperm.slane %v2033, 3
        %v2288 = vperm.slane %v2033, 4
        %v2289 = vperm.slane %v2033, 5
        %v2290 = vperm.slane %v2033, 6
        %v2291 = vperm.slane %v2033, 7
        %v2292 = vperm.slane %v2035, 0
        %v2293 = vperm.slane %v2035, 1
        %v2294 = vperm.slane %v2035, 2
        %v2295 = vperm.slane %v2035, 3
        %v2296 = vperm.slane %v2035, 4
        %v2297 = vperm.slane %v2035, 5
        %v2298 = vperm.slane %v2035, 6
        %v2299 = vperm.slane %v2035, 7
        %v2300 = vperm.slane %v2037, 0
        %v2301 = vperm.slane %v2037, 1
        %v2302 = vperm.slane %v2037, 2
        %v2303 = vperm.slane %v2037, 3
        %v2304 = vperm.slane %v2037, 4
        %v2305 = vperm.slane %v2037, 5
        %v2306 = vperm.slane %v2037, 6
        %v2307 = vperm.slane %v2037, 7
        %v2308 = vperm.slane %v2039, 0
        %v2309 = vperm.slane %v2039, 1
        %v2310 = vperm.slane %v2039, 2
        %v2311 = vperm.slane %v2039, 3
        %v2312 = vperm.slane %v2039, 4
        %v2313 = vperm.slane %v2039, 5
        %v2314 = vperm.slane %v2039, 6
        %v2315 = vperm.slane %v2039, 7
        %v2316 = vperm.slane %v2041, 0
        %v2317 = vperm.slane %v2041, 1
        %v2318 = vperm.slane %v2041, 2
        %v2319 = vperm.slane %v2041, 3
        %v2320 = vperm.slane %v2041, 4
        %v2321 = vperm.slane %v2041, 5
        %v2322 = vperm.slane %v2041, 6
        %v2323 = vperm.slane %v2041, 7
        %v2324 = vperm.slane %v2043, 0
        %v2325 = vperm.slane %v2043, 1
        %v2326 = vperm.slane %v2043, 2
        %v2327 = vperm.slane %v2043, 3
        %v2328 = vperm.slane %v2043, 4
        %v2329 = vperm.slane %v2043, 5
        %v2330 = vperm.slane %v2043, 6
        %v2331 = vperm.slane %v2043, 7
        %v2332 = vperm.slane %v2045, 0
        %v2333 = vperm.slane %v2045, 1
        %v2334 = vperm.slane %v2045, 2
        %v2335 = vperm.slane %v2045, 3
        %v2336 = vperm.slane %v2045, 4
        %v2337 = vperm.slane %v2045, 5
        %v2338 = vperm.slane %v2045, 6
        %v2339 = vperm.slane %v2045, 7
        %v2340 = vperm.slane %v2047, 0
        %v2341 = vperm.slane %v2047, 1
        %v2342 = vperm.slane %v2047, 2
        %v2343 = vperm.slane %v2047, 3
        %v2344 = vperm.slane %v2047, 4
        %v2345 = vperm.slane %v2047, 5
        %v2346 = vperm.slane %v2047, 6
        %v2347 = vperm.slane %v2047, 7
        %v2348 = vperm.slane %v2049, 0
        %v2349 = vperm.slane %v2049, 1
        %v2350 = vperm.slane %v2049, 2
        %v2351 = vperm.slane %v2049, 3
        %v2352 = vperm.slane %v2049, 4
        %v2353 = vperm.slane %v2049, 5
        %v2354 = vperm.slane %v2049, 6
        %v2355 = vperm.slane %v2049, 7
        %v2356 = vperm.slane %v2051, 0
        %v2357 = vperm.slane %v2051, 1
        %v2358 = vperm.slane %v2051, 2
        %v2359 = vperm.slane %v2051, 3
        %v2360 = vperm.slane %v2051, 4
        %v2361 = vperm.slane %v2051, 5
        %v2362 = vperm.slane %v2051, 6
        %v2363 = vperm.slane %v2051, 7
        %v2364 = vperm.slane %v2053, 0
        %v2365 = vperm.slane %v2053, 1
        %v2366 = vperm.slane %v2053, 2
        %v2367 = vperm.slane %v2053, 3
        %v2368 = vperm.slane %v2053, 4
        %v2369 = vperm.slane %v2053, 5
        %v2370 = vperm.slane %v2053, 6
        %v2371 = vperm.slane %v2053, 7
        %v2372 = vperm.slane %v2055, 0
        %v2373 = vperm.slane %v2055, 1
        %v2374 = vperm.slane %v2055, 2
        %v2375 = vperm.slane %v2055, 3
        %v2376 = vperm.slane %v2055, 4
        %v2377 = vperm.slane %v2055, 5
        %v2378 = vperm.slane %v2055, 6
        %v2379 = vperm.slane %v2055, 7
        %v2380 = vperm.slane %v2057, 0
        %v2381 = vperm.slane %v2057, 1
        %v2382 = vperm.slane %v2057, 2
        %v2383 = vperm.slane %v2057, 3
        %v2384 = vperm.slane %v2057, 4
        %v2385 = vperm.slane %v2057, 5
        %v2386 = vperm.slane %v2057, 6
        %v2387 = vperm.slane %v2057, 7
        %v2388 = vperm.slane %v2059, 0
        %v2389 = vperm.slane %v2059, 1
        %v2390 = vperm.slane %v2059, 2
        %v2391 = vperm.slane %v2059, 3
        %v2392 = vperm.slane %v2059, 4
        %v2393 = vperm.slane %v2059, 5
        %v2394 = vperm.slane %v2059, 6
        %v2395 = vperm.slane %v2059, 7
        %v2396 = vperm.slane %v2061, 0
        %v2397 = vperm.slane %v2061, 1
        %v2398 = vperm.slane %v2061, 2
        %v2399 = vperm.slane %v2061, 3
        %v2400 = vperm.slane %v2061, 4
        %v2401 = vperm.slane %v2061, 5
        %v2402 = vperm.slane %v2061, 6
        %v2403 = vperm.slane %v2061, 7
        %v2404 = vperm.slane %v2063, 0
        %v2405 = vperm.slane %v2063, 1
        %v2406 = vperm.slane %v2063, 2
        %v2407 = vperm.slane %v2063, 3
        %v2408 = vperm.slane %v2063, 4
        %v2409 = vperm.slane %v2063, 5
        %v2410 = vperm.slane %v2063, 6
        %v2411 = vperm.slane %v2063, 7
        %v2412 = vperm.slane %v2065, 0
        %v2413 = vperm.slane %v2065, 1
        %v2414 = vperm.slane %v2065, 2
        %v2415 = vperm.slane %v2065, 3
        %v2416 = vperm.slane %v2065, 4
        %v2417 = vperm.slane %v2065, 5
        %v2418 = vperm.slane %v2065, 6
        %v2419 = vperm.slane %v2065, 7
        %v2420 = vperm.slane %v2067, 0
        %v2421 = vperm.slane %v2067, 1
        %v2422 = vperm.slane %v2067, 2
        %v2423 = vperm.slane %v2067, 3
        %v2424 = vperm.slane %v2067, 4
        %v2425 = vperm.slane %v2067, 5
        %v2426 = vperm.slane %v2067, 6
        %v2427 = vperm.slane %v2067, 7
        %v2428 = vperm.slane %v2069, 0
        %v2429 = vperm.slane %v2069, 1
        %v2430 = vperm.slane %v2069, 2
        %v2431 = vperm.slane %v2069, 3
        %v2432 = vperm.slane %v2069, 4
        %v2433 = vperm.slane %v2069, 5
        %v2434 = vperm.slane %v2069, 6
        %v2435 = vperm.slane %v2069, 7
        %v2436 = vperm.slane %v2071, 0
        %v2437 = vperm.slane %v2071, 1
        %v2438 = vperm.slane %v2071, 2
        %v2439 = vperm.slane %v2071, 3
        %v2440 = vperm.slane %v2071, 4
        %v2441 = vperm.slane %v2071, 5
        %v2442 = vperm.slane %v2071, 6
        %v2443 = vperm.slane %v2071, 7
        %v2444 = vperm.slane %v2073, 0
        %v2445 = vperm.slane %v2073, 1
        %v2446 = vperm.slane %v2073, 2
        %v2447 = vperm.slane %v2073, 3
        %v2448 = vperm.slane %v2073, 4
        %v2449 = vperm.slane %v2073, 5
        %v2450 = vperm.slane %v2073, 6
        %v2451 = vperm.slane %v2073, 7
        %v2452 = vperm.slane %v2075, 0
        %v2453 = vperm.slane %v2075, 1
        %v2454 = vperm.slane %v2075, 2
        %v2455 = vperm.slane %v2075, 3
        %v2456 = vperm.slane %v2075, 4
        %v2457 = vperm.slane %v2075, 5
        %v2458 = vperm.slane %v2075, 6
        %v2459 = vperm.slane %v2075, 7
        %v2460 = vperm.slane %v2077, 0
        %v2461 = vperm.slane %v2077, 1
        %v2462 = vperm.slane %v2077, 2
        %v2463 = vperm.slane %v2077, 3
        %v2464 = vperm.slane %v2077, 4
        %v2465 = vperm.slane %v2077, 5
        %v2466 = vperm.slane %v2077, 6
        %v2467 = vperm.slane %v2077, 7
        %v2468 = vperm.slane %v2079, 0
        %v2469 = vperm.slane %v2079, 1
        %v2470 = vperm.slane %v2079, 2
        %v2471 = vperm.slane %v2079, 3
        %v2472 = vperm.slane %v2079, 4
        %v2473 = vperm.slane %v2079, 5
        %v2474 = vperm.slane %v2079, 6
        %v2475 = vperm.slane %v2079, 7
        %v2476 = vperm.slane %v2081, 0
        %v2477 = vperm.slane %v2081, 1
        %v2478 = vperm.slane %v2081, 2
        %v2479 = vperm.slane %v2081, 3
        %v2480 = vperm.slane %v2081, 4
        %v2481 = vperm.slane %v2081, 5
        %v2482 = vperm.slane %v2081, 6
        %v2483 = vperm.slane %v2081, 7
        %v2484 = vperm.slane %v2083, 0
        %v2485 = vperm.slane %v2083, 1
        %v2486 = vperm.slane %v2083, 2
        %v2487 = vperm.slane %v2083, 3
        %v2488 = vperm.slane %v2083, 4
        %v2489 = vperm.slane %v2083, 5
        %v2490 = vperm.slane %v2083, 6
        %v2491 = vperm.slane %v2083, 7
        %v2492 = vperm.slane %v2085, 0
        %v2493 = vperm.slane %v2085, 1
        %v2494 = vperm.slane %v2085, 2
        %v2495 = vperm.slane %v2085, 3
        %v2496 = vperm.slane %v2085, 4
        %v2497 = vperm.slane %v2085, 5
        %v2498 = vperm.slane %v2085, 6
        %v2499 = vperm.slane %v2085, 7
        %v2500 = vperm.slane %v2087, 0
        %v2501 = vperm.slane %v2087, 1
        %v2502 = vperm.slane %v2087, 2
        %v2503 = vperm.slane %v2087, 3
        %v2504 = vperm.slane %v2087, 4
        %v2505 = vperm.slane %v2087, 5
        %v2506 = vperm.slane %v2087, 6
        %v2507 = vperm.slane %v2087, 7
        %v2508 = vperm.slane %v2089, 0
        %v2509 = vperm.slane %v2089, 1
        %v2510 = vperm.slane %v2089, 2
        %v2511 = vperm.slane %v2089, 3
        %v2512 = vperm.slane %v2089, 4
        %v2513 = vperm.slane %v2089, 5
        %v2514 = vperm.slane %v2089, 6
        %v2515 = vperm.slane %v2089, 7
        %v2516 = vperm.slane %v2091, 0
        %v2517 = vperm.slane %v2091, 1
        %v2518 = vperm.slane %v2091, 2
        %v2519 = vperm.slane %v2091, 3
        %v2520 = vperm.slane %v2091, 4
        %v2521 = vperm.slane %v2091, 5
        %v2522 = vperm.slane %v2091, 6
        %v2523 = vperm.slane %v2091, 7
        %v2524 = vperm.slane %v2093, 0
        %v2525 = vperm.slane %v2093, 1
        %v2526 = vperm.slane %v2093, 2
        %v2527 = vperm.slane %v2093, 3
        %v2528 = vperm.slane %v2093, 4
        %v2529 = vperm.slane %v2093, 5
        %v2530 = vperm.slane %v2093, 6
        %v2531 = vperm.slane %v2093, 7
        %v2532 = vperm.slane %v2095, 0
        %v2533 = vperm.slane %v2095, 1
        %v2534 = vperm.slane %v2095, 2
        %v2535 = vperm.slane %v2095, 3
        %v2536 = vperm.slane %v2095, 4
        %v2537 = vperm.slane %v2095, 5
        %v2538 = vperm.slane %v2095, 6
        %v2539 = vperm.slane %v2095, 7
        %v2540 = vperm.slane %v2097, 0
        %v2541 = vperm.slane %v2097, 1
        %v2542 = vperm.slane %v2097, 2
        %v2543 = vperm.slane %v2097, 3
        %v2544 = vperm.slane %v2097, 4
        %v2545 = vperm.slane %v2097, 5
        %v2546 = vperm.slane %v2097, 6
        %v2547 = vperm.slane %v2097, 7
        %v2548 = vperm.slane %v2099, 0
        %v2549 = vperm.slane %v2099, 1
        %v2550 = vperm.slane %v2099, 2
        %v2551 = vperm.slane %v2099, 3
        %v2552 = vperm.slane %v2099, 4
        %v2553 = vperm.slane %v2099, 5
        %v2554 = vperm.slane %v2099, 6
        %v2555 = vperm.slane %v2099, 7
        %v2556 = vperm.slane %v2101, 0
        %v2557 = vperm.slane %v2101, 1
        %v2558 = vperm.slane %v2101, 2
        %v2559 = vperm.slane %v2101, 3
        %v2560 = vperm.slane %v2101, 4
        %v2561 = vperm.slane %v2101, 5
        %v2562 = vperm.slane %v2101, 6
        %v2563 = vperm.slane %v2101, 7
        %v2564 = vperm.slane %v2103, 0
        %v2565 = vperm.slane %v2103, 1
        %v2566 = vperm.slane %v2103, 2
        %v2567 = vperm.slane %v2103, 3
        %v2568 = vperm.slane %v2103, 4
        %v2569 = vperm.slane %v2103, 5
        %v2570 = vperm.slane %v2103, 6
        %v2571 = vperm.slane %v2103, 7
        %v2572 = vperm.slane %v2105, 0
        %v2573 = vperm.slane %v2105, 1
        %v2574 = vperm.slane %v2105, 2
        %v2575 = vperm.slane %v2105, 3
        %v2576 = vperm.slane %v2105, 4
        %v2577 = vperm.slane %v2105, 5
        %v2578 = vperm.slane %v2105, 6
        %v2579 = vperm.slane %v2105, 7
        %v2580 = vperm.slane %v2107, 0
        %v2581 = vperm.slane %v2107, 1
        %v2582 = vperm.slane %v2107, 2
        %v2583 = vperm.slane %v2107, 3
        %v2584 = vperm.slane %v2107, 4
        %v2585 = vperm.slane %v2107, 5
        %v2586 = vperm.slane %v2107, 6
        %v2587 = vperm.slane %v2107, 7
        %v2588 = vperm.slane %v2109, 0
        %v2589 = vperm.slane %v2109, 1
        %v2590 = vperm.slane %v2109, 2
        %v2591 = vperm.slane %v2109, 3
        %v2592 = vperm.slane %v2109, 4
        %v2593 = vperm.slane %v2109, 5
        %v2594 = vperm.slane %v2109, 6
        %v2595 = vperm.slane %v2109, 7
        %v2596 = vperm.slane %v2111, 0
        %v2597 = vperm.slane %v2111, 1
        %v2598 = vperm.slane %v2111, 2
        %v2599 = vperm.slane %v2111, 3
        %v2600 = vperm.slane %v2111, 4
        %v2601 = vperm.slane %v2111, 5
        %v2602 = vperm.slane %v2111, 6
        %v2603 = vperm.slane %v2111, 7
        %v2604 = vperm.slane %v2113, 0
        %v2605 = vperm.slane %v2113, 1
        %v2606 = vperm.slane %v2113, 2
        %v2607 = vperm.slane %v2113, 3
        %v2608 = vperm.slane %v2113, 4
        %v2609 = vperm.slane %v2113, 5
        %v2610 = vperm.slane %v2113, 6
        %v2611 = vperm.slane %v2113, 7
        %v2612 = vperm.slane %v2115, 0
        %v2613 = vperm.slane %v2115, 1
        %v2614 = vperm.slane %v2115, 2
        %v2615 = vperm.slane %v2115, 3
        %v2616 = vperm.slane %v2115, 4
        %v2617 = vperm.slane %v2115, 5
        %v2618 = vperm.slane %v2115, 6
        %v2619 = vperm.slane %v2115, 7
        %v2620 = vperm.slane %v2117, 0
        %v2621 = vperm.slane %v2117, 1
        %v2622 = vperm.slane %v2117, 2
        %v2623 = vperm.slane %v2117, 3
        %v2624 = vperm.slane %v2117, 4
        %v2625 = vperm.slane %v2117, 5
        %v2626 = vperm.slane %v2117, 6
        %v2627 = vperm.slane %v2117, 7
        %v2628 = vperm.slane %v2119, 0
        %v2629 = vperm.slane %v2119, 1
        %v2630 = vperm.slane %v2119, 2
        %v2631 = vperm.slane %v2119, 3
        %v2632 = vperm.slane %v2119, 4
        %v2633 = vperm.slane %v2119, 5
        %v2634 = vperm.slane %v2119, 6
        %v2635 = vperm.slane %v2119, 7
        %v2636 = vperm.slane %v2121, 0
        %v2637 = vperm.slane %v2121, 1
        %v2638 = vperm.slane %v2121, 2
        %v2639 = vperm.slane %v2121, 3
        %v2640 = vperm.slane %v2121, 4
        %v2641 = vperm.slane %v2121, 5
        %v2642 = vperm.slane %v2121, 6
        %v2643 = vperm.slane %v2121, 7
        %v2644 = vperm.slane %v2123, 0
        %v2645 = vperm.slane %v2123, 1
        %v2646 = vperm.slane %v2123, 2
        %v2647 = vperm.slane %v2123, 3
        %v2648 = vperm.slane %v2123, 4
        %v2649 = vperm.slane %v2123, 5
        %v2650 = vperm.slane %v2123, 6
        %v2651 = vperm.slane %v2123, 7
        %v2652 = vperm.slane %v2125, 0
        %v2653 = vperm.slane %v2125, 1
        %v2654 = vperm.slane %v2125, 2
        %v2655 = vperm.slane %v2125, 3
        %v2656 = vperm.slane %v2125, 4
        %v2657 = vperm.slane %v2125, 5
        %v2658 = vperm.slane %v2125, 6
        %v2659 = vperm.slane %v2125, 7
        %v2660 = vperm.slane %v2127, 0
        %v2661 = vperm.slane %v2127, 1
        %v2662 = vperm.slane %v2127, 2
        %v2663 = vperm.slane %v2127, 3
        %v2664 = vperm.slane %v2127, 4
        %v2665 = vperm.slane %v2127, 5
        %v2666 = vperm.slane %v2127, 6
        %v2667 = vperm.slane %v2127, 7
        %v2668 = vperm.slane %v2129, 0
        %v2669 = vperm.slane %v2129, 1
        %v2670 = vperm.slane %v2129, 2
        %v2671 = vperm.slane %v2129, 3
        %v2672 = vperm.slane %v2129, 4
        %v2673 = vperm.slane %v2129, 5
        %v2674 = vperm.slane %v2129, 6
        %v2675 = vperm.slane %v2129, 7
        %v2676 = vperm.slane %v2131, 0
        %v2677 = vperm.slane %v2131, 1
        %v2678 = vperm.slane %v2131, 2
        %v2679 = vperm.slane %v2131, 3
        %v2680 = vperm.slane %v2131, 4
        %v2681 = vperm.slane %v2131, 5
        %v2682 = vperm.slane %v2131, 6
        %v2683 = vperm.slane %v2131, 7
        %v2684 = vperm.slane %v2133, 0
        %v2685 = vperm.slane %v2133, 1
        %v2686 = vperm.slane %v2133, 2
        %v2687 = vperm.slane %v2133, 3
        %v2688 = vperm.slane %v2133, 4
        %v2689 = vperm.slane %v2133, 5
        %v2690 = vperm.slane %v2133, 6
        %v2691 = vperm.slane %v2133, 7
        %v2692 = vperm.slane %v2135, 0
        %v2693 = vperm.slane %v2135, 1
        %v2694 = vperm.slane %v2135, 2
        %v2695 = vperm.slane %v2135, 3
        %v2696 = vperm.slane %v2135, 4
        %v2697 = vperm.slane %v2135, 5
        %v2698 = vperm.slane %v2135, 6
        %v2699 = vperm.slane %v2135, 7
        %v2700 = vperm.slane %v2137, 0
        %v2701 = vperm.slane %v2137, 1
        %v2702 = vperm.slane %v2137, 2
        %v2703 = vperm.slane %v2137, 3
        %v2704 = vperm.slane %v2137, 4
        %v2705 = vperm.slane %v2137, 5
        %v2706 = vperm.slane %v2137, 6
        %v2707 = vperm.slane %v2137, 7
        %v2708 = vperm.slane %v2139, 0
        %v2709 = vperm.slane %v2139, 1
        %v2710 = vperm.slane %v2139, 2
        %v2711 = vperm.slane %v2139, 3
        %v2712 = vperm.slane %v2139, 4
        %v2713 = vperm.slane %v2139, 5
        %v2714 = vperm.slane %v2139, 6
        %v2715 = vperm.slane %v2139, 7
        %2716 = vst [vmem:[#allocation1] ss:$9 sm:$0xff] %v2204
        %s2717 = scalar_lea.vmem [#allocation1], 1
        %2718 = vst [vmem:[%s2717] ss:$9 sm:$0xff] %v2205
        %s2719 = scalar_lea.vmem [#allocation1], 2
        %2720 = vst [vmem:[%s2719] ss:$9 sm:$0xff] %v2206
        %s2721 = scalar_lea.vmem [#allocation1], 3
        %2722 = vst [vmem:[%s2721] ss:$9 sm:$0xff] %v2207
        %s2723 = scalar_lea.vmem [#allocation1], 4
        %2724 = vst [vmem:[%s2723] ss:$9 sm:$0xff] %v2208
        %s2725 = scalar_lea.vmem [#allocation1], 5
        %2726 = vst [vmem:[%s2725] ss:$9 sm:$0xff] %v2209
        %s2727 = scalar_lea.vmem [#allocation1], 6
        %2728 = vst [vmem:[%s2727] ss:$9 sm:$0xff] %v2210
        %s2729 = scalar_lea.vmem [#allocation1], 7
        %2730 = vst [vmem:[%s2729] ss:$9 sm:$0xff] %v2211
        %v2731 = vld [vmem:[#allocation1] sm:$0xff]
        %2732 = vst [vmem:[#allocation1] ss:$9 sm:$0xff] %v2212
        %2733 = vst [vmem:[%s2717] ss:$9 sm:$0xff] %v2213
        %2734 = vst [vmem:[%s2719] ss:$9 sm:$0xff] %v2214
        %2735 = vst [vmem:[%s2721] ss:$9 sm:$0xff] %v2215
        %2736 = vst [vmem:[%s2723] ss:$9 sm:$0xff] %v2216
        %2737 = vst [vmem:[%s2725] ss:$9 sm:$0xff] %v2217
        %2738 = vst [vmem:[%s2727] ss:$9 sm:$0xff] %v2218
        %2739 = vst [vmem:[%s2729] ss:$9 sm:$0xff] %v2219
        %v2740 = vld [vmem:[#allocation1] sm:$0xff]
        %2741 = vst [vmem:[#allocation1] ss:$9 sm:$0xff] %v2220
        %2742 = vst [vmem:[%s2717] ss:$9 sm:$0xff] %v2221
        %2743 = vst [vmem:[%s2719] ss:$9 sm:$0xff] %v2222
        %2744 = vst [vmem:[%s2721] ss:$9 sm:$0xff] %v2223
        %2745 = vst [vmem:[%s2723] ss:$9 sm:$0xff] %v2224
        %2746 = vst [vmem:[%s2725] ss:$9 sm:$0xff] %v2225
        %2747 = vst [vmem:[%s2727] ss:$9 sm:$0xff] %v2226
        %2748 = vst [vmem:[%s2729] ss:$9 sm:$0xff] %v2227
        %v2749 = vld [vmem:[#allocation1] sm:$0xff]
        %2750 = vst [vmem:[#allocation1] ss:$9 sm:$0xff] %v2228
        %2751 = vst [vmem:[%s2717] ss:$9 sm:$0xff] %v2229
        %2752 = vst [vmem:[%s2719] ss:$9 sm:$0xff] %v2230
        %2753 = vst [vmem:[%s2721] ss:$9 sm:$0xff] %v2231
        %2754 = vst [vmem:[%s2723] ss:$9 sm:$0xff] %v2232
        %2755 = vst [vmem:[%s2725] ss:$9 sm:$0xff] %v2233
        %2756 = vst [vmem:[%s2727] ss:$9 sm:$0xff] %v2234
        %2757 = vst [vmem:[%s2729] ss:$9 sm:$0xff] %v2235
        %v2758 = vld [vmem:[#allocation1] sm:$0xff]
        %2759 = vst [vmem:[#allocation1] ss:$9 sm:$0xff] %v2236
        %2760 = vst [vmem:[%s2717] ss:$9 sm:$0xff] %v2237
        %2761 = vst [vmem:[%s2719] ss:$9 sm:$0xff] %v2238
        %2762 = vst [vmem:[%s2721] ss:$9 sm:$0xff] %v2239
        %2763 = vst [vmem:[%s2723] ss:$9 sm:$0xff] %v2240
        %2764 = vst [vmem:[%s2725] ss:$9 sm:$0xff] %v2241
        %2765 = vst [vmem:[%s2727] ss:$9 sm:$0xff] %v2242
        %2766 = vst [vmem:[%s2729] ss:$9 sm:$0xff] %v2243
        %v2767 = vld [vmem:[#allocation1] sm:$0xff]
        %2768 = vst [vmem:[#allocation1] ss:$9 sm:$0xff] %v2244
        %2769 = vst [vmem:[%s2717] ss:$9 sm:$0xff] %v2245
        %2770 = vst [vmem:[%s2719] ss:$9 sm:$0xff] %v2246
        %2771 = vst [vmem:[%s2721] ss:$9 sm:$0xff] %v2247
        %2772 = vst [vmem:[%s2723] ss:$9 sm:$0xff] %v2248
        %2773 = vst [vmem:[%s2725] ss:$9 sm:$0xff] %v2249
        %2774 = vst [vmem:[%s2727] ss:$9 sm:$0xff] %v2250
        %2775 = vst [vmem:[%s2729] ss:$9 sm:$0xff] %v2251
        %v2776 = vld [vmem:[#allocation1] sm:$0xff]
        %2777 = vst [vmem:[#allocation1] ss:$9 sm:$0xff] %v2252
        %2778 = vst [vmem:[%s2717] ss:$9 sm:$0xff] %v2253
        %2779 = vst [vmem:[%s2719] ss:$9 sm:$0xff] %v2254
        %2780 = vst [vmem:[%s2721] ss:$9 sm:$0xff] %v2255
        %2781 = vst [vmem:[%s2723] ss:$9 sm:$0xff] %v2256
        %2782 = vst [vmem:[%s2725] ss:$9 sm:$0xff] %v2257
        %2783 = vst [vmem:[%s2727] ss:$9 sm:$0xff] %v2258
        %2784 = vst [vmem:[%s2729] ss:$9 sm:$0xff] %v2259
        %v2785 = vld [vmem:[#allocation1] sm:$0xff]
        %2786 = vst [vmem:[#allocation1] ss:$9 sm:$0xff] %v2260
        %2787 = vst [vmem:[%s2717] ss:$9 sm:$0xff] %v2261
        %2788 = vst [vmem:[%s2719] ss:$9 sm:$0xff] %v2262
        %2789 = vst [vmem:[%s2721] ss:$9 sm:$0xff] %v2263
        %2790 = vst [vmem:[%s2723] ss:$9 sm:$0xff] %v2264
        %2791 = vst [vmem:[%s2725] ss:$9 sm:$0xff] %v2265
        %2792 = vst [vmem:[%s2727] ss:$9 sm:$0xff] %v2266
        %2793 = vst [vmem:[%s2729] ss:$9 sm:$0xff] %v2267
        %v2794 = vld [vmem:[#allocation1] sm:$0xff]
        %2795 = vst [vmem:[#allocation1] ss:$9 sm:$0xff] %v2268
        %2796 = vst [vmem:[%s2717] ss:$9 sm:$0xff] %v2269
        %2797 = vst [vmem:[%s2719] ss:$9 sm:$0xff] %v2270
        %2798 = vst [vmem:[%s2721] ss:$9 sm:$0xff] %v2271
        %2799 = vst [vmem:[%s2723] ss:$9 sm:$0xff] %v2272
        %2800 = vst [vmem:[%s2725] ss:$9 sm:$0xff] %v2273
        %2801 = vst [vmem:[%s2727] ss:$9 sm:$0xff] %v2274
        %2802 = vst [vmem:[%s2729] ss:$9 sm:$0xff] %v2275
        %v2803 = vld [vmem:[#allocation1] sm:$0xff]
        %2804 = vst [vmem:[#allocation1] ss:$9 sm:$0xff] %v2276
        %2805 = vst [vmem:[%s2717] ss:$9 sm:$0xff] %v2277
        %2806 = vst [vmem:[%s2719] ss:$9 sm:$0xff] %v2278
        %2807 = vst [vmem:[%s2721] ss:$9 sm:$0xff] %v2279
        %2808 = vst [vmem:[%s2723] ss:$9 sm:$0xff] %v2280
        %2809 = vst [vmem:[%s2725] ss:$9 sm:$0xff] %v2281
        %2810 = vst [vmem:[%s2727] ss:$9 sm:$0xff] %v2282
        %2811 = vst [vmem:[%s2729] ss:$9 sm:$0xff] %v2283
        %v2812 = vld [vmem:[#allocation1] sm:$0xff]
        %2813 = vst [vmem:[#allocation1] ss:$9 sm:$0xff] %v2284
        %2814 = vst [vmem:[%s2717] ss:$9 sm:$0xff] %v2285
        %2815 = vst [vmem:[%s2719] ss:$9 sm:$0xff] %v2286
        %2816 = vst [vmem:[%s2721] ss:$9 sm:$0xff] %v2287
        %2817 = vst [vmem:[%s2723] ss:$9 sm:$0xff] %v2288
        %2818 = vst [vmem:[%s2725] ss:$9 sm:$0xff] %v2289
        %2819 = vst [vmem:[%s2727] ss:$9 sm:$0xff] %v2290
        %2820 = vst [vmem:[%s2729] ss:$9 sm:$0xff] %v2291
        %v2821 = vld [vmem:[#allocation1] sm:$0xff]
        %2822 = vst [vmem:[#allocation1] ss:$9 sm:$0xff] %v2292
        %2823 = vst [vmem:[%s2717] ss:$9 sm:$0xff] %v2293
        %2824 = vst [vmem:[%s2719] ss:$9 sm:$0xff] %v2294
        %2825 = vst [vmem:[%s2721] ss:$9 sm:$0xff] %v2295
        %2826 = vst [vmem:[%s2723] ss:$9 sm:$0xff] %v2296
        %2827 = vst [vmem:[%s2725] ss:$9 sm:$0xff] %v2297
        %2828 = vst [vmem:[%s2727] ss:$9 sm:$0xff] %v2298
        %2829 = vst [vmem:[%s2729] ss:$9 sm:$0xff] %v2299
        %v2830 = vld [vmem:[#allocation1] sm:$0xff]
        %2831 = vst [vmem:[#allocation1] ss:$9 sm:$0xff] %v2300
        %2832 = vst [vmem:[%s2717] ss:$9 sm:$0xff] %v2301
        %2833 = vst [vmem:[%s2719] ss:$9 sm:$0xff] %v2302
        %2834 = vst [vmem:[%s2721] ss:$9 sm:$0xff] %v2303
        %2835 = vst [vmem:[%s2723] ss:$9 sm:$0xff] %v2304
        %2836 = vst [vmem:[%s2725] ss:$9 sm:$0xff] %v2305
        %2837 = vst [vmem:[%s2727] ss:$9 sm:$0xff] %v2306
        %2838 = vst [vmem:[%s2729] ss:$9 sm:$0xff] %v2307
        %v2839 = vld [vmem:[#allocation1] sm:$0xff]
        %2840 = vst [vmem:[#allocation1] ss:$9 sm:$0xff] %v2308
        %2841 = vst [vmem:[%s2717] ss:$9 sm:$0xff] %v2309
        %2842 = vst [vmem:[%s2719] ss:$9 sm:$0xff] %v2310
        %2843 = vst [vmem:[%s2721] ss:$9 sm:$0xff] %v2311
        %2844 = vst [vmem:[%s2723] ss:$9 sm:$0xff] %v2312
        %2845 = vst [vmem:[%s2725] ss:$9 sm:$0xff] %v2313
        %2846 = vst [vmem:[%s2727] ss:$9 sm:$0xff] %v2314
        %2847 = vst [vmem:[%s2729] ss:$9 sm:$0xff] %v2315
        %v2848 = vld [vmem:[#allocation1] sm:$0xff]
        %2849 = vst [vmem:[#allocation1] ss:$9 sm:$0xff] %v2316
        %2850 = vst [vmem:[%s2717] ss:$9 sm:$0xff] %v2317
        %2851 = vst [vmem:[%s2719] ss:$9 sm:$0xff] %v2318
        %2852 = vst [vmem:[%s2721] ss:$9 sm:$0xff] %v2319
        %2853 = vst [vmem:[%s2723] ss:$9 sm:$0xff] %v2320
        %2854 = vst [vmem:[%s2725] ss:$9 sm:$0xff] %v2321
        %2855 = vst [vmem:[%s2727] ss:$9 sm:$0xff] %v2322
        %2856 = vst [vmem:[%s2729] ss:$9 sm:$0xff] %v2323
        %v2857 = vld [vmem:[#allocation1] sm:$0xff]
        %2858 = vst [vmem:[#allocation1] ss:$9 sm:$0xff] %v2324
        %2859 = vst [vmem:[%s2717] ss:$9 sm:$0xff] %v2325
        %2860 = vst [vmem:[%s2719] ss:$9 sm:$0xff] %v2326
        %2861 = vst [vmem:[%s2721] ss:$9 sm:$0xff] %v2327
        %2862 = vst [vmem:[%s2723] ss:$9 sm:$0xff] %v2328
        %2863 = vst [vmem:[%s2725] ss:$9 sm:$0xff] %v2329
        %2864 = vst [vmem:[%s2727] ss:$9 sm:$0xff] %v2330
        %2865 = vst [vmem:[%s2729] ss:$9 sm:$0xff] %v2331
        %v2866 = vld [vmem:[#allocation1] sm:$0xff]
        %2867 = vst [vmem:[#allocation1] ss:$9 sm:$0xff] %v2332
        %2868 = vst [vmem:[%s2717] ss:$9 sm:$0xff] %v2333
        %2869 = vst [vmem:[%s2719] ss:$9 sm:$0xff] %v2334
        %2870 = vst [vmem:[%s2721] ss:$9 sm:$0xff] %v2335
        %2871 = vst [vmem:[%s2723] ss:$9 sm:$0xff] %v2336
        %2872 = vst [vmem:[%s2725] ss:$9 sm:$0xff] %v2337
        %2873 = vst [vmem:[%s2727] ss:$9 sm:$0xff] %v2338
        %2874 = vst [vmem:[%s2729] ss:$9 sm:$0xff] %v2339
        %v2875 = vld [vmem:[#allocation1] sm:$0xff]
        %2876 = vst [vmem:[#allocation1] ss:$9 sm:$0xff] %v2340
        %2877 = vst [vmem:[%s2717] ss:$9 sm:$0xff] %v2341
        %2878 = vst [vmem:[%s2719] ss:$9 sm:$0xff] %v2342
        %2879 = vst [vmem:[%s2721] ss:$9 sm:$0xff] %v2343
        %2880 = vst [vmem:[%s2723] ss:$9 sm:$0xff] %v2344
        %2881 = vst [vmem:[%s2725] ss:$9 sm:$0xff] %v2345
        %2882 = vst [vmem:[%s2727] ss:$9 sm:$0xff] %v2346
        %2883 = vst [vmem:[%s2729] ss:$9 sm:$0xff] %v2347
        %v2884 = vld [vmem:[#allocation1] sm:$0xff]
        %2885 = vst [vmem:[#allocation1] ss:$9 sm:$0xff] %v2348
        %2886 = vst [vmem:[%s2717] ss:$9 sm:$0xff] %v2349
        %2887 = vst [vmem:[%s2719] ss:$9 sm:$0xff] %v2350
        %2888 = vst [vmem:[%s2721] ss:$9 sm:$0xff] %v2351
        %2889 = vst [vmem:[%s2723] ss:$9 sm:$0xff] %v2352
        %2890 = vst [vmem:[%s2725] ss:$9 sm:$0xff] %v2353
        %2891 = vst [vmem:[%s2727] ss:$9 sm:$0xff] %v2354
        %2892 = vst [vmem:[%s2729] ss:$9 sm:$0xff] %v2355
        %v2893 = vld [vmem:[#allocation1] sm:$0xff]
        %2894 = vst [vmem:[#allocation1] ss:$9 sm:$0xff] %v2356
        %2895 = vst [vmem:[%s2717] ss:$9 sm:$0xff] %v2357
        %2896 = vst [vmem:[%s2719] ss:$9 sm:$0xff] %v2358
        %2897 = vst [vmem:[%s2721] ss:$9 sm:$0xff] %v2359
        %2898 = vst [vmem:[%s2723] ss:$9 sm:$0xff] %v2360
        %2899 = vst [vmem:[%s2725] ss:$9 sm:$0xff] %v2361
        %2900 = vst [vmem:[%s2727] ss:$9 sm:$0xff] %v2362
        %2901 = vst [vmem:[%s2729] ss:$9 sm:$0xff] %v2363
        %v2902 = vld [vmem:[#allocation1] sm:$0xff]
        %2903 = vst [vmem:[#allocation1] ss:$9 sm:$0xff] %v2364
        %2904 = vst [vmem:[%s2717] ss:$9 sm:$0xff] %v2365
        %2905 = vst [vmem:[%s2719] ss:$9 sm:$0xff] %v2366
        %2906 = vst [vmem:[%s2721] ss:$9 sm:$0xff] %v2367
        %2907 = vst [vmem:[%s2723] ss:$9 sm:$0xff] %v2368
        %2908 = vst [vmem:[%s2725] ss:$9 sm:$0xff] %v2369
        %2909 = vst [vmem:[%s2727] ss:$9 sm:$0xff] %v2370
        %2910 = vst [vmem:[%s2729] ss:$9 sm:$0xff] %v2371
        %v2911 = vld [vmem:[#allocation1] sm:$0xff]
        %2912 = vst [vmem:[#allocation1] ss:$9 sm:$0xff] %v2372
        %2913 = vst [vmem:[%s2717] ss:$9 sm:$0xff] %v2373
        %2914 = vst [vmem:[%s2719] ss:$9 sm:$0xff] %v2374
        %2915 = vst [vmem:[%s2721] ss:$9 sm:$0xff] %v2375
        %2916 = vst [vmem:[%s2723] ss:$9 sm:$0xff] %v2376
        %2917 = vst [vmem:[%s2725] ss:$9 sm:$0xff] %v2377
        %2918 = vst [vmem:[%s2727] ss:$9 sm:$0xff] %v2378
        %2919 = vst [vmem:[%s2729] ss:$9 sm:$0xff] %v2379
        %v2920 = vld [vmem:[#allocation1] sm:$0xff]
        %2921 = vst [vmem:[#allocation1] ss:$9 sm:$0xff] %v2380
        %2922 = vst [vmem:[%s2717] ss:$9 sm:$0xff] %v2381
        %2923 = vst [vmem:[%s2719] ss:$9 sm:$0xff] %v2382
        %2924 = vst [vmem:[%s2721] ss:$9 sm:$0xff] %v2383
        %2925 = vst [vmem:[%s2723] ss:$9 sm:$0xff] %v2384
        %2926 = vst [vmem:[%s2725] ss:$9 sm:$0xff] %v2385
        %2927 = vst [vmem:[%s2727] ss:$9 sm:$0xff] %v2386
        %2928 = vst [vmem:[%s2729] ss:$9 sm:$0xff] %v2387
        %v2929 = vld [vmem:[#allocation1] sm:$0xff]
        %2930 = vst [vmem:[#allocation1] ss:$9 sm:$0xff] %v2388
        %2931 = vst [vmem:[%s2717] ss:$9 sm:$0xff] %v2389
        %2932 = vst [vmem:[%s2719] ss:$9 sm:$0xff] %v2390
        %2933 = vst [vmem:[%s2721] ss:$9 sm:$0xff] %v2391
        %2934 = vst [vmem:[%s2723] ss:$9 sm:$0xff] %v2392
        %2935 = vst [vmem:[%s2725] ss:$9 sm:$0xff] %v2393
        %2936 = vst [vmem:[%s2727] ss:$9 sm:$0xff] %v2394
        %2937 = vst [vmem:[%s2729] ss:$9 sm:$0xff] %v2395
        %v2938 = vld [vmem:[#allocation1] sm:$0xff]
        %2939 = vst [vmem:[#allocation1] ss:$9 sm:$0xff] %v2396
        %2940 = vst [vmem:[%s2717] ss:$9 sm:$0xff] %v2397
        %2941 = vst [vmem:[%s2719] ss:$9 sm:$0xff] %v2398
        %2942 = vst [vmem:[%s2721] ss:$9 sm:$0xff] %v2399
        %2943 = vst [vmem:[%s2723] ss:$9 sm:$0xff] %v2400
        %2944 = vst [vmem:[%s2725] ss:$9 sm:$0xff] %v2401
        %2945 = vst [vmem:[%s2727] ss:$9 sm:$0xff] %v2402
        %2946 = vst [vmem:[%s2729] ss:$9 sm:$0xff] %v2403
        %v2947 = vld [vmem:[#allocation1] sm:$0xff]
        %2948 = vst [vmem:[#allocation1] ss:$9 sm:$0xff] %v2404
        %2949 = vst [vmem:[%s2717] ss:$9 sm:$0xff] %v2405
        %2950 = vst [vmem:[%s2719] ss:$9 sm:$0xff] %v2406
        %2951 = vst [vmem:[%s2721] ss:$9 sm:$0xff] %v2407
        %2952 = vst [vmem:[%s2723] ss:$9 sm:$0xff] %v2408
        %2953 = vst [vmem:[%s2725] ss:$9 sm:$0xff] %v2409
        %2954 = vst [vmem:[%s2727] ss:$9 sm:$0xff] %v2410
        %2955 = vst [vmem:[%s2729] ss:$9 sm:$0xff] %v2411
        %v2956 = vld [vmem:[#allocation1] sm:$0xff]
        %2957 = vst [vmem:[#allocation1] ss:$9 sm:$0xff] %v2412
        %2958 = vst [vmem:[%s2717] ss:$9 sm:$0xff] %v2413
        %2959 = vst [vmem:[%s2719] ss:$9 sm:$0xff] %v2414
        %2960 = vst [vmem:[%s2721] ss:$9 sm:$0xff] %v2415
        %2961 = vst [vmem:[%s2723] ss:$9 sm:$0xff] %v2416
        %2962 = vst [vmem:[%s2725] ss:$9 sm:$0xff] %v2417
        %2963 = vst [vmem:[%s2727] ss:$9 sm:$0xff] %v2418
        %2964 = vst [vmem:[%s2729] ss:$9 sm:$0xff] %v2419
        %v2965 = vld [vmem:[#allocation1] sm:$0xff]
        %2966 = vst [vmem:[#allocation1] ss:$9 sm:$0xff] %v2420
        %2967 = vst [vmem:[%s2717] ss:$9 sm:$0xff] %v2421
        %2968 = vst [vmem:[%s2719] ss:$9 sm:$0xff] %v2422
        %2969 = vst [vmem:[%s2721] ss:$9 sm:$0xff] %v2423
        %2970 = vst [vmem:[%s2723] ss:$9 sm:$0xff] %v2424
        %2971 = vst [vmem:[%s2725] ss:$9 sm:$0xff] %v2425
        %2972 = vst [vmem:[%s2727] ss:$9 sm:$0xff] %v2426
        %2973 = vst [vmem:[%s2729] ss:$9 sm:$0xff] %v2427
        %v2974 = vld [vmem:[#allocation1] sm:$0xff]
        %2975 = vst [vmem:[#allocation1] ss:$9 sm:$0xff] %v2428
        %2976 = vst [vmem:[%s2717] ss:$9 sm:$0xff] %v2429
        %2977 = vst [vmem:[%s2719] ss:$9 sm:$0xff] %v2430
        %2978 = vst [vmem:[%s2721] ss:$9 sm:$0xff] %v2431
        %2979 = vst [vmem:[%s2723] ss:$9 sm:$0xff] %v2432
        %2980 = vst [vmem:[%s2725] ss:$9 sm:$0xff] %v2433
        %2981 = vst [vmem:[%s2727] ss:$9 sm:$0xff] %v2434
        %2982 = vst [vmem:[%s2729] ss:$9 sm:$0xff] %v2435
        %v2983 = vld [vmem:[#allocation1] sm:$0xff]
        %2984 = vst [vmem:[#allocation1] ss:$9 sm:$0xff] %v2436
        %2985 = vst [vmem:[%s2717] ss:$9 sm:$0xff] %v2437
        %2986 = vst [vmem:[%s2719] ss:$9 sm:$0xff] %v2438
        %2987 = vst [vmem:[%s2721] ss:$9 sm:$0xff] %v2439
        %2988 = vst [vmem:[%s2723] ss:$9 sm:$0xff] %v2440
        %2989 = vst [vmem:[%s2725] ss:$9 sm:$0xff] %v2441
        %2990 = vst [vmem:[%s2727] ss:$9 sm:$0xff] %v2442
        %2991 = vst [vmem:[%s2729] ss:$9 sm:$0xff] %v2443
        %v2992 = vld [vmem:[#allocation1] sm:$0xff]
        %2993 = vst [vmem:[#allocation1] ss:$9 sm:$0xff] %v2444
        %2994 = vst [vmem:[%s2717] ss:$9 sm:$0xff] %v2445
        %2995 = vst [vmem:[%s2719] ss:$9 sm:$0xff] %v2446
        %2996 = vst [vmem:[%s2721] ss:$9 sm:$0xff] %v2447
        %2997 = vst [vmem:[%s2723] ss:$9 sm:$0xff] %v2448
        %2998 = vst [vmem:[%s2725] ss:$9 sm:$0xff] %v2449
        %2999 = vst [vmem:[%s2727] ss:$9 sm:$0xff] %v2450
        %3000 = vst [vmem:[%s2729] ss:$9 sm:$0xff] %v2451
        %v3001 = vld [vmem:[#allocation1] sm:$0xff]
        %3002 = vst [vmem:[#allocation1] ss:$9 sm:$0xff] %v2452
        %3003 = vst [vmem:[%s2717] ss:$9 sm:$0xff] %v2453
        %3004 = vst [vmem:[%s2719] ss:$9 sm:$0xff] %v2454
        %3005 = vst [vmem:[%s2721] ss:$9 sm:$0xff] %v2455
        %3006 = vst [vmem:[%s2723] ss:$9 sm:$0xff] %v2456
        %3007 = vst [vmem:[%s2725] ss:$9 sm:$0xff] %v2457
        %3008 = vst [vmem:[%s2727] ss:$9 sm:$0xff] %v2458
        %3009 = vst [vmem:[%s2729] ss:$9 sm:$0xff] %v2459
        %v3010 = vld [vmem:[#allocation1] sm:$0xff]
        %3011 = vst [vmem:[#allocation1] ss:$9 sm:$0xff] %v2460
        %3012 = vst [vmem:[%s2717] ss:$9 sm:$0xff] %v2461
        %3013 = vst [vmem:[%s2719] ss:$9 sm:$0xff] %v2462
        %3014 = vst [vmem:[%s2721] ss:$9 sm:$0xff] %v2463
        %3015 = vst [vmem:[%s2723] ss:$9 sm:$0xff] %v2464
        %3016 = vst [vmem:[%s2725] ss:$9 sm:$0xff] %v2465
        %3017 = vst [vmem:[%s2727] ss:$9 sm:$0xff] %v2466
        %3018 = vst [vmem:[%s2729] ss:$9 sm:$0xff] %v2467
        %v3019 = vld [vmem:[#allocation1] sm:$0xff]
        %3020 = vst [vmem:[#allocation1] ss:$9 sm:$0xff] %v2468
        %3021 = vst [vmem:[%s2717] ss:$9 sm:$0xff] %v2469
        %3022 = vst [vmem:[%s2719] ss:$9 sm:$0xff] %v2470
        %3023 = vst [vmem:[%s2721] ss:$9 sm:$0xff] %v2471
        %3024 = vst [vmem:[%s2723] ss:$9 sm:$0xff] %v2472
        %3025 = vst [vmem:[%s2725] ss:$9 sm:$0xff] %v2473
        %3026 = vst [vmem:[%s2727] ss:$9 sm:$0xff] %v2474
        %3027 = vst [vmem:[%s2729] ss:$9 sm:$0xff] %v2475
        %v3028 = vld [vmem:[#allocation1] sm:$0xff]
        %3029 = vst [vmem:[#allocation1] ss:$9 sm:$0xff] %v2476
        %3030 = vst [vmem:[%s2717] ss:$9 sm:$0xff] %v2477
        %3031 = vst [vmem:[%s2719] ss:$9 sm:$0xff] %v2478
        %3032 = vst [vmem:[%s2721] ss:$9 sm:$0xff] %v2479
        %3033 = vst [vmem:[%s2723] ss:$9 sm:$0xff] %v2480
        %3034 = vst [vmem:[%s2725] ss:$9 sm:$0xff] %v2481
        %3035 = vst [vmem:[%s2727] ss:$9 sm:$0xff] %v2482
        %3036 = vst [vmem:[%s2729] ss:$9 sm:$0xff] %v2483
        %v3037 = vld [vmem:[#allocation1] sm:$0xff]
        %3038 = vst [vmem:[#allocation1] ss:$9 sm:$0xff] %v2484
        %3039 = vst [vmem:[%s2717] ss:$9 sm:$0xff] %v2485
        %3040 = vst [vmem:[%s2719] ss:$9 sm:$0xff] %v2486
        %3041 = vst [vmem:[%s2721] ss:$9 sm:$0xff] %v2487
        %3042 = vst [vmem:[%s2723] ss:$9 sm:$0xff] %v2488
        %3043 = vst [vmem:[%s2725] ss:$9 sm:$0xff] %v2489
        %3044 = vst [vmem:[%s2727] ss:$9 sm:$0xff] %v2490
        %3045 = vst [vmem:[%s2729] ss:$9 sm:$0xff] %v2491
        %v3046 = vld [vmem:[#allocation1] sm:$0xff]
        %3047 = vst [vmem:[#allocation1] ss:$9 sm:$0xff] %v2492
        %3048 = vst [vmem:[%s2717] ss:$9 sm:$0xff] %v2493
        %3049 = vst [vmem:[%s2719] ss:$9 sm:$0xff] %v2494
        %3050 = vst [vmem:[%s2721] ss:$9 sm:$0xff] %v2495
        %3051 = vst [vmem:[%s2723] ss:$9 sm:$0xff] %v2496
        %3052 = vst [vmem:[%s2725] ss:$9 sm:$0xff] %v2497
        %3053 = vst [vmem:[%s2727] ss:$9 sm:$0xff] %v2498
        %3054 = vst [vmem:[%s2729] ss:$9 sm:$0xff] %v2499
        %v3055 = vld [vmem:[#allocation1] sm:$0xff]
        %3056 = vst [vmem:[#allocation1] ss:$9 sm:$0xff] %v2500
        %3057 = vst [vmem:[%s2717] ss:$9 sm:$0xff] %v2501
        %3058 = vst [vmem:[%s2719] ss:$9 sm:$0xff] %v2502
        %3059 = vst [vmem:[%s2721] ss:$9 sm:$0xff] %v2503
        %3060 = vst [vmem:[%s2723] ss:$9 sm:$0xff] %v2504
        %3061 = vst [vmem:[%s2725] ss:$9 sm:$0xff] %v2505
        %3062 = vst [vmem:[%s2727] ss:$9 sm:$0xff] %v2506
        %3063 = vst [vmem:[%s2729] ss:$9 sm:$0xff] %v2507
        %v3064 = vld [vmem:[#allocation1] sm:$0xff]
        %3065 = vst [vmem:[#allocation1] ss:$9 sm:$0xff] %v2508
        %3066 = vst [vmem:[%s2717] ss:$9 sm:$0xff] %v2509
        %3067 = vst [vmem:[%s2719] ss:$9 sm:$0xff] %v2510
        %3068 = vst [vmem:[%s2721] ss:$9 sm:$0xff] %v2511
        %3069 = vst [vmem:[%s2723] ss:$9 sm:$0xff] %v2512
        %3070 = vst [vmem:[%s2725] ss:$9 sm:$0xff] %v2513
        %3071 = vst [vmem:[%s2727] ss:$9 sm:$0xff] %v2514
        %3072 = vst [vmem:[%s2729] ss:$9 sm:$0xff] %v2515
        %v3073 = vld [vmem:[#allocation1] sm:$0xff]
        %3074 = vst [vmem:[#allocation1] ss:$9 sm:$0xff] %v2516
        %3075 = vst [vmem:[%s2717] ss:$9 sm:$0xff] %v2517
        %3076 = vst [vmem:[%s2719] ss:$9 sm:$0xff] %v2518
        %3077 = vst [vmem:[%s2721] ss:$9 sm:$0xff] %v2519
        %3078 = vst [vmem:[%s2723] ss:$9 sm:$0xff] %v2520
        %3079 = vst [vmem:[%s2725] ss:$9 sm:$0xff] %v2521
        %3080 = vst [vmem:[%s2727] ss:$9 sm:$0xff] %v2522
        %3081 = vst [vmem:[%s2729] ss:$9 sm:$0xff] %v2523
        %v3082 = vld [vmem:[#allocation1] sm:$0xff]
        %3083 = vst [vmem:[#allocation1] ss:$9 sm:$0xff] %v2524
        %3084 = vst [vmem:[%s2717] ss:$9 sm:$0xff] %v2525
        %3085 = vst [vmem:[%s2719] ss:$9 sm:$0xff] %v2526
        %3086 = vst [vmem:[%s2721] ss:$9 sm:$0xff] %v2527
        %3087 = vst [vmem:[%s2723] ss:$9 sm:$0xff] %v2528
        %3088 = vst [vmem:[%s2725] ss:$9 sm:$0xff] %v2529
        %3089 = vst [vmem:[%s2727] ss:$9 sm:$0xff] %v2530
        %3090 = vst [vmem:[%s2729] ss:$9 sm:$0xff] %v2531
        %v3091 = vld [vmem:[#allocation1] sm:$0xff]
        %3092 = vst [vmem:[#allocation1] ss:$9 sm:$0xff] %v2532
        %3093 = vst [vmem:[%s2717] ss:$9 sm:$0xff] %v2533
        %3094 = vst [vmem:[%s2719] ss:$9 sm:$0xff] %v2534
        %3095 = vst [vmem:[%s2721] ss:$9 sm:$0xff] %v2535
        %3096 = vst [vmem:[%s2723] ss:$9 sm:$0xff] %v2536
        %3097 = vst [vmem:[%s2725] ss:$9 sm:$0xff] %v2537
        %3098 = vst [vmem:[%s2727] ss:$9 sm:$0xff] %v2538
        %3099 = vst [vmem:[%s2729] ss:$9 sm:$0xff] %v2539
        %v3100 = vld [vmem:[#allocation1] sm:$0xff]
        %3101 = vst [vmem:[#allocation1] ss:$9 sm:$0xff] %v2540
        %3102 = vst [vmem:[%s2717] ss:$9 sm:$0xff] %v2541
        %3103 = vst [vmem:[%s2719] ss:$9 sm:$0xff] %v2542
        %3104 = vst [vmem:[%s2721] ss:$9 sm:$0xff] %v2543
        %3105 = vst [vmem:[%s2723] ss:$9 sm:$0xff] %v2544
        %3106 = vst [vmem:[%s2725] ss:$9 sm:$0xff] %v2545
        %3107 = vst [vmem:[%s2727] ss:$9 sm:$0xff] %v2546
        %3108 = vst [vmem:[%s2729] ss:$9 sm:$0xff] %v2547
        %v3109 = vld [vmem:[#allocation1] sm:$0xff]
        %3110 = vst [vmem:[#allocation1] ss:$9 sm:$0xff] %v2548
        %3111 = vst [vmem:[%s2717] ss:$9 sm:$0xff] %v2549
        %3112 = vst [vmem:[%s2719] ss:$9 sm:$0xff] %v2550
        %3113 = vst [vmem:[%s2721] ss:$9 sm:$0xff] %v2551
        %3114 = vst [vmem:[%s2723] ss:$9 sm:$0xff] %v2552
        %3115 = vst [vmem:[%s2725] ss:$9 sm:$0xff] %v2553
        %3116 = vst [vmem:[%s2727] ss:$9 sm:$0xff] %v2554
        %3117 = vst [vmem:[%s2729] ss:$9 sm:$0xff] %v2555
        %v3118 = vld [vmem:[#allocation1] sm:$0xff]
        %3119 = vst [vmem:[#allocation1] ss:$9 sm:$0xff] %v2556
        %3120 = vst [vmem:[%s2717] ss:$9 sm:$0xff] %v2557
        %3121 = vst [vmem:[%s2719] ss:$9 sm:$0xff] %v2558
        %3122 = vst [vmem:[%s2721] ss:$9 sm:$0xff] %v2559
        %3123 = vst [vmem:[%s2723] ss:$9 sm:$0xff] %v2560
        %3124 = vst [vmem:[%s2725] ss:$9 sm:$0xff] %v2561
        %3125 = vst [vmem:[%s2727] ss:$9 sm:$0xff] %v2562
        %3126 = vst [vmem:[%s2729] ss:$9 sm:$0xff] %v2563
        %v3127 = vld [vmem:[#allocation1] sm:$0xff]
        %3128 = vst [vmem:[#allocation1] ss:$9 sm:$0xff] %v2564
        %3129 = vst [vmem:[%s2717] ss:$9 sm:$0xff] %v2565
        %3130 = vst [vmem:[%s2719] ss:$9 sm:$0xff] %v2566
        %3131 = vst [vmem:[%s2721] ss:$9 sm:$0xff] %v2567
        %3132 = vst [vmem:[%s2723] ss:$9 sm:$0xff] %v2568
        %3133 = vst [vmem:[%s2725] ss:$9 sm:$0xff] %v2569
        %3134 = vst [vmem:[%s2727] ss:$9 sm:$0xff] %v2570
        %3135 = vst [vmem:[%s2729] ss:$9 sm:$0xff] %v2571
        %v3136 = vld [vmem:[#allocation1] sm:$0xff]
        %3137 = vst [vmem:[#allocation1] ss:$9 sm:$0xff] %v2572
        %3138 = vst [vmem:[%s2717] ss:$9 sm:$0xff] %v2573
        %3139 = vst [vmem:[%s2719] ss:$9 sm:$0xff] %v2574
        %3140 = vst [vmem:[%s2721] ss:$9 sm:$0xff] %v2575
        %3141 = vst [vmem:[%s2723] ss:$9 sm:$0xff] %v2576
        %3142 = vst [vmem:[%s2725] ss:$9 sm:$0xff] %v2577
        %3143 = vst [vmem:[%s2727] ss:$9 sm:$0xff] %v2578
        %3144 = vst [vmem:[%s2729] ss:$9 sm:$0xff] %v2579
        %v3145 = vld [vmem:[#allocation1] sm:$0xff]
        %3146 = vst [vmem:[#allocation1] ss:$9 sm:$0xff] %v2580
        %3147 = vst [vmem:[%s2717] ss:$9 sm:$0xff] %v2581
        %3148 = vst [vmem:[%s2719] ss:$9 sm:$0xff] %v2582
        %3149 = vst [vmem:[%s2721] ss:$9 sm:$0xff] %v2583
        %3150 = vst [vmem:[%s2723] ss:$9 sm:$0xff] %v2584
        %3151 = vst [vmem:[%s2725] ss:$9 sm:$0xff] %v2585
        %3152 = vst [vmem:[%s2727] ss:$9 sm:$0xff] %v2586
        %3153 = vst [vmem:[%s2729] ss:$9 sm:$0xff] %v2587
        %v3154 = vld [vmem:[#allocation1] sm:$0xff]
        %3155 = vst [vmem:[#allocation1] ss:$9 sm:$0xff] %v2588
        %3156 = vst [vmem:[%s2717] ss:$9 sm:$0xff] %v2589
        %3157 = vst [vmem:[%s2719] ss:$9 sm:$0xff] %v2590
        %3158 = vst [vmem:[%s2721] ss:$9 sm:$0xff] %v2591
        %3159 = vst [vmem:[%s2723] ss:$9 sm:$0xff] %v2592
        %3160 = vst [vmem:[%s2725] ss:$9 sm:$0xff] %v2593
        %3161 = vst [vmem:[%s2727] ss:$9 sm:$0xff] %v2594
        %3162 = vst [vmem:[%s2729] ss:$9 sm:$0xff] %v2595
        %v3163 = vld [vmem:[#allocation1] sm:$0xff]
        %3164 = vst [vmem:[#allocation1] ss:$9 sm:$0xff] %v2596
        %3165 = vst [vmem:[%s2717] ss:$9 sm:$0xff] %v2597
        %3166 = vst [vmem:[%s2719] ss:$9 sm:$0xff] %v2598
        %3167 = vst [vmem:[%s2721] ss:$9 sm:$0xff] %v2599
        %3168 = vst [vmem:[%s2723] ss:$9 sm:$0xff] %v2600
        %3169 = vst [vmem:[%s2725] ss:$9 sm:$0xff] %v2601
        %3170 = vst [vmem:[%s2727] ss:$9 sm:$0xff] %v2602
        %3171 = vst [vmem:[%s2729] ss:$9 sm:$0xff] %v2603
        %v3172 = vld [vmem:[#allocation1] sm:$0xff]
        %3173 = vst [vmem:[#allocation1] ss:$9 sm:$0xff] %v2604
        %3174 = vst [vmem:[%s2717] ss:$9 sm:$0xff] %v2605
        %3175 = vst [vmem:[%s2719] ss:$9 sm:$0xff] %v2606
        %3176 = vst [vmem:[%s2721] ss:$9 sm:$0xff] %v2607
        %3177 = vst [vmem:[%s2723] ss:$9 sm:$0xff] %v2608
        %3178 = vst [vmem:[%s2725] ss:$9 sm:$0xff] %v2609
        %3179 = vst [vmem:[%s2727] ss:$9 sm:$0xff] %v2610
        %3180 = vst [vmem:[%s2729] ss:$9 sm:$0xff] %v2611
        %v3181 = vld [vmem:[#allocation1] sm:$0xff]
        %3182 = vst [vmem:[#allocation1] ss:$9 sm:$0xff] %v2612
        %3183 = vst [vmem:[%s2717] ss:$9 sm:$0xff] %v2613
        %3184 = vst [vmem:[%s2719] ss:$9 sm:$0xff] %v2614
        %3185 = vst [vmem:[%s2721] ss:$9 sm:$0xff] %v2615
        %3186 = vst [vmem:[%s2723] ss:$9 sm:$0xff] %v2616
        %3187 = vst [vmem:[%s2725] ss:$9 sm:$0xff] %v2617
        %3188 = vst [vmem:[%s2727] ss:$9 sm:$0xff] %v2618
        %3189 = vst [vmem:[%s2729] ss:$9 sm:$0xff] %v2619
        %v3190 = vld [vmem:[#allocation1] sm:$0xff]
        %3191 = vst [vmem:[#allocation1] ss:$9 sm:$0xff] %v2620
        %3192 = vst [vmem:[%s2717] ss:$9 sm:$0xff] %v2621
        %3193 = vst [vmem:[%s2719] ss:$9 sm:$0xff] %v2622
        %3194 = vst [vmem:[%s2721] ss:$9 sm:$0xff] %v2623
        %3195 = vst [vmem:[%s2723] ss:$9 sm:$0xff] %v2624
        %3196 = vst [vmem:[%s2725] ss:$9 sm:$0xff] %v2625
        %3197 = vst [vmem:[%s2727] ss:$9 sm:$0xff] %v2626
        %3198 = vst [vmem:[%s2729] ss:$9 sm:$0xff] %v2627
        %v3199 = vld [vmem:[#allocation1] sm:$0xff]
        %3200 = vst [vmem:[#allocation1] ss:$9 sm:$0xff] %v2628
        %3201 = vst [vmem:[%s2717] ss:$9 sm:$0xff] %v2629
        %3202 = vst [vmem:[%s2719] ss:$9 sm:$0xff] %v2630
        %3203 = vst [vmem:[%s2721] ss:$9 sm:$0xff] %v2631
        %3204 = vst [vmem:[%s2723] ss:$9 sm:$0xff] %v2632
        %3205 = vst [vmem:[%s2725] ss:$9 sm:$0xff] %v2633
        %3206 = vst [vmem:[%s2727] ss:$9 sm:$0xff] %v2634
        %3207 = vst [vmem:[%s2729] ss:$9 sm:$0xff] %v2635
        %v3208 = vld [vmem:[#allocation1] sm:$0xff]
        %3209 = vst [vmem:[#allocation1] ss:$9 sm:$0xff] %v2636
        %3210 = vst [vmem:[%s2717] ss:$9 sm:$0xff] %v2637
        %3211 = vst [vmem:[%s2719] ss:$9 sm:$0xff] %v2638
        %3212 = vst [vmem:[%s2721] ss:$9 sm:$0xff] %v2639
        %3213 = vst [vmem:[%s2723] ss:$9 sm:$0xff] %v2640
        %3214 = vst [vmem:[%s2725] ss:$9 sm:$0xff] %v2641
        %3215 = vst [vmem:[%s2727] ss:$9 sm:$0xff] %v2642
        %3216 = vst [vmem:[%s2729] ss:$9 sm:$0xff] %v2643
        %v3217 = vld [vmem:[#allocation1] sm:$0xff]
        %3218 = vst [vmem:[#allocation1] ss:$9 sm:$0xff] %v2644
        %3219 = vst [vmem:[%s2717] ss:$9 sm:$0xff] %v2645
        %3220 = vst [vmem:[%s2719] ss:$9 sm:$0xff] %v2646
        %3221 = vst [vmem:[%s2721] ss:$9 sm:$0xff] %v2647
        %3222 = vst [vmem:[%s2723] ss:$9 sm:$0xff] %v2648
        %3223 = vst [vmem:[%s2725] ss:$9 sm:$0xff] %v2649
        %3224 = vst [vmem:[%s2727] ss:$9 sm:$0xff] %v2650
        %3225 = vst [vmem:[%s2729] ss:$9 sm:$0xff] %v2651
        %v3226 = vld [vmem:[#allocation1] sm:$0xff]
        %3227 = vst [vmem:[#allocation1] ss:$9 sm:$0xff] %v2652
        %3228 = vst [vmem:[%s2717] ss:$9 sm:$0xff] %v2653
        %3229 = vst [vmem:[%s2719] ss:$9 sm:$0xff] %v2654
        %3230 = vst [vmem:[%s2721] ss:$9 sm:$0xff] %v2655
        %3231 = vst [vmem:[%s2723] ss:$9 sm:$0xff] %v2656
        %3232 = vst [vmem:[%s2725] ss:$9 sm:$0xff] %v2657
        %3233 = vst [vmem:[%s2727] ss:$9 sm:$0xff] %v2658
        %3234 = vst [vmem:[%s2729] ss:$9 sm:$0xff] %v2659
        %v3235 = vld [vmem:[#allocation1] sm:$0xff]
        %3236 = vst [vmem:[#allocation1] ss:$9 sm:$0xff] %v2660
        %3237 = vst [vmem:[%s2717] ss:$9 sm:$0xff] %v2661
        %3238 = vst [vmem:[%s2719] ss:$9 sm:$0xff] %v2662
        %3239 = vst [vmem:[%s2721] ss:$9 sm:$0xff] %v2663
        %3240 = vst [vmem:[%s2723] ss:$9 sm:$0xff] %v2664
        %3241 = vst [vmem:[%s2725] ss:$9 sm:$0xff] %v2665
        %3242 = vst [vmem:[%s2727] ss:$9 sm:$0xff] %v2666
        %3243 = vst [vmem:[%s2729] ss:$9 sm:$0xff] %v2667
        %v3244 = vld [vmem:[#allocation1] sm:$0xff]
        %3245 = vst [vmem:[#allocation1] ss:$9 sm:$0xff] %v2668
        %3246 = vst [vmem:[%s2717] ss:$9 sm:$0xff] %v2669
        %3247 = vst [vmem:[%s2719] ss:$9 sm:$0xff] %v2670
        %3248 = vst [vmem:[%s2721] ss:$9 sm:$0xff] %v2671
        %3249 = vst [vmem:[%s2723] ss:$9 sm:$0xff] %v2672
        %3250 = vst [vmem:[%s2725] ss:$9 sm:$0xff] %v2673
        %3251 = vst [vmem:[%s2727] ss:$9 sm:$0xff] %v2674
        %3252 = vst [vmem:[%s2729] ss:$9 sm:$0xff] %v2675
        %v3253 = vld [vmem:[#allocation1] sm:$0xff]
        %3254 = vst [vmem:[#allocation1] ss:$9 sm:$0xff] %v2676
        %3255 = vst [vmem:[%s2717] ss:$9 sm:$0xff] %v2677
        %3256 = vst [vmem:[%s2719] ss:$9 sm:$0xff] %v2678
        %3257 = vst [vmem:[%s2721] ss:$9 sm:$0xff] %v2679
        %3258 = vst [vmem:[%s2723] ss:$9 sm:$0xff] %v2680
        %3259 = vst [vmem:[%s2725] ss:$9 sm:$0xff] %v2681
        %3260 = vst [vmem:[%s2727] ss:$9 sm:$0xff] %v2682
        %3261 = vst [vmem:[%s2729] ss:$9 sm:$0xff] %v2683
        %v3262 = vld [vmem:[#allocation1] sm:$0xff]
        %3263 = vst [vmem:[#allocation1] ss:$9 sm:$0xff] %v2684
        %3264 = vst [vmem:[%s2717] ss:$9 sm:$0xff] %v2685
        %3265 = vst [vmem:[%s2719] ss:$9 sm:$0xff] %v2686
        %3266 = vst [vmem:[%s2721] ss:$9 sm:$0xff] %v2687
        %3267 = vst [vmem:[%s2723] ss:$9 sm:$0xff] %v2688
        %3268 = vst [vmem:[%s2725] ss:$9 sm:$0xff] %v2689
        %3269 = vst [vmem:[%s2727] ss:$9 sm:$0xff] %v2690
        %3270 = vst [vmem:[%s2729] ss:$9 sm:$0xff] %v2691
        %v3271 = vld [vmem:[#allocation1] sm:$0xff]
        %3272 = vst [vmem:[#allocation1] ss:$9 sm:$0xff] %v2692
        %3273 = vst [vmem:[%s2717] ss:$9 sm:$0xff] %v2693
        %3274 = vst [vmem:[%s2719] ss:$9 sm:$0xff] %v2694
        %3275 = vst [vmem:[%s2721] ss:$9 sm:$0xff] %v2695
        %3276 = vst [vmem:[%s2723] ss:$9 sm:$0xff] %v2696
        %3277 = vst [vmem:[%s2725] ss:$9 sm:$0xff] %v2697
        %3278 = vst [vmem:[%s2727] ss:$9 sm:$0xff] %v2698
        %3279 = vst [vmem:[%s2729] ss:$9 sm:$0xff] %v2699
        %v3280 = vld [vmem:[#allocation1] sm:$0xff]
        %3281 = vst [vmem:[#allocation1] ss:$9 sm:$0xff] %v2700
        %3282 = vst [vmem:[%s2717] ss:$9 sm:$0xff] %v2701
        %3283 = vst [vmem:[%s2719] ss:$9 sm:$0xff] %v2702
        %3284 = vst [vmem:[%s2721] ss:$9 sm:$0xff] %v2703
        %3285 = vst [vmem:[%s2723] ss:$9 sm:$0xff] %v2704
        %3286 = vst [vmem:[%s2725] ss:$9 sm:$0xff] %v2705
        %3287 = vst [vmem:[%s2727] ss:$9 sm:$0xff] %v2706
        %3288 = vst [vmem:[%s2729] ss:$9 sm:$0xff] %v2707
        %v3289 = vld [vmem:[#allocation1] sm:$0xff]
        %3290 = vst [vmem:[#allocation1] ss:$9 sm:$0xff] %v2708
        %3291 = vst [vmem:[%s2717] ss:$9 sm:$0xff] %v2709
        %3292 = vst [vmem:[%s2719] ss:$9 sm:$0xff] %v2710
        %3293 = vst [vmem:[%s2721] ss:$9 sm:$0xff] %v2711
        %3294 = vst [vmem:[%s2723] ss:$9 sm:$0xff] %v2712
        %3295 = vst [vmem:[%s2725] ss:$9 sm:$0xff] %v2713
        %3296 = vst [vmem:[%s2727] ss:$9 sm:$0xff] %v2714
        %3297 = vst [vmem:[%s2729] ss:$9 sm:$0xff] %v2715
        %v3298 = vld [vmem:[#allocation1] sm:$0xff]
        %3299 = vset.pattern.permute.xlu0 0
        %3300 = vperm.xlu0 %3299, %v2731
        %v3301 = vpop.permute.xlu0 %3300
        %3302 = vset.pattern.permute.xlu0 0
        %3303 = vperm.xlu0 %3302, %v2740
        %v3304 = vpop.permute.xlu0 %3303
        %3305 = vset.pattern.permute.xlu0 0
        %3306 = vperm.xlu0 %3305, %v2749
        %v3307 = vpop.permute.xlu0 %3306
        %3308 = vset.pattern.permute.xlu0 0
        %3309 = vperm.xlu0 %3308, %v2758
        %v3310 = vpop.permute.xlu0 %3309
        %3311 = vset.pattern.permute.xlu0 0
        %3312 = vperm.xlu0 %3311, %v2767
        %v3313 = vpop.permute.xlu0 %3312
        %3314 = vset.pattern.permute.xlu0 0
        %3315 = vperm.xlu0 %3314, %v2776
        %v3316 = vpop.permute.xlu0 %3315
        %3317 = vset.pattern.permute.xlu0 0
        %3318 = vperm.xlu0 %3317, %v2785
        %v3319 = vpop.permute.xlu0 %3318
        %3320 = vset.pattern.permute.xlu0 0
        %3321 = vperm.xlu0 %3320, %v2794
        %v3322 = vpop.permute.xlu0 %3321
        %3323 = vset.pattern.permute.xlu0 0
        %3324 = vperm.xlu0 %3323, %v2803
        %v3325 = vpop.permute.xlu0 %3324
        %3326 = vset.pattern.permute.xlu0 0
        %3327 = vperm.xlu0 %3326, %v2812
        %v3328 = vpop.permute.xlu0 %3327
        %3329 = vset.pattern.permute.xlu0 0
        %3330 = vperm.xlu0 %3329, %v2821
        %v3331 = vpop.permute.xlu0 %3330
        %3332 = vset.pattern.permute.xlu0 0
        %3333 = vperm.xlu0 %3332, %v2830
        %v3334 = vpop.permute.xlu0 %3333
        %3335 = vset.pattern.permute.xlu0 0
        %3336 = vperm.xlu0 %3335, %v2839
        %v3337 = vpop.permute.xlu0 %3336
        %3338 = vset.pattern.permute.xlu0 0
        %3339 = vperm.xlu0 %3338, %v2848
        %v3340 = vpop.permute.xlu0 %3339
        %3341 = vset.pattern.permute.xlu0 0
        %3342 = vperm.xlu0 %3341, %v2857
        %v3343 = vpop.permute.xlu0 %3342
        %3344 = vset.pattern.permute.xlu0 0
        %3345 = vperm.xlu0 %3344, %v2866
        %v3346 = vpop.permute.xlu0 %3345
        %3347 = vset.pattern.permute.xlu0 0
        %3348 = vperm.xlu0 %3347, %v2875
        %v3349 = vpop.permute.xlu0 %3348
        %3350 = vset.pattern.permute.xlu0 0
        %3351 = vperm.xlu0 %3350, %v2884
        %v3352 = vpop.permute.xlu0 %3351
        %3353 = vset.pattern.permute.xlu0 0
        %3354 = vperm.xlu0 %3353, %v2893
        %v3355 = vpop.permute.xlu0 %3354
        %3356 = vset.pattern.permute.xlu0 0
        %3357 = vperm.xlu0 %3356, %v2902
        %v3358 = vpop.permute.xlu0 %3357
        %3359 = vset.pattern.permute.xlu0 0
        %3360 = vperm.xlu0 %3359, %v2911
        %v3361 = vpop.permute.xlu0 %3360
        %3362 = vset.pattern.permute.xlu0 0
        %3363 = vperm.xlu0 %3362, %v2920
        %v3364 = vpop.permute.xlu0 %3363
        %3365 = vset.pattern.permute.xlu0 0
        %3366 = vperm.xlu0 %3365, %v2929
        %v3367 = vpop.permute.xlu0 %3366
        %3368 = vset.pattern.permute.xlu0 0
        %3369 = vperm.xlu0 %3368, %v2938
        %v3370 = vpop.permute.xlu0 %3369
        %3371 = vset.pattern.permute.xlu0 0
        %3372 = vperm.xlu0 %3371, %v2947
        %v3373 = vpop.permute.xlu0 %3372
        %3374 = vset.pattern.permute.xlu0 0
        %3375 = vperm.xlu0 %3374, %v2956
        %v3376 = vpop.permute.xlu0 %3375
        %3377 = vset.pattern.permute.xlu0 0
        %3378 = vperm.xlu0 %3377, %v2965
        %v3379 = vpop.permute.xlu0 %3378
        %3380 = vset.pattern.permute.xlu0 0
        %3381 = vperm.xlu0 %3380, %v2974
        %v3382 = vpop.permute.xlu0 %3381
        %3383 = vset.pattern.permute.xlu0 0
        %3384 = vperm.xlu0 %3383, %v2983
        %v3385 = vpop.permute.xlu0 %3384
        %3386 = vset.pattern.permute.xlu0 0
        %3387 = vperm.xlu0 %3386, %v2992
        %v3388 = vpop.permute.xlu0 %3387
        %3389 = vset.pattern.permute.xlu0 0
        %3390 = vperm.xlu0 %3389, %v3001
        %v3391 = vpop.permute.xlu0 %3390
        %3392 = vset.pattern.permute.xlu0 0
        %3393 = vperm.xlu0 %3392, %v3010
        %v3394 = vpop.permute.xlu0 %3393
        %3395 = vset.pattern.permute.xlu0 0
        %3396 = vperm.xlu0 %3395, %v3019
        %v3397 = vpop.permute.xlu0 %3396
        %3398 = vset.pattern.permute.xlu0 0
        %3399 = vperm.xlu0 %3398, %v3028
        %v3400 = vpop.permute.xlu0 %3399
        %3401 = vset.pattern.permute.xlu0 0
        %3402 = vperm.xlu0 %3401, %v3037
        %v3403 = vpop.permute.xlu0 %3402
        %3404 = vset.pattern.permute.xlu0 0
        %3405 = vperm.xlu0 %3404, %v3046
        %v3406 = vpop.permute.xlu0 %3405
        %3407 = vset.pattern.permute.xlu0 0
        %3408 = vperm.xlu0 %3407, %v3055
        %v3409 = vpop.permute.xlu0 %3408
        %3410 = vset.pattern.permute.xlu0 0
        %3411 = vperm.xlu0 %3410, %v3064
        %v3412 = vpop.permute.xlu0 %3411
        %3413 = vset.pattern.permute.xlu0 0
        %3414 = vperm.xlu0 %3413, %v3073
        %v3415 = vpop.permute.xlu0 %3414
        %3416 = vset.pattern.permute.xlu0 0
        %3417 = vperm.xlu0 %3416, %v3082
        %v3418 = vpop.permute.xlu0 %3417
        %3419 = vset.pattern.permute.xlu0 0
        %3420 = vperm.xlu0 %3419, %v3091
        %v3421 = vpop.permute.xlu0 %3420
        %3422 = vset.pattern.permute.xlu0 0
        %3423 = vperm.xlu0 %3422, %v3100
        %v3424 = vpop.permute.xlu0 %3423
        %3425 = vset.pattern.permute.xlu0 0
        %3426 = vperm.xlu0 %3425, %v3109
        %v3427 = vpop.permute.xlu0 %3426
        %3428 = vset.pattern.permute.xlu0 0
        %3429 = vperm.xlu0 %3428, %v3118
        %v3430 = vpop.permute.xlu0 %3429
        %3431 = vset.pattern.permute.xlu0 0
        %3432 = vperm.xlu0 %3431, %v3127
        %v3433 = vpop.permute.xlu0 %3432
        %3434 = vset.pattern.permute.xlu0 0
        %3435 = vperm.xlu0 %3434, %v3136
        %v3436 = vpop.permute.xlu0 %3435
        %3437 = vset.pattern.permute.xlu0 0
        %3438 = vperm.xlu0 %3437, %v3145
        %v3439 = vpop.permute.xlu0 %3438
        %3440 = vset.pattern.permute.xlu0 0
        %3441 = vperm.xlu0 %3440, %v3154
        %v3442 = vpop.permute.xlu0 %3441
        %3443 = vset.pattern.permute.xlu0 0
        %3444 = vperm.xlu0 %3443, %v3163
        %v3445 = vpop.permute.xlu0 %3444
        %3446 = vset.pattern.permute.xlu0 0
        %3447 = vperm.xlu0 %3446, %v3172
        %v3448 = vpop.permute.xlu0 %3447
        %3449 = vset.pattern.permute.xlu0 0
        %3450 = vperm.xlu0 %3449, %v3181
        %v3451 = vpop.permute.xlu0 %3450
        %3452 = vset.pattern.permute.xlu0 0
        %3453 = vperm.xlu0 %3452, %v3190
        %v3454 = vpop.permute.xlu0 %3453
        %3455 = vset.pattern.permute.xlu0 0
        %3456 = vperm.xlu0 %3455, %v3199
        %v3457 = vpop.permute.xlu0 %3456
        %3458 = vset.pattern.permute.xlu0 0
        %3459 = vperm.xlu0 %3458, %v3208
        %v3460 = vpop.permute.xlu0 %3459
        %3461 = vset.pattern.permute.xlu0 0
        %3462 = vperm.xlu0 %3461, %v3217
        %v3463 = vpop.permute.xlu0 %3462
        %3464 = vset.pattern.permute.xlu0 0
        %3465 = vperm.xlu0 %3464, %v3226
        %v3466 = vpop.permute.xlu0 %3465
        %3467 = vset.pattern.permute.xlu0 0
        %3468 = vperm.xlu0 %3467, %v3235
        %v3469 = vpop.permute.xlu0 %3468
        %3470 = vset.pattern.permute.xlu0 0
        %3471 = vperm.xlu0 %3470, %v3244
        %v3472 = vpop.permute.xlu0 %3471
        %3473 = vset.pattern.permute.xlu0 0
        %3474 = vperm.xlu0 %3473, %v3253
        %v3475 = vpop.permute.xlu0 %3474
        %3476 = vset.pattern.permute.xlu0 0
        %3477 = vperm.xlu0 %3476, %v3262
        %v3478 = vpop.permute.xlu0 %3477
        %3479 = vset.pattern.permute.xlu0 0
        %3480 = vperm.xlu0 %3479, %v3271
        %v3481 = vpop.permute.xlu0 %3480
        %3482 = vset.pattern.permute.xlu0 0
        %3483 = vperm.xlu0 %3482, %v3280
        %v3484 = vpop.permute.xlu0 %3483
        %3485 = vset.pattern.permute.xlu0 0
        %3486 = vperm.xlu0 %3485, %v3289
        %v3487 = vpop.permute.xlu0 %3486
        %3488 = vset.pattern.permute.xlu0 0
        %3489 = vperm.xlu0 %3488, %v3298
        %v3490 = vpop.permute.xlu0 %3489
        %v3491 = vperm.slane %v3301, %v286
        %v3492 = vadd.s32 %v286, 4294967288
        %v3493 = vperm.slane %v3304, %v3492
        %vm3494 = vcmask 130112
        %v3495 = vsel %vm3494, %v3493, %v3491
        %v3496 = vadd.s32 %v286, 4294967280
        %v3497 = vperm.slane %v3307, %v3496
        %vm3498 = vcmask 195712
        %v3499 = vsel %vm3498, %v3497, %v3495
        %v3500 = vadd.s32 %v286, 4294967272
        %v3501 = vperm.slane %v3310, %v3500
        %vm3502 = vcmask 261312
        %v3503 = vsel %vm3502, %v3501, %v3499
        %v3504 = vadd.s32 %v286, 4294967264
        %v3505 = vperm.slane %v3313, %v3504
        %vm3506 = vcmask 326912
        %v3507 = vsel %vm3506, %v3505, %v3503
        %v3508 = vadd.s32 %v286, 4294967256
        %v3509 = vperm.slane %v3316, %v3508
        %vm3510 = vcmask 392512
        %v3511 = vsel %vm3510, %v3509, %v3507
        %v3512 = vadd.s32 %v286, 4294967248
        %v3513 = vperm.slane %v3319, %v3512
        %vm3514 = vcmask 458112
        %v3515 = vsel %vm3514, %v3513, %v3511
        %v3516 = vadd.s32 %v286, 4294967240
        %v3517 = vperm.slane %v3322, %v3516
        %vm3518 = vcmask 523712
        %v3519 = vsel %vm3518, %v3517, %v3515
        %v3520 = vadd.s32 %v286, 4294967232
        %v3521 = vperm.slane %v3325, %v3520
        %vm3522 = vcmask 589312
        %v3523 = vsel %vm3522, %v3521, %v3519
        %v3524 = vadd.s32 %v286, 4294967224
        %v3525 = vperm.slane %v3328, %v3524
        %vm3526 = vcmask 654912
        %v3527 = vsel %vm3526, %v3525, %v3523
        %v3528 = vadd.s32 %v286, 4294967216
        %v3529 = vperm.slane %v3331, %v3528
        %vm3530 = vcmask 720512
        %v3531 = vsel %vm3530, %v3529, %v3527
        %v3532 = vadd.s32 %v286, 4294967208
        %v3533 = vperm.slane %v3334, %v3532
        %vm3534 = vcmask 786112
        %v3535 = vsel %vm3534, %v3533, %v3531
        %v3536 = vadd.s32 %v286, 4294967200
        %v3537 = vperm.slane %v3337, %v3536
        %vm3538 = vcmask 851712
        %v3539 = vsel %vm3538, %v3537, %v3535
        %v3540 = vadd.s32 %v286, 4294967192
        %v3541 = vperm.slane %v3340, %v3540
        %vm3542 = vcmask 917312
        %v3543 = vsel %vm3542, %v3541, %v3539
        %v3544 = vadd.s32 %v286, 4294967184
        %v3545 = vperm.slane %v3343, %v3544
        %vm3546 = vcmask 982912
        %v3547 = vsel %vm3546, %v3545, %v3543
        %v3548 = vadd.s32 %v286, 4294967176
        %v3549 = vperm.slane %v3346, %v3548
        %vm3550 = vcmask 1048512
        %v3551 = vsel %vm3550, %v3549, %v3547
        %v3552 = vperm.slane %v3349, %v286
        %v3553 = vperm.slane %v3352, %v3492
        %v3554 = vsel %vm3494, %v3553, %v3552
        %v3555 = vperm.slane %v3355, %v3496
        %v3556 = vsel %vm3498, %v3555, %v3554
        %v3557 = vperm.slane %v3358, %v3500
        %v3558 = vsel %vm3502, %v3557, %v3556
        %v3559 = vperm.slane %v3361, %v3504
        %v3560 = vsel %vm3506, %v3559, %v3558
        %v3561 = vperm.slane %v3364, %v3508
        %v3562 = vsel %vm3510, %v3561, %v3560
        %v3563 = vperm.slane %v3367, %v3512
        %v3564 = vsel %vm3514, %v3563, %v3562
        %v3565 = vperm.slane %v3370, %v3516
        %v3566 = vsel %vm3518, %v3565, %v3564
        %v3567 = vperm.slane %v3373, %v3520
        %v3568 = vsel %vm3522, %v3567, %v3566
        %v3569 = vperm.slane %v3376, %v3524
        %v3570 = vsel %vm3526, %v3569, %v3568
        %v3571 = vperm.slane %v3379, %v3528
        %v3572 = vsel %vm3530, %v3571, %v3570
        %v3573 = vperm.slane %v3382, %v3532
        %v3574 = vsel %vm3534, %v3573, %v3572
        %v3575 = vperm.slane %v3385, %v3536
        %v3576 = vsel %vm3538, %v3575, %v3574
        %v3577 = vperm.slane %v3388, %v3540
        %v3578 = vsel %vm3542, %v3577, %v3576
        %v3579 = vperm.slane %v3391, %v3544
        %v3580 = vsel %vm3546, %v3579, %v3578
        %v3581 = vperm.slane %v3394, %v3548
        %v3582 = vsel %vm3550, %v3581, %v3580
        %v3583 = vperm.slane %v3397, %v286
        %v3584 = vperm.slane %v3400, %v3492
        %v3585 = vsel %vm3494, %v3584, %v3583
        %v3586 = vperm.slane %v3403, %v3496
        %v3587 = vsel %vm3498, %v3586, %v3585
        %v3588 = vperm.slane %v3406, %v3500
        %v3589 = vsel %vm3502, %v3588, %v3587
        %v3590 = vperm.slane %v3409, %v3504
        %v3591 = vsel %vm3506, %v3590, %v3589
        %v3592 = vperm.slane %v3412, %v3508
        %v3593 = vsel %vm3510, %v3592, %v3591
        %v3594 = vperm.slane %v3415, %v3512
        %v3595 = vsel %vm3514, %v3594, %v3593
        %v3596 = vperm.slane %v3418, %v3516
        %v3597 = vsel %vm3518, %v3596, %v3595
        %v3598 = vperm.slane %v3421, %v3520
        %v3599 = vsel %vm3522, %v3598, %v3597
        %v3600 = vperm.slane %v3424, %v3524
        %v3601 = vsel %vm3526, %v3600, %v3599
        %v3602 = vperm.slane %v3427, %v3528
        %v3603 = vsel %vm3530, %v3602, %v3601
        %v3604 = vperm.slane %v3430, %v3532
        %v3605 = vsel %vm3534, %v3604, %v3603
        %v3606 = vperm.slane %v3433, %v3536
        %v3607 = vsel %vm3538, %v3606, %v3605
        %v3608 = vperm.slane %v3436, %v3540
        %v3609 = vsel %vm3542, %v3608, %v3607
        %v3610 = vperm.slane %v3439, %v3544
        %v3611 = vsel %vm3546, %v3610, %v3609
        %v3612 = vperm.slane %v3442, %v3548
        %v3613 = vsel %vm3550, %v3612, %v3611
        %v3614 = vperm.slane %v3445, %v286
        %v3615 = vperm.slane %v3448, %v3492
        %v3616 = vsel %vm3494, %v3615, %v3614
        %v3617 = vperm.slane %v3451, %v3496
        %v3618 = vsel %vm3498, %v3617, %v3616
        %v3619 = vperm.slane %v3454, %v3500
        %v3620 = vsel %vm3502, %v3619, %v3618
        %v3621 = vperm.slane %v3457, %v3504
        %v3622 = vsel %vm3506, %v3621, %v3620
        %v3623 = vperm.slane %v3460, %v3508
        %v3624 = vsel %vm3510, %v3623, %v3622
        %v3625 = vperm.slane %v3463, %v3512
        %v3626 = vsel %vm3514, %v3625, %v3624
        %v3627 = vperm.slane %v3466, %v3516
        %v3628 = vsel %vm3518, %v3627, %v3626
        %v3629 = vperm.slane %v3469, %v3520
        %v3630 = vsel %vm3522, %v3629, %v3628
        %v3631 = vperm.slane %v3472, %v3524
        %v3632 = vsel %vm3526, %v3631, %v3630
        %v3633 = vperm.slane %v3475, %v3528
        %v3634 = vsel %vm3530, %v3633, %v3632
        %v3635 = vperm.slane %v3478, %v3532
        %v3636 = vsel %vm3534, %v3635, %v3634
        %v3637 = vperm.slane %v3481, %v3536
        %v3638 = vsel %vm3538, %v3637, %v3636
        %v3639 = vperm.slane %v3484, %v3540
        %v3640 = vsel %vm3542, %v3639, %v3638
        %v3641 = vperm.slane %v3487, %v3544
        %v3642 = vsel %vm3546, %v3641, %v3640
        %v3643 = vperm.slane %v3490, %v3548
        %v3644 = vsel %vm3550, %v3643, %v3642
        %v3645 = vrot.slane %v3582, 7
        %v3646 = vrot.slane %v3613, 6
        %v3647 = vrot.slane %v3644, 5
        %vm3648 = vcmask 1040384
        %v3649 = vsel %vm3648, %v3551, %v3645
        %vm3650 = vcmask 1042434
        %v3651 = vsel %vm3650, %v3646, %v3647
        %vm3652 = vcmask 1041408
        %v3653 = vsel %vm3652, %v3649, %v3651
        %v3655 = vlaneseq
        %vm3656 = vcmp.ge.s32.totalorder %v3655, 0
        %vm3657 = vcmp.lt.s32.totalorder %v3655, 512
        %vm3658 = vmand %vm3656, %vm3657
        %3659 = vst.msk [vmem:[%s207] sm:$0xf] %vm3658, %v3653
        %s3660 = sand.u32 %s120, 1
        %s3661 = scalar_lea.sflag [#allocation3], %s3660
        %s3662 = sand.u32 %s120, 1
        %s3663 = smul.addr %s3662, 4
        %s3664 = scalar_lea.vmem [#allocation2], %s3663
        // Predicated region
        $region37: #{mf_bpr_forward.1} parent=35 // pred_check
          %p3665 = pneg %p130
        $region38: #{mf_bpr_forward.1} parent=35 // pred_check_branch
          %3667 = sbr.rel (%p3665) target = $region40
        $region39: #{mf_bpr_forward.1} parent=35 // pred_region
          %s3668 = smul.u32 4, %s18
          %3670 = vsyncadd %s3661, 0
          %s3671 = scalar_lea.hbm %s4, %s3668
          %s3673 = sshll.u32 %s3664, 4
          %s3674 = int_to_ptr.vmem [resolvable:$true] %s3673
          %s3675 = sshll.u32 %s3671, 4
          %s3676 = int_to_ptr.hbm [resolvable:$true] %s3675
          %3678 = dma.vmem_to_hbm [thread:$0]  %s3674, 64, %s3676, %s3661
        $region40: #{mf_bpr_forward.1} parent=35 // pred_fallthru
          _
      $region36: #{mf_bpr_forward.1} parent=5 // pred_fallthru
        _
      %p3679 = scmp.le.s32.totalorder 2, %s13
      // Predicated region
      $region41: #{mf_bpr_forward.1} parent=5 // pred_check
        %p3680 = pneg %p3679
      $region42: #{mf_bpr_forward.1} parent=5 // pred_check_branch
        %3682 = sbr.rel (%p3680) target = $region44
      $region43: #{mf_bpr_forward.1} parent=5 // pred_region
        %s3683 = ssub.s32 %s13, 2
        // Predicated region
        $region45: #{mf_bpr_forward.1} parent=43 // pred_check
          %p3684 = pneg %p136
        $region46: #{mf_bpr_forward.1} parent=43 // pred_check_branch
          %3686 = sbr.rel (%p3684) target = $region48
        $region47: #{mf_bpr_forward.1} parent=43 // pred_region
          %s3687 = sand.u32 %s121, 1
          %s3688 = scalar_lea.sflag [#allocation3], %s3687
          %s3689 = sand.u32 %s121, 1
          %s3690 = smul.addr %s3689, 4
          %s3691 = scalar_lea.vmem [#allocation2], %s3690
          %3693 = dma.done %s3688, 64
        $region48: #{mf_bpr_forward.1} parent=43 // pred_fallthru
          _
      $region44: #{mf_bpr_forward.1} parent=5 // pred_fallthru
        _
    $region6: #{mf_bpr_forward.1} parent=1 // loop_footer
      %s17 = sadd.s32 1, %s13
    $region7: #{mf_bpr_forward.1} parent=1 // loop_footer_branch
      %12 = sbr.rel target = $region3
    $region8: #{mf_bpr_forward.1} parent=1 // loop_exit
      _
    %3694 = vsyncpa [#allocation3], 1
    %s3695 = scalar_lea.sflag [#allocation3], 1
    %3696 = vsyncpa %s3695, 1

</llo_original>
